<compile_context>
chip_gen: v6e
topology: v6e:2x2x1
jax: 0.10.0
libtpu: 0.0.40
codegen_flags: <defaults>
</compile_context>

<pallas_src>
import jax
import jax.numpy as jnp
import numpy as np
from jax.experimental import pallas as pl
from jax.experimental.pallas import tpu as pltpu

EPS = 1e-5
LANE = 128   # channel padding target (lane width)
PADW = 8     # column halo of the in-VMEM buffers (sublane-aligned interior stores)


def _round_up(x, m):
    return (x + m - 1) // m * m


def _vmem_limit_bytes():
    """~3/4 of physical VMEM: ~96 MiB on v5e/v6e, ~48 MiB on v7x."""
    try:
        cap = int(pltpu.get_tpu_info().vmem_capacity_bytes)
    except Exception:
        cap = 128 * 1024 * 1024
    return max(32 * 1024 * 1024, min(cap * 3 // 4, 112 * 1024 * 1024))


def _pick_row_block(H, W, k_lane, cp_out, vmem_limit):
    """Largest multiple-of-8 divisor of H whose per-step VMEM load fits the budget."""
    per_row = ((W + 2 * PADW) * k_lane * 2          # bf16 input row window
               + (W + 2 * PADW) * cp_out * 2        # bf16 y1 staging
               + W * cp_out * (2 * 2 + 3 * 4))      # dbl-buffered bf16 out + f32 accs
    budget = int(vmem_limit * 0.4)
    cap = max(8, min(H, budget // max(per_row, 1)))
    t = (cap // 8) * 8
    while t >= 8:
        if H % t == 0:
            return t
        t -= 8
    return H


# --------------------------------------------------------------------------
# Kernel helpers (shared by both channel-count paths)
# --------------------------------------------------------------------------
def _bn_relu(acc, s_ref, t_ref):
    return jnp.maximum(acc * s_ref[...] + t_ref[...], 0.0)


def _stage_y1(y1, y1buf_ref, r, TB, W):
    """Store y1 (TB+2, W, Cp_out) into the bf16 staging buffer with a zero halo."""
    Cp = y1buf_ref.shape[-1]
    PW = (y1buf_ref.shape[1] - W) // 2
    zc = jnp.zeros((TB + 2, PW, Cp), jnp.bfloat16)
    y1buf_ref[:, :PW, :] = zc                           # zero column borders only
    y1buf_ref[:, PW + W:, :] = zc
    y1buf_ref[:, PW:PW + W, :] = y1.astype(jnp.bfloat16)  # aligned interior store

    zr = jnp.zeros((1, y1buf_ref.shape[1], Cp), jnp.bfloat16)

    @pl.when(r == 0)                       # y1 row above the image is zero padding
    def _():
        y1buf_ref[0:1, :, :] = zr

    @pl.when(r == pl.num_programs(1) - 1)  # y1 row below the image is zero padding
    def _():
        y1buf_ref[TB + 1:TB + 2, :, :] = zr


def _conv3x3_taps(src_ref, w_ref, rows, W):
    """3x3 conv as 9 shifted K=C dots read straight from a (rows+2, W+2*PW, C) ref,
    accumulated in f32.  w_ref: (9, C, Cout)."""
    PW = (src_ref.shape[1] - W) // 2
    acc = None
    for dy in range(3):
        for dx in range(3):
            a = src_ref[dy:dy + rows, PW - 1 + dx:PW - 1 + dx + W, :]
            d = jnp.dot(a, w_ref[dy * 3 + dx], preferred_element_type=jnp.float32)
            acc = d if acc is None else acc + d
    return acc


# --------------------------------------------------------------------------
# Kernel bodies
# --------------------------------------------------------------------------
def _dc_kernel_small(x9_hbm, w1a_ref, s1_ref, t1_ref, w2_ref, s2_ref, t2_ref,
                     sc_ref, tc_ref, out_ref, x9buf_ref, y1buf_ref, dma_sem):
    """Tiny-Cin path: conv1 taps pre-packed into K (wrapper), 1x1 conv folded into
    the extra N columns of w1a.  x9_hbm: (N, H+2, W, Kp) bf16 in HBM."""
    n, r = pl.program_id(0), pl.program_id(1)
    _, TB, W, Cp_out = out_ref.shape

    # Row-halo fetch: y1 rows [r*TB-1, r*TB+TB+1) need x9 rows [r*TB, r*TB+TB+2).
    row0 = r * TB
    if TB % 8 == 0:
        row0 = pl.multiple_of(row0, 8)
    cp = pltpu.make_async_copy(x9_hbm.at[n, pl.ds(row0, TB + 2)],
                               x9buf_ref, dma_sem.at[0])
    cp.start()
    cp.wait()

    # conv1 + folded 1x1 channel conv: one fat dot, K=Kp, N=2*Cp_out.
    accA = jnp.dot(x9buf_ref[...], w1a_ref[...], preferred_element_type=jnp.float32)
    y1 = _bn_relu(accA[:, :, :Cp_out], s1_ref, t1_ref)          # BN1 + ReLU

    _stage_y1(y1, y1buf_ref, r, TB, W)
    acc2 = _conv3x3_taps(y1buf_ref, w2_ref, TB, W)
    y2 = _bn_relu(acc2, s2_ref, t2_ref)                          # BN2 + ReLU

    # 1x1 channel path came out of the same matmul (center-tap columns).
    y3 = accA[1:TB + 1, :, Cp_out:] * sc_ref[...] + tc_ref[...]
    out_ref[...] = (y2 + y3)[None].astype(out_ref.dtype)


def _dc_kernel_big(xpad_hbm, w1_ref, s1_ref, t1_ref, w2_ref, s2_ref, t2_ref,
                   wc_ref, sc_ref, tc_ref, out_ref, xbuf_ref, y1buf_ref, dma_sem):
    """General path (Cin lane-padded): conv1 and conv2 as 9 accumulating K=Cp dots.
    xpad_hbm: (N, H+4, W+2*PADW, Cp_in) bf16 in HBM."""
    n, r = pl.program_id(0), pl.program_id(1)
    _, TB, W, Cp_out = out_ref.shape
    PW = (xbuf_ref.shape[1] - W) // 2

    # Row-halo fetch: this block needs padded input rows [r*TB, r*TB+TB+4).
    row0 = r * TB
    if TB % 8 == 0:
        row0 = pl.multiple_of(row0, 8)
    cp = pltpu.make_async_copy(xpad_hbm.at[n, pl.ds(row0, TB + 4)],
                               xbuf_ref, dma_sem.at[0])
    cp.start()
    cp.wait()

    acc1 = _conv3x3_taps(xbuf_ref, w1_ref, TB + 2, W)            # conv1 over TB+2 rows
    y1 = _bn_relu(acc1, s1_ref, t1_ref)

    _stage_y1(y1, y1buf_ref, r, TB, W)
    acc2 = _conv3x3_taps(y1buf_ref, w2_ref, TB, W)
    y2 = _bn_relu(acc2, s2_ref, t2_ref)

    # 1x1 channel path straight from the already-resident input window.
    xc = xbuf_ref[2:2 + TB, PW:PW + W, :]
    y3 = jnp.dot(xc, wc_ref[...], preferred_element_type=jnp.float32)
    y3 = y3 * sc_ref[...] + tc_ref[...]
    out_ref[...] = (y2 + y3)[None].astype(out_ref.dtype)


# --------------------------------------------------------------------------
# Wrapper
# --------------------------------------------------------------------------
def double_conv(x_nchw, kp, row_block=None):
    """x_nchw: (N, in_ch, H, W) f32.  kp: dict from fold_params.  Returns NCHW."""
    N, Cin, H, W = x_nchw.shape
    assert Cin == kp["in_ch"]
    assert W % 8 == 0, "pad W to a multiple of 8 upstream"
    out_ch, Cp_out = kp["out_ch"], kp["cp_out"]
    vmem_limit = _vmem_limit_bytes()

    k_lane = kp["kp"] if kp["small"] else kp["cp_in"]
    TB = row_block if row_block is not None else _pick_row_block(
        H, W, k_lane, Cp_out, vmem_limit)
    assert H % TB == 0, "row_block must divide H"
    R = H // TB
    grid = (N, R)

    x = jnp.transpose(x_nchw, (0, 2, 3, 1))                      # NHWC f32

    out_spec = pl.BlockSpec((1, TB, W, Cp_out), lambda n, r: (n, r, 0, 0))

    def vec_spec():
        return pl.BlockSpec((1, Cp_out), lambda n, r: (0, 0))

    cparams = pltpu.CompilerParams(
        dimension_semantics=("parallel", "parallel"),
        vmem_limit_bytes=vmem_limit)

    if kp["small"]:
        Kp = kp["kp"]
        # Wrapper-side tap packing: x9[n, j, w, t*Cin + c] = x[n, j-1+dy-1, w+dx-1, c]
        xp = jnp.pad(x, ((0, 0), (2, 2), (1, 1), (0, 0)))
        x9 = jnp.concatenate(
            [xp[:, dy:dy + H + 2, dx:dx + W, :] for dy in range(3) for dx in range(3)],
            axis=-1)
        x9 = jnp.pad(x9, ((0, 0), (0, 0), (0, 0), (0, Kp - 9 * Cin))).astype(jnp.bfloat16)

        flops = int(2 * N * R * (TB + 2) * W * Kp * (2 * Cp_out)
                    + 2 * N * H * W * 9 * Cp_out * Cp_out)
        bytes_accessed = int(N * R * (TB + 2) * W * Kp * 2
                             + (Kp * 2 * Cp_out + 9 * Cp_out * Cp_out) * 2
                             + 6 * Cp_out * 4
                             + N * H * W * Cp_out * 2)

        out_nhwc = pl.pallas_call(
            _dc_kernel_small,
            out_shape=jax.ShapeDtypeStruct((N, H, W, Cp_out), jnp.bfloat16),
            grid_spec=pltpu.PrefetchScalarGridSpec(
                num_scalar_prefetch=0,
                grid=grid,
                in_specs=[
                    pl.BlockSpec(memory_space=pl.ANY),                       # x9 (HBM)
                    pl.BlockSpec((Kp, 2 * Cp_out), lambda n, r: (0, 0)),     # w1 | wc
                    vec_spec(), vec_spec(),                                  # s1, t1
                    pl.BlockSpec((9, Cp_out, Cp_out), lambda n, r: (0, 0, 0)),
                    vec_spec(), vec_spec(),                                  # s2, t2
                    vec_spec(), vec_spec(),                                  # sc, tc
                ],
                out_specs=out_spec,
                scratch_shapes=[
                    pltpu.VMEM((TB + 2, W, Kp), jnp.bfloat16),
                    pltpu.VMEM((TB + 2, W + 2 * PADW, Cp_out), jnp.bfloat16),
                    pltpu.SemaphoreType.DMA((1,)),
                ]),
            compiler_params=cparams,
            cost_estimate=pl.CostEstimate(flops=flops, transcendentals=0,
                                          bytes_accessed=bytes_accessed),
        )(x9, kp["w1"], kp["s1"], kp["t1"], kp["w2"], kp["s2"], kp["t2"],
          kp["sc"], kp["tc"])
    else:
        Cp_in = kp["cp_in"]
        xpad = jnp.pad(x, ((0, 0), (2, 2), (PADW, PADW), (0, Cp_in - Cin)))
        xpad = xpad.astype(jnp.bfloat16)
        WP = W + 2 * PADW

        flops = int(2 * N * R * (TB + 2) * W * 9 * Cp_in * Cp_out
                    + 2 * N * H * W * (9 * Cp_out * Cp_out + Cp_in * Cp_out))
        bytes_accessed = int(N * R * (TB + 4) * WP * Cp_in * 2
                             + (9 * Cp_in + 9 * Cp_out + Cp_in) * Cp_out * 2
                             + 6 * Cp_out * 4
                             + N * H * W * Cp_out * 2)

        out_nhwc = pl.pallas_call(
            _dc_kernel_big,
            out_shape=jax.ShapeDtypeStruct((N, H, W, Cp_out), jnp.bfloat16),
            grid_spec=pltpu.PrefetchScalarGridSpec(
                num_scalar_prefetch=0,
                grid=grid,
                in_specs=[
                    pl.BlockSpec(memory_space=pl.ANY),                       # x padded (HBM)
                    pl.BlockSpec((9, Cp_in, Cp_out), lambda n, r: (0, 0, 0)),
                    vec_spec(), vec_spec(),                                  # s1, t1
                    pl.BlockSpec((9, Cp_out, Cp_out), lambda n, r: (0, 0, 0)),
                    vec_spec(), vec_spec(),                                  # s2, t2
                    pl.BlockSpec((Cp_in, Cp_out), lambda n, r: (0, 0)),      # wc
                    vec_spec(), vec_spec(),                                  # sc, tc
                ],
                out_specs=out_spec,
                scratch_shapes=[
                    pltpu.VMEM((TB + 4, W + 2 * PADW, Cp_in), jnp.bfloat16),
                    pltpu.VMEM((TB + 2, W + 2 * PADW, Cp_out), jnp.bfloat16),
                    pltpu.SemaphoreType.DMA((1,)),
                ]),
            compiler_params=cparams,
            cost_estimate=pl.CostEstimate(flops=flops, transcendentals=0,
                                          bytes_accessed=bytes_accessed),
        )(xpad, kp["w1"], kp["s1"], kp["t1"], kp["w2"], kp["s2"], kp["t2"],
          kp["wc"], kp["sc"], kp["tc"])

    out = out_nhwc[..., :out_ch]                                  # drop channel pad
    return jnp.transpose(out, (0, 3, 1, 2)).astype(x_nchw.dtype)  # back to NCHW


# --------------------------------------------------------------------------
# Deterministic parameter construction (PyTorch-style raw params) + folding
# --------------------------------------------------------------------------
def make_raw_params(key, in_ch, out_ch):
    ks = jax.random.split(key, 16)
    p = {}
    p["w1"] = 0.1 * jax.random.normal(ks[0], (out_ch, in_ch, 3, 3), jnp.float32)
    p["b1"] = 0.1 * jax.random.normal(ks[1], (out_ch,), jnp.float32)
    p["g1"] = 1.0 + 0.1 * jax.random.normal(ks[2], (out_ch,), jnp.float32)
    p["be1"] = 0.1 * jax.random.normal(ks[3], (out_ch,), jnp.float32)
    p["m1"] = 0.1 * jax.random.normal(ks[4], (out_ch,), jnp.float32)
    p["v1"] = 1.0 + 0.1 * jnp.abs(jax.random.normal(ks[5], (out_ch,), jnp.float32))

    p["w2"] = 0.1 * jax.random.normal(ks[6], (out_ch, out_ch, 3, 3), jnp.float32)
    p["b2"] = 0.1 * jax.random.normal(ks[7], (out_ch,), jnp.float32)
    p["g2"] = 1.0 + 0.1 * jax.random.normal(ks[8], (out_ch,), jnp.float32)
    p["be2"] = 0.1 * jax.random.normal(ks[9], (out_ch,), jnp.float32)
    p["m2"] = 0.1 * jax.random.normal(ks[10], (out_ch,), jnp.float32)
    p["v2"] = 1.0 + 0.1 * jnp.abs(jax.random.normal(ks[11], (out_ch,), jnp.float32))

    p["wc"] = 0.1 * jax.random.normal(ks[12], (out_ch, in_ch, 1, 1), jnp.float32)
    p["gc"] = 1.0 + 0.1 * jax.random.normal(ks[13], (out_ch,), jnp.float32)
    p["bec"] = 0.1 * jax.random.normal(ks[14], (out_ch,), jnp.float32)
    p["mc"] = 0.1 * jax.random.normal(ks[15], (out_ch,), jnp.float32)
    p["vc"] = 1.0 + 0.1 * jnp.abs(jax.random.normal(ks[0], (out_ch,), jnp.float32))
    return p


def fold_params(p, in_ch, out_ch):
    """Fold conv bias + eval-mode BN into per-channel scale/shift, lane-pad the
    output channels, lay weights out for the kernel, cast MXU operands to bf16."""
    Cp_out = _round_up(out_ch, LANE)
    small = 9 * in_ch <= LANE

    s1 = p["g1"] / jnp.sqrt(p["v1"] + EPS)
    t1 = (p["b1"] - p["m1"]) * s1 + p["be1"]
    s2 = p["g2"] / jnp.sqrt(p["v2"] + EPS)
    t2 = (p["b2"] - p["m2"]) * s2 + p["be2"]
    sc = p["gc"] / jnp.sqrt(p["vc"] + EPS)
    tc = p["bec"] - p["mc"] * sc

    def pad_vec(v):                                   # (out_ch,) -> (1, Cp_out) f32
        return jnp.pad(v, (0, Cp_out - out_ch)).reshape(1, Cp_out).astype(jnp.float32)

    # conv2 weights: OIHW -> (9, Cp_out, Cp_out) bf16  (tap-major)
    hwio2 = jnp.transpose(p["w2"], (2, 3, 1, 0))                     # (3,3,in,out)
    hwio2 = jnp.pad(hwio2, ((0, 0), (0, 0),
                            (0, Cp_out - out_ch), (0, Cp_out - out_ch)))
    w2 = hwio2.reshape(9, Cp_out, Cp_out).astype(jnp.bfloat16)

    hwio1 = jnp.transpose(p["w1"], (2, 3, 1, 0))                     # (3,3,in_ch,out_ch)
    wc2d = jnp.transpose(p["wc"][:, :, 0, 0], (1, 0))                # (in_ch, out_ch)

    if small:
        # Pack taps*Cin along K (27..36 -> Kp=128); fold the 1x1 conv into 128
        # extra N columns via the centre-tap K rows.
        Kp = _round_up(9 * in_ch, LANE)
        w1k = hwio1.reshape(9 * in_ch, out_ch)
        wck = jnp.zeros((9 * in_ch, out_ch), jnp.float32)
        wck = wck.at[4 * in_ch:5 * in_ch, :].set(wc2d)               # centre tap
        w1p = jnp.pad(w1k, ((0, Kp - 9 * in_ch), (0, Cp_out - out_ch)))
        wcp = jnp.pad(wck, ((0, Kp - 9 * in_ch), (0, Cp_out - out_ch)))
        w1 = jnp.concatenate([w1p, wcp], axis=1).astype(jnp.bfloat16)  # (Kp, 2*Cp_out)
        wc = None
        cp_in, kp_ = in_ch, Kp
    else:
        Cp_in = _round_up(in_ch, LANE)
        w1 = jnp.pad(hwio1, ((0, 0), (0, 0),
                             (0, Cp_in - in_ch), (0, Cp_out - out_ch)))
        w1 = w1.reshape(9, Cp_in, Cp_out).astype(jnp.bfloat16)
        wc = jnp.pad(wc2d, ((0, Cp_in - in_ch), (0, Cp_out - out_ch))).astype(jnp.bfloat16)
        cp_in, kp_ = Cp_in, None

    return dict(small=small, in_ch=in_ch, out_ch=out_ch, cp_in=cp_in, cp_out=Cp_out,
                kp=kp_, w1=w1, s1=pad_vec(s1), t1=pad_vec(t1),
                w2=w2, s2=pad_vec(s2), t2=pad_vec(t2),
                wc=wc, sc=pad_vec(sc), tc=pad_vec(tc))


# --------------------------------------------------------------------------
# Pure-JAX reference (eval-mode BN), NCHW, mirrors the PyTorch module exactly
# --------------------------------------------------------------------------
def ref_double_conv(x, p):
    dn = ("NCHW", "OIHW", "NCHW")

    def bn(z, g, b, m, v):
        return ((z - m[None, :, None, None]) / jnp.sqrt(v + EPS)[None, :, None, None]
                * g[None, :, None, None] + b[None, :, None, None])

    z1 = jax.lax.conv_general_dilated(x, p["w1"], (1, 1), ((1, 1), (1, 1)),
                                      dimension_numbers=dn) + p["b1"][None, :, None, None]
    z1 = jnp.maximum(bn(z1, p["g1"], p["be1"], p["m1"], p["v1"]), 0.0)
    z2 = jax.lax.conv_general_dilated(z1, p["w2"], (1, 1), ((1, 1), (1, 1)),
                                      dimension_numbers=dn) + p["b2"][None, :, None, None]
    z2 = jnp.maximum(bn(z2, p["g2"], p["be2"], p["m2"], p["v2"]), 0.0)
    zc = jax.lax.conv_general_dilated(x, p["wc"], (1, 1), ((0, 0), (0, 0)),
                                      dimension_numbers=dn)
    zc = bn(zc, p["gc"], p["bec"], p["mc"], p["vc"])
    return z2 + zc


if __name__ == "__main__":
    key = jax.random.PRNGKey(0)
    kx1, kp1, kx2, kp2 = jax.random.split(key, 4)

    # Config A: stem-style layer (tiny Cin -> packed-K conv1 path), 2 row blocks.
    N, in_ch, out_ch, H, W = 2, 4, 8, 16, 16
    x = jax.random.normal(kx1, (N, in_ch, H, W), jnp.float32)
    raw = make_raw_params(kp1, in_ch, out_ch)
    out = jax.block_until_ready(double_conv(x, fold_params(raw, in_ch, out_ch),
                                            row_block=8))
    ref = jax.block_until_ready(ref_double_conv(x, raw))
    assert out.shape == (N, out_ch, H, W)
    err = float(np.max(np.abs(np.asarray(out) - np.asarray(ref))))
    # bf16 MXU operands / staging / output vs full-f32 reference -> moderate tol.
    assert np.allclose(np.asarray(out), np.asarray(ref), rtol=5e-2, atol=5e-2), err

    # Config B: deeper layer (Cin lane-padded -> per-tap accumulate path).
    N2, in2, out2 = 1, 32, 16
    x2 = jax.random.normal(kx2, (N2, in2, H, W), jnp.float32)
    raw2 = make_raw_params(kp2, in2, out2)
    out_b = jax.block_until_ready(double_conv(x2, fold_params(raw2, in2, out2),
                                              row_block=8))
    ref_b = jax.block_until_ready(ref_double_conv(x2, raw2))
    assert out_b.shape == (N2, out2, H, W)
    err_b = float(np.max(np.abs(np.asarray(out_b) - np.asarray(ref_b))))
    assert np.allclose(np.asarray(out_b), np.asarray(ref_b), rtol=5e-2, atol=5e-2), err_b

    print("KERNEL_OK")
</pallas_src>

<mosaic_0001>
module attributes {stable_mosaic.version = 11 : i64} {
  func.func @_dc_kernel_small(%arg0: i32, %arg1: i32, %arg2: memref<2x18x16x128xbf16, #tpu.memory_space<any>>, %arg3: memref<128x256xbf16, #tpu.memory_space<vmem>>, %arg4: memref<1x128xf32, #tpu.memory_space<vmem>>, %arg5: memref<1x128xf32, #tpu.memory_space<vmem>>, %arg6: memref<9x128x128xbf16, #tpu.memory_space<vmem>>, %arg7: memref<1x128xf32, #tpu.memory_space<vmem>>, %arg8: memref<1x128xf32, #tpu.memory_space<vmem>>, %arg9: memref<1x128xf32, #tpu.memory_space<vmem>>, %arg10: memref<1x128xf32, #tpu.memory_space<vmem>>, %arg11: memref<1x8x16x128xbf16, #tpu.memory_space<vmem>>, %arg12: memref<10x16x128xbf16, #tpu.memory_space<vmem>>, %arg13: memref<10x32x128xbf16, #tpu.memory_space<vmem>>, %arg14: memref<1x!tpu.dma_semaphore, #tpu.memory_space<semaphore_mem>>) attributes {dimension_semantics = [#tpu.dimension_semantics<parallel>, #tpu.dimension_semantics<parallel>], iteration_bounds = array<i64: 2, 2>, scalar_prefetch = 0 : i64, scratch_operands = 3 : i64, tpu.core_type = #tpu.core_type<tc>, window_params = [{}, {pipeline_mode = #tpu.pipeline_mode<synchronous>, transform_indices = @transform_1, window_bounds = array<i64: 128, 256>}, {pipeline_mode = #tpu.pipeline_mode<synchronous>, transform_indices = @transform_2, window_bounds = array<i64: 1, 128>}, {pipeline_mode = #tpu.pipeline_mode<synchronous>, transform_indices = @transform_3, window_bounds = array<i64: 1, 128>}, {pipeline_mode = #tpu.pipeline_mode<synchronous>, transform_indices = @transform_4, window_bounds = array<i64: 9, 128, 128>}, {pipeline_mode = #tpu.pipeline_mode<synchronous>, transform_indices = @transform_5, window_bounds = array<i64: 1, 128>}, {pipeline_mode = #tpu.pipeline_mode<synchronous>, transform_indices = @transform_6, window_bounds = array<i64: 1, 128>}, {pipeline_mode = #tpu.pipeline_mode<synchronous>, transform_indices = @transform_7, window_bounds = array<i64: 1, 128>}, {pipeline_mode = #tpu.pipeline_mode<synchronous>, transform_indices = @transform_8, window_bounds = array<i64: 1, 128>}, {transform_indices = @transform_9, window_bounds = array<i64: 1, 8, 16, 128>}]} {
    %c8_i32 = arith.constant 8 : i32
    %0 = arith.muli %arg1, %c8_i32 : i32
    %1 = tpu.assume_multiple %0, 8 : i32
    %c0_i32 = arith.constant 0 : i32
    %c0_i32_0 = arith.constant 0 : i32
    %c0_i32_1 = arith.constant 0 : i32
    %2 = tpu.memref_slice %arg2[%arg0, %1, %c0_i32_0, %c0_i32_1] : memref<2x18x16x128xbf16, #tpu.memory_space<any>> -> memref<1x10x16x128xbf16, #tpu.memory_space<any>>
    %3 = tpu.memref_squeeze %2 : memref<1x10x16x128xbf16, #tpu.memory_space<any>> -> memref<10x16x128xbf16, #tpu.memory_space<any>>
    %4 = tpu.memref_slice %arg14[%c0_i32] : memref<1x!tpu.dma_semaphore, #tpu.memory_space<semaphore_mem>> -> memref<1x!tpu.dma_semaphore, #tpu.memory_space<semaphore_mem>>
    %5 = tpu.memref_squeeze %4 : memref<1x!tpu.dma_semaphore, #tpu.memory_space<semaphore_mem>> -> memref<!tpu.dma_semaphore, #tpu.memory_space<semaphore_mem>>
    tpu.enqueue_dma source(%3 : memref<10x16x128xbf16, #tpu.memory_space<any>>) target(%arg12 : memref<10x16x128xbf16, #tpu.memory_space<vmem>>) target_semaphore(%5 : memref<!tpu.dma_semaphore, #tpu.memory_space<semaphore_mem>>)
    %c0_i32_2 = arith.constant 0 : i32
    %c0_i32_3 = arith.constant 0 : i32
    %c0_i32_4 = arith.constant 0 : i32
    %6 = tpu.memref_slice %arg2[%arg0, %1, %c0_i32_3, %c0_i32_4] : memref<2x18x16x128xbf16, #tpu.memory_space<any>> -> memref<1x10x16x128xbf16, #tpu.memory_space<any>>
    %7 = tpu.memref_squeeze %6 : memref<1x10x16x128xbf16, #tpu.memory_space<any>> -> memref<10x16x128xbf16, #tpu.memory_space<any>>
    %8 = tpu.memref_slice %arg14[%c0_i32_2] : memref<1x!tpu.dma_semaphore, #tpu.memory_space<semaphore_mem>> -> memref<1x!tpu.dma_semaphore, #tpu.memory_space<semaphore_mem>>
    %9 = tpu.memref_squeeze %8 : memref<1x!tpu.dma_semaphore, #tpu.memory_space<semaphore_mem>> -> memref<!tpu.dma_semaphore, #tpu.memory_space<semaphore_mem>>
    tpu.wait_dma2 semaphore(%9 : memref<!tpu.dma_semaphore, #tpu.memory_space<semaphore_mem>>) src(%7 : memref<10x16x128xbf16, #tpu.memory_space<any>>) dst(%arg12 : memref<10x16x128xbf16, #tpu.memory_space<vmem>>)
    %c0 = arith.constant 0 : index
    %c0_5 = arith.constant 0 : index
    %c0_6 = arith.constant 0 : index
    %10 = vector.load %arg12[%c0, %c0_5, %c0_6] : memref<10x16x128xbf16, #tpu.memory_space<vmem>>, vector<10x16x128xbf16>
    %c0_7 = arith.constant 0 : index
    %c0_8 = arith.constant 0 : index
    %11 = vector.load %arg3[%c0_7, %c0_8] : memref<128x256xbf16, #tpu.memory_space<vmem>>, vector<128x256xbf16>
    %cst = arith.constant dense<0.000000e+00> : vector<10x16x256xf32>
    %12 = tpu.matmul %10, %11, %cst {dimension_numbers = #tpu.dot_dimension_numbers<[2], [0], [0, 1], [1], [0, 0, 0, 1, 1, 1], [], []>} : vector<10x16x128xbf16>, vector<128x256xbf16>, vector<10x16x256xf32> -> vector<10x16x256xf32>
    %13 = vector.extract_strided_slice %12 {offsets = [0, 0, 0], sizes = [10, 16, 128], strides = [1, 1, 1]} : vector<10x16x256xf32> to vector<10x16x128xf32>
    %c0_9 = arith.constant 0 : index
    %c0_10 = arith.constant 0 : index
    %14 = vector.load %arg4[%c0_9, %c0_10] : memref<1x128xf32, #tpu.memory_space<vmem>>, vector<1x128xf32>
    %15 = vector.shape_cast %14 : vector<1x128xf32> to vector<1x1x128xf32>
    %16 = vector.broadcast %15 : vector<1x1x128xf32> to vector<10x16x128xf32>
    %17 = arith.mulf %13, %16 : vector<10x16x128xf32>
    %c0_11 = arith.constant 0 : index
    %c0_12 = arith.constant 0 : index
    %18 = vector.load %arg5[%c0_11, %c0_12] : memref<1x128xf32, #tpu.memory_space<vmem>>, vector<1x128xf32>
    %19 = vector.shape_cast %18 : vector<1x128xf32> to vector<1x1x128xf32>
    %20 = vector.broadcast %19 : vector<1x1x128xf32> to vector<10x16x128xf32>
    %21 = arith.addf %17, %20 : vector<10x16x128xf32>
    %cst_13 = arith.constant 0.000000e+00 : f32
    %22 = vector.broadcast %cst_13 : f32 to vector<10x16x128xf32>
    %23 = arith.maximumf %21, %22 : vector<10x16x128xf32>
    %cst_14 = arith.constant 0.000000e+00 : bf16
    %24 = vector.broadcast %cst_14 : bf16 to vector<10x8x128xbf16>
    %c0_15 = arith.constant 0 : index
    %c0_16 = arith.constant 0 : index
    %c0_17 = arith.constant 0 : index
    %25 = vector.load %arg13[%c0_15, %c0_16, %c0_17] : memref<10x32x128xbf16, #tpu.memory_space<vmem>>, vector<10x8x128xbf16>
    tpu.vector_store %arg13[%c0_15, %c0_16, %c0_17], %24 {strides = array<i32>} : memref<10x32x128xbf16, #tpu.memory_space<vmem>>, vector<10x8x128xbf16>,
    %c0_18 = arith.constant 0 : index
    %c24 = arith.constant 24 : index
    %c0_19 = arith.constant 0 : index
    %26 = vector.load %arg13[%c0_18, %c24, %c0_19] : memref<10x32x128xbf16, #tpu.memory_space<vmem>>, vector<10x8x128xbf16>
    tpu.vector_store %arg13[%c0_18, %c24, %c0_19], %24 {strides = array<i32>} : memref<10x32x128xbf16, #tpu.memory_space<vmem>>, vector<10x8x128xbf16>,
    %27 = arith.truncf %23 : vector<10x16x128xf32> to vector<10x16x128xbf16>
    %c0_20 = arith.constant 0 : index
    %c8 = arith.constant 8 : index
    %c0_21 = arith.constant 0 : index
    %28 = vector.load %arg13[%c0_20, %c8, %c0_21] : memref<10x32x128xbf16, #tpu.memory_space<vmem>>, vector<10x16x128xbf16>
    tpu.vector_store %arg13[%c0_20, %c8, %c0_21], %27 {strides = array<i32>} : memref<10x32x128xbf16, #tpu.memory_space<vmem>>, vector<10x16x128xbf16>,
    %cst_22 = arith.constant 0.000000e+00 : bf16
    %29 = vector.broadcast %cst_22 : bf16 to vector<1x32x128xbf16>
    %c0_i32_23 = arith.constant 0 : i32
    %30 = arith.cmpi eq, %arg1, %c0_i32_23 : i32
    %31 = arith.extui %30 : i1 to i32
    %c0_i32_24 = arith.constant 0 : i32
    %32 = arith.cmpi ne, %31, %c0_i32_24 : i32
    scf.if %32 {
      %c0_94 = arith.constant 0 : index
      %c0_95 = arith.constant 0 : index
      %c0_96 = arith.constant 0 : index
      %103 = vector.load %arg13[%c0_94, %c0_95, %c0_96] : memref<10x32x128xbf16, #tpu.memory_space<vmem>>, vector<1x32x128xbf16>
      tpu.vector_store %arg13[%c0_94, %c0_95, %c0_96], %29 {strides = array<i32>} : memref<10x32x128xbf16, #tpu.memory_space<vmem>>, vector<1x32x128xbf16>,
    } else {
    }
    %c1_i32 = arith.constant 1 : i32
    %33 = arith.cmpi eq, %arg1, %c1_i32 : i32
    %34 = arith.extui %33 : i1 to i32
    %c0_i32_25 = arith.constant 0 : i32
    %35 = arith.cmpi ne, %34, %c0_i32_25 : i32
    scf.if %35 {
      %c9_94 = arith.constant 9 : index
      %c0_95 = arith.constant 0 : index
      %c0_96 = arith.constant 0 : index
      %103 = vector.load %arg13[%c9_94, %c0_95, %c0_96] : memref<10x32x128xbf16, #tpu.memory_space<vmem>>, vector<1x32x128xbf16>
      tpu.vector_store %arg13[%c9_94, %c0_95, %c0_96], %29 {strides = array<i32>} : memref<10x32x128xbf16, #tpu.memory_space<vmem>>, vector<1x32x128xbf16>,
    } else {
    }
    %c0_26 = arith.constant 0 : index
    %c7 = arith.constant 7 : index
    %c0_27 = arith.constant 0 : index
    %36 = vector.load %arg13[%c0_26, %c7, %c0_27] : memref<10x32x128xbf16, #tpu.memory_space<vmem>>, vector<8x16x128xbf16>
    %c0_28 = arith.constant 0 : index
    %c0_29 = arith.constant 0 : index
    %c0_30 = arith.constant 0 : index
    %37 = vector.load %arg6[%c0_28, %c0_29, %c0_30] : memref<9x128x128xbf16, #tpu.memory_space<vmem>>, vector<1x128x128xbf16>
    %38 = vector.shape_cast %37 : vector<1x128x128xbf16> to vector<128x128xbf16>
    %cst_31 = arith.constant dense<0.000000e+00> : vector<8x16x128xf32>
    %39 = tpu.matmul %36, %38, %cst_31 {dimension_numbers = #tpu.dot_dimension_numbers<[2], [0], [0, 1], [1], [0, 0, 0, 1, 1, 1], [], []>} : vector<8x16x128xbf16>, vector<128x128xbf16>, vector<8x16x128xf32> -> vector<8x16x128xf32>
    %c0_32 = arith.constant 0 : index
    %c8_33 = arith.constant 8 : index
    %c0_34 = arith.constant 0 : index
    %40 = vector.load %arg13[%c0_32, %c8_33, %c0_34] : memref<10x32x128xbf16, #tpu.memory_space<vmem>>, vector<8x16x128xbf16>
    %c1 = arith.constant 1 : index
    %c0_35 = arith.constant 0 : index
    %c0_36 = arith.constant 0 : index
    %41 = vector.load %arg6[%c1, %c0_35, %c0_36] : memref<9x128x128xbf16, #tpu.memory_space<vmem>>, vector<1x128x128xbf16>
    %42 = vector.shape_cast %41 : vector<1x128x128xbf16> to vector<128x128xbf16>
    %cst_37 = arith.constant dense<0.000000e+00> : vector<8x16x128xf32>
    %43 = tpu.matmul %40, %42, %cst_37 {dimension_numbers = #tpu.dot_dimension_numbers<[2], [0], [0, 1], [1], [0, 0, 0, 1, 1, 1], [], []>} : vector<8x16x128xbf16>, vector<128x128xbf16>, vector<8x16x128xf32> -> vector<8x16x128xf32>
    %44 = arith.addf %39, %43 : vector<8x16x128xf32>
    %c0_38 = arith.constant 0 : index
    %c9 = arith.constant 9 : index
    %c0_39 = arith.constant 0 : index
    %45 = vector.load %arg13[%c0_38, %c9, %c0_39] : memref<10x32x128xbf16, #tpu.memory_space<vmem>>, vector<8x16x128xbf16>
    %c2 = arith.constant 2 : index
    %c0_40 = arith.constant 0 : index
    %c0_41 = arith.constant 0 : index
    %46 = vector.load %arg6[%c2, %c0_40, %c0_41] : memref<9x128x128xbf16, #tpu.memory_space<vmem>>, vector<1x128x128xbf16>
    %47 = vector.shape_cast %46 : vector<1x128x128xbf16> to vector<128x128xbf16>
    %cst_42 = arith.constant dense<0.000000e+00> : vector<8x16x128xf32>
    %48 = tpu.matmul %45, %47, %cst_42 {dimension_numbers = #tpu.dot_dimension_numbers<[2], [0], [0, 1], [1], [0, 0, 0, 1, 1, 1], [], []>} : vector<8x16x128xbf16>, vector<128x128xbf16>, vector<8x16x128xf32> -> vector<8x16x128xf32>
    %49 = arith.addf %44, %48 : vector<8x16x128xf32>
    %c1_43 = arith.constant 1 : index
    %c7_44 = arith.constant 7 : index
    %c0_45 = arith.constant 0 : index
    %50 = vector.load %arg13[%c1_43, %c7_44, %c0_45] : memref<10x32x128xbf16, #tpu.memory_space<vmem>>, vector<8x16x128xbf16>
    %c3 = arith.constant 3 : index
    %c0_46 = arith.constant 0 : index
    %c0_47 = arith.constant 0 : index
    %51 = vector.load %arg6[%c3, %c0_46, %c0_47] : memref<9x128x128xbf16, #tpu.memory_space<vmem>>, vector<1x128x128xbf16>
    %52 = vector.shape_cast %51 : vector<1x128x128xbf16> to vector<128x128xbf16>
    %cst_48 = arith.constant dense<0.000000e+00> : vector<8x16x128xf32>
    %53 = tpu.matmul %50, %52, %cst_48 {dimension_numbers = #tpu.dot_dimension_numbers<[2], [0], [0, 1], [1], [0, 0, 0, 1, 1, 1], [], []>} : vector<8x16x128xbf16>, vector<128x128xbf16>, vector<8x16x128xf32> -> vector<8x16x128xf32>
    %54 = arith.addf %49, %53 : vector<8x16x128xf32>
    %c1_49 = arith.constant 1 : index
    %c8_50 = arith.constant 8 : index
    %c0_51 = arith.constant 0 : index
    %55 = vector.load %arg13[%c1_49, %c8_50, %c0_51] : memref<10x32x128xbf16, #tpu.memory_space<vmem>>, vector<8x16x128xbf16>
    %c4 = arith.constant 4 : index
    %c0_52 = arith.constant 0 : index
    %c0_53 = arith.constant 0 : index
    %56 = vector.load %arg6[%c4, %c0_52, %c0_53] : memref<9x128x128xbf16, #tpu.memory_space<vmem>>, vector<1x128x128xbf16>
    %57 = vector.shape_cast %56 : vector<1x128x128xbf16> to vector<128x128xbf16>
    %cst_54 = arith.constant dense<0.000000e+00> : vector<8x16x128xf32>
    %58 = tpu.matmul %55, %57, %cst_54 {dimension_numbers = #tpu.dot_dimension_numbers<[2], [0], [0, 1], [1], [0, 0, 0, 1, 1, 1], [], []>} : vector<8x16x128xbf16>, vector<128x128xbf16>, vector<8x16x128xf32> -> vector<8x16x128xf32>
    %59 = arith.addf %54, %58 : vector<8x16x128xf32>
    %c1_55 = arith.constant 1 : index
    %c9_56 = arith.constant 9 : index
    %c0_57 = arith.constant 0 : index
    %60 = vector.load %arg13[%c1_55, %c9_56, %c0_57] : memref<10x32x128xbf16, #tpu.memory_space<vmem>>, vector<8x16x128xbf16>
    %c5 = arith.constant 5 : index
    %c0_58 = arith.constant 0 : index
    %c0_59 = arith.constant 0 : index
    %61 = vector.load %arg6[%c5, %c0_58, %c0_59] : memref<9x128x128xbf16, #tpu.memory_space<vmem>>, vector<1x128x128xbf16>
    %62 = vector.shape_cast %61 : vector<1x128x128xbf16> to vector<128x128xbf16>
    %cst_60 = arith.constant dense<0.000000e+00> : vector<8x16x128xf32>
    %63 = tpu.matmul %60, %62, %cst_60 {dimension_numbers = #tpu.dot_dimension_numbers<[2], [0], [0, 1], [1], [0, 0, 0, 1, 1, 1], [], []>} : vector<8x16x128xbf16>, vector<128x128xbf16>, vector<8x16x128xf32> -> vector<8x16x128xf32>
    %64 = arith.addf %59, %63 : vector<8x16x128xf32>
    %c2_61 = arith.constant 2 : index
    %c7_62 = arith.constant 7 : index
    %c0_63 = arith.constant 0 : index
    %65 = vector.load %arg13[%c2_61, %c7_62, %c0_63] : memref<10x32x128xbf16, #tpu.memory_space<vmem>>, vector<8x16x128xbf16>
    %c6 = arith.constant 6 : index
    %c0_64 = arith.constant 0 : index
    %c0_65 = arith.constant 0 : index
    %66 = vector.load %arg6[%c6, %c0_64, %c0_65] : memref<9x128x128xbf16, #tpu.memory_space<vmem>>, vector<1x128x128xbf16>
    %67 = vector.shape_cast %66 : vector<1x128x128xbf16> to vector<128x128xbf16>
    %cst_66 = arith.constant dense<0.000000e+00> : vector<8x16x128xf32>
    %68 = tpu.matmul %65, %67, %cst_66 {dimension_numbers = #tpu.dot_dimension_numbers<[2], [0], [0, 1], [1], [0, 0, 0, 1, 1, 1], [], []>} : vector<8x16x128xbf16>, vector<128x128xbf16>, vector<8x16x128xf32> -> vector<8x16x128xf32>
    %69 = arith.addf %64, %68 : vector<8x16x128xf32>
    %c2_67 = arith.constant 2 : index
    %c8_68 = arith.constant 8 : index
    %c0_69 = arith.constant 0 : index
    %70 = vector.load %arg13[%c2_67, %c8_68, %c0_69] : memref<10x32x128xbf16, #tpu.memory_space<vmem>>, vector<8x16x128xbf16>
    %c7_70 = arith.constant 7 : index
    %c0_71 = arith.constant 0 : index
    %c0_72 = arith.constant 0 : index
    %71 = vector.load %arg6[%c7_70, %c0_71, %c0_72] : memref<9x128x128xbf16, #tpu.memory_space<vmem>>, vector<1x128x128xbf16>
    %72 = vector.shape_cast %71 : vector<1x128x128xbf16> to vector<128x128xbf16>
    %cst_73 = arith.constant dense<0.000000e+00> : vector<8x16x128xf32>
    %73 = tpu.matmul %70, %72, %cst_73 {dimension_numbers = #tpu.dot_dimension_numbers<[2], [0], [0, 1], [1], [0, 0, 0, 1, 1, 1], [], []>} : vector<8x16x128xbf16>, vector<128x128xbf16>, vector<8x16x128xf32> -> vector<8x16x128xf32>
    %74 = arith.addf %69, %73 : vector<8x16x128xf32>
    %c2_74 = arith.constant 2 : index
    %c9_75 = arith.constant 9 : index
    %c0_76 = arith.constant 0 : index
    %75 = vector.load %arg13[%c2_74, %c9_75, %c0_76] : memref<10x32x128xbf16, #tpu.memory_space<vmem>>, vector<8x16x128xbf16>
    %c8_77 = arith.constant 8 : index
    %c0_78 = arith.constant 0 : index
    %c0_79 = arith.constant 0 : index
    %76 = vector.load %arg6[%c8_77, %c0_78, %c0_79] : memref<9x128x128xbf16, #tpu.memory_space<vmem>>, vector<1x128x128xbf16>
    %77 = vector.shape_cast %76 : vector<1x128x128xbf16> to vector<128x128xbf16>
    %cst_80 = arith.constant dense<0.000000e+00> : vector<8x16x128xf32>
    %78 = tpu.matmul %75, %77, %cst_80 {dimension_numbers = #tpu.dot_dimension_numbers<[2], [0], [0, 1], [1], [0, 0, 0, 1, 1, 1], [], []>} : vector<8x16x128xbf16>, vector<128x128xbf16>, vector<8x16x128xf32> -> vector<8x16x128xf32>
    %79 = arith.addf %74, %78 : vector<8x16x128xf32>
    %c0_81 = arith.constant 0 : index
    %c0_82 = arith.constant 0 : index
    %80 = vector.load %arg7[%c0_81, %c0_82] : memref<1x128xf32, #tpu.memory_space<vmem>>, vector<1x128xf32>
    %81 = vector.shape_cast %80 : vector<1x128xf32> to vector<1x1x128xf32>
    %82 = vector.broadcast %81 : vector<1x1x128xf32> to vector<8x16x128xf32>
    %83 = arith.mulf %79, %82 : vector<8x16x128xf32>
    %c0_83 = arith.constant 0 : index
    %c0_84 = arith.constant 0 : index
    %84 = vector.load %arg8[%c0_83, %c0_84] : memref<1x128xf32, #tpu.memory_space<vmem>>, vector<1x128xf32>
    %85 = vector.shape_cast %84 : vector<1x128xf32> to vector<1x1x128xf32>
    %86 = vector.broadcast %85 : vector<1x1x128xf32> to vector<8x16x128xf32>
    %87 = arith.addf %83, %86 : vector<8x16x128xf32>
    %cst_85 = arith.constant 0.000000e+00 : f32
    %88 = vector.broadcast %cst_85 : f32 to vector<8x16x128xf32>
    %89 = arith.maximumf %87, %88 : vector<8x16x128xf32>
    %90 = vector.extract_strided_slice %12 {offsets = [1, 0, 128], sizes = [8, 16, 128], strides = [1, 1, 1]} : vector<10x16x256xf32> to vector<8x16x128xf32>
    %c0_86 = arith.constant 0 : index
    %c0_87 = arith.constant 0 : index
    %91 = vector.load %arg9[%c0_86, %c0_87] : memref<1x128xf32, #tpu.memory_space<vmem>>, vector<1x128xf32>
    %92 = vector.shape_cast %91 : vector<1x128xf32> to vector<1x1x128xf32>
    %93 = vector.broadcast %92 : vector<1x1x128xf32> to vector<8x16x128xf32>
    %94 = arith.mulf %90, %93 : vector<8x16x128xf32>
    %c0_88 = arith.constant 0 : index
    %c0_89 = arith.constant 0 : index
    %95 = vector.load %arg10[%c0_88, %c0_89] : memref<1x128xf32, #tpu.memory_space<vmem>>, vector<1x128xf32>
    %96 = vector.shape_cast %95 : vector<1x128xf32> to vector<1x1x128xf32>
    %97 = vector.broadcast %96 : vector<1x1x128xf32> to vector<8x16x128xf32>
    %98 = arith.addf %94, %97 : vector<8x16x128xf32>
    %99 = arith.addf %89, %98 : vector<8x16x128xf32>
    %100 = vector.shape_cast %99 : vector<8x16x128xf32> to vector<1x8x16x128xf32>
    %101 = arith.truncf %100 : vector<1x8x16x128xf32> to vector<1x8x16x128xbf16>
    %c0_90 = arith.constant 0 : index
    %c0_91 = arith.constant 0 : index
    %c0_92 = arith.constant 0 : index
    %c0_93 = arith.constant 0 : index
    %102 = vector.load %arg11[%c0_90, %c0_91, %c0_92, %c0_93] : memref<1x8x16x128xbf16, #tpu.memory_space<vmem>>, vector<1x8x16x128xbf16>
    tpu.vector_store %arg11[%c0_90, %c0_91, %c0_92, %c0_93], %101 {strides = array<i32>} : memref<1x8x16x128xbf16, #tpu.memory_space<vmem>>, vector<1x8x16x128xbf16>,
    return
  }
  func.func @transform_1(%arg0: i32, %arg1: i32) -> (i32, i32) {
    %c0_i32 = arith.constant 0 : i32
    %c0_i32_0 = arith.constant 0 : i32
    %c0_i32_1 = arith.constant 0 : i32
    return %c0_i32, %c0_i32_0 : i32, i32
  }
  func.func @transform_2(%arg0: i32, %arg1: i32) -> (i32, i32) {
    %c0_i32 = arith.constant 0 : i32
    %c0_i32_0 = arith.constant 0 : i32
    %c0_i32_1 = arith.constant 0 : i32
    return %c0_i32, %c0_i32_0 : i32, i32
  }
  func.func @transform_3(%arg0: i32, %arg1: i32) -> (i32, i32) {
    %c0_i32 = arith.constant 0 : i32
    %c0_i32_0 = arith.constant 0 : i32
    %c0_i32_1 = arith.constant 0 : i32
    return %c0_i32, %c0_i32_0 : i32, i32
  }
  func.func @transform_4(%arg0: i32, %arg1: i32) -> (i32, i32, i32) {
    %c0_i32 = arith.constant 0 : i32
    %c0_i32_0 = arith.constant 0 : i32
    %c0_i32_1 = arith.constant 0 : i32
    %c0_i32_2 = arith.constant 0 : i32
    return %c0_i32, %c0_i32_0, %c0_i32_1 : i32, i32, i32
  }
  func.func @transform_5(%arg0: i32, %arg1: i32) -> (i32, i32) {
    %c0_i32 = arith.constant 0 : i32
    %c0_i32_0 = arith.constant 0 : i32
    %c0_i32_1 = arith.constant 0 : i32
    return %c0_i32, %c0_i32_0 : i32, i32
  }
  func.func @transform_6(%arg0: i32, %arg1: i32) -> (i32, i32) {
    %c0_i32 = arith.constant 0 : i32
    %c0_i32_0 = arith.constant 0 : i32
    %c0_i32_1 = arith.constant 0 : i32
    return %c0_i32, %c0_i32_0 : i32, i32
  }
  func.func @transform_7(%arg0: i32, %arg1: i32) -> (i32, i32) {
    %c0_i32 = arith.constant 0 : i32
    %c0_i32_0 = arith.constant 0 : i32
    %c0_i32_1 = arith.constant 0 : i32
    return %c0_i32, %c0_i32_0 : i32, i32
  }
  func.func @transform_8(%arg0: i32, %arg1: i32) -> (i32, i32) {
    %c0_i32 = arith.constant 0 : i32
    %c0_i32_0 = arith.constant 0 : i32
    %c0_i32_1 = arith.constant 0 : i32
    return %c0_i32, %c0_i32_0 : i32, i32
  }
  func.func @transform_9(%arg0: i32, %arg1: i32) -> (i32, i32, i32, i32) {
    %c0_i32 = arith.constant 0 : i32
    %c0_i32_0 = arith.constant 0 : i32
    %c0_i32_1 = arith.constant 0 : i32
    return %arg0, %arg1, %c0_i32, %c0_i32_0 : i32, i32, i32, i32
  }
}

</mosaic_0001>

<llo_original>
// kernel: tpu_custom_call.1
$region0: #{tpu_custom_call.1}
  #allocation0 [shape = 'u32[]', space=smem, size = 0x4, offset = 0x4, fixed_abs, tag = 'smem constant byte address 0x4 - core index']
  #allocation1 [shape = 'u32[144,128]{1,0:T(1,128)}', space=vmem, size = 0x12000, scoped, tag = 'internal scratch']
  #allocation2 [shape = 'bf16[10,16,128]{2,1,0:T(8,128)(2,1)}', space=vmem, size = 0xa000, scoped, tag = 'scratch operand']
  #allocation3 [shape = 'bf16[10,32,128]{2,1,0:T(8,128)(2,1)}', space=vmem, size = 0x14000, scoped, tag = 'scratch operand']
  #allocation4 [shape = 's32[1]{0}', space=sflag, size = 0x4, scoped, tag = 'scratch operand']
  #allocation11 [shape = 's32[]', space=sflag, size = 0x4, offset = 0, fixed_abs, tag = 'sflag constant byte address 0x0 - dummy sync flag']
  #allocation12 [shape = 's32[]', space=sflag, size = 0x4, offset = 0, fixed_abs, tag = 'sflag constant byte address 0x0 - dummy sync flag']
  #allocation13 [shape = 'u32[]', space=smem, size = 0x4, offset = 0x44, fixed_abs, tag = 'smem constant byte address 0x44 - assertion arg 0']
  #allocation14 [shape = 'u32[]', space=smem, size = 0x4, offset = 0x48, fixed_abs, tag = 'smem constant byte address 0x48 - assertion arg 1']
  %s0 = inlined_call_operand.hbm [shape: bf16[2,18,16,128], index: 0, kind: input, shape index: {}]
  %s1 = inlined_call_operand.hbm [shape: bf16[128,256], index: 1, kind: input, shape index: {}]
  %s2 = inlined_call_operand.vmem [shape: f32[1,128], index: 2, kind: input, shape index: {}]
  %s3 = inlined_call_operand.vmem [shape: f32[1,128], index: 3, kind: input, shape index: {}]
  %s4 = inlined_call_operand.hbm [shape: bf16[9,128,128], index: 4, kind: input, shape index: {}]
  %s5 = inlined_call_operand.vmem [shape: f32[1,128], index: 5, kind: input, shape index: {}]
  %s6 = inlined_call_operand.vmem [shape: f32[1,128], index: 6, kind: input, shape index: {}]
  %s7 = inlined_call_operand.vmem [shape: f32[1,128], index: 7, kind: input, shape index: {}]
  %s8 = inlined_call_operand.vmem [shape: f32[1,128], index: 8, kind: input, shape index: {}]
  %s9 = inlined_call_operand.hbm [shape: bf16[2,16,16,128], index: 9, kind: output, shape index: {}]
  %s10 = sld [smem:[#allocation0]]
  $region85: #{tpu_custom_call.1} parent=0
    _
  %s12 = ssub.s32 1, %s10
  %s13 = scalar_select 0, %s12, %s10
  $region1: #{tpu_custom_call.1} parent=0
    #allocation5 [shape = 'u8[65536]{0}', space=vmem, size = 0x10000, scoped, tag = 'input window, operand 1, single buffered']
    #allocation6 [shape = 's32[2]{0}', space=sflag, size = 0x8, scoped, tag = 'scoped memory for tpu_custom_call.1']
    #allocation7 [shape = 's32[2]{0}', space=sflag, size = 0x8, scoped, tag = 'scoped memory for tpu_custom_call.1']
    #allocation8 [shape = 'u8[294912]{0}', space=vmem, size = 0x48000, scoped, tag = 'input window, operand 4, single buffered']
    #allocation9 [shape = 's32[1]{0}', space=sflag, size = 0x4, scoped, tag = 'scoped memory for tpu_custom_call.1']
    #allocation10 [shape = 'u8[65536]{0}', space=vmem, size = 0x10000, scoped, tag = 'output window, operand 0']
    %14 = vsyncpa [#allocation6], 0
    %15 = vsyncpa [#allocation9], 0
    %16 = vsyncpa [#allocation7], 0
    %s17 = scalar_lea.sflag [#allocation7], 1
    %18 = vsyncpa %s17, 0
    loop: start=0, step=1, limit=6
    $region2: #{tpu_custom_call.1} parent=1 // loop_pre_header
      _
    $region3: #{tpu_custom_call.1} parent=1 // loop_header
      %s20 = sphi 0, %s24
      %p21 = scmp.ge.s32.totalorder %s20, 6
      %s27 = sphi 0, %s39
      %s28 = sphi 0, %s35
      %s29 = sphi 0, %s27
      %s30 = sphi 0, %s28
      %s31 = sphi 0, %s29
      %s32 = sphi 0, %s30
      %s40 = sphi 0, %s40
      %s42 = sphi 0, %s40
      %s43 = sphi 0, %s42
      %s57 = sphi 0, %s43
      %s61 = sphi 0, %s61
      %s63 = sphi 0, %s61
      %s64 = sphi 0, %s63
      %s78 = sphi 0, %s64
      %s82 = sphi 0, %s82
      %s84 = sphi 0, %s82
      %s85 = sphi 0, %s84
      %s99 = sphi 0, %s85
      %s103 = sphi 0, %s103
      %s105 = sphi 0, %s103
      %s106 = sphi 0, %s105
      %s120 = sphi 0, %s106
      %s124 = sphi 0, %s124
      %s126 = sphi 0, %s124
      %s127 = sphi 0, %s126
      %s141 = sphi 0, %s127
      %s145 = sphi 0, %s145
      %s147 = sphi 0, %s145
      %s148 = sphi 0, %s147
      %s162 = sphi 0, %s148
      %s166 = sphi 0, %s166
      %s168 = sphi 0, %s166
      %s169 = sphi 0, %s168
      %s183 = sphi 0, %s169
      %s187 = sphi 0, %s187
      %s189 = sphi 0, %s187
      %s190 = sphi 0, %s189
      %s204 = sphi 0, %s190
      %s212 = sphi 0, %s214
      %s215 = sphi 0, %s212
      %s216 = sphi 0, %s215
      %s232 = sphi 0, %s216
    $region4: #{tpu_custom_call.1} parent=1 // loop_header_branch
      %23 = sbr.rel (%p21) target = $region8
    $region5: #{tpu_custom_call.1} parent=1 // loop_body
      %s25 = ssub.s32 %s20, 1
      %s26 = ssub.s32 %s20, 2
      %s33 = sadd.s32 1, %s28
      %p34 = scmp.ge.s32.totalorder %s33, 2
      %s35 = scalar_select %p34, 0, %s33
      %s36 = sadd.s32 1, %s27
      %s37 = scalar_select %p34, %s36, %s27
      %p38 = scmp.ge.s32.totalorder %s37, 2
      %s39 = scalar_select %p38, 0, %s37
      %s41 = sadd.s32 %s40, 1
      %p44 = scmp.eq.s32.totalorder %s20, 3
      %p45 = scmp.ne.s32.totalorder %s40, %s42
      %p46 = scmp.eq.s32.totalorder %s20, 0
      %p47 = por %p45, %p46
      %p48 = scmp.ne.s32.totalorder %s40, %s42
      %p49 = scmp.eq.s32.totalorder %s25, 3
      %p50 = por %p48, %p49
      %p51 = scmp.ne.s32.totalorder %s42, %s43
      %p52 = scmp.eq.s32.totalorder %s25, 0
      %p53 = por %p51, %p52
      %p54 = scmp.ne.s32.totalorder %s42, %s43
      %p55 = scmp.eq.s32.totalorder %s26, 3
      %p56 = por %p54, %p55
      %p58 = scmp.ne.s32.totalorder %s43, %s57
      %p59 = scmp.eq.s32.totalorder %s26, 0
      %p60 = por %p58, %p59
      %s62 = sadd.s32 %s61, 1
      %p65 = scmp.eq.s32.totalorder %s20, 3
      %p66 = scmp.ne.s32.totalorder %s61, %s63
      %p67 = scmp.eq.s32.totalorder %s20, 0
      %p68 = por %p66, %p67
      %p69 = scmp.ne.s32.totalorder %s61, %s63
      %p70 = scmp.eq.s32.totalorder %s25, 3
      %p71 = por %p69, %p70
      %p72 = scmp.ne.s32.totalorder %s63, %s64
      %p73 = scmp.eq.s32.totalorder %s25, 0
      %p74 = por %p72, %p73
      %p75 = scmp.ne.s32.totalorder %s63, %s64
      %p76 = scmp.eq.s32.totalorder %s26, 3
      %p77 = por %p75, %p76
      %p79 = scmp.ne.s32.totalorder %s64, %s78
      %p80 = scmp.eq.s32.totalorder %s26, 0
      %p81 = por %p79, %p80
      %s83 = sadd.s32 %s82, 1
      %p86 = scmp.eq.s32.totalorder %s20, 3
      %p87 = scmp.ne.s32.totalorder %s82, %s84
      %p88 = scmp.eq.s32.totalorder %s20, 0
      %p89 = por %p87, %p88
      %p90 = scmp.ne.s32.totalorder %s82, %s84
      %p91 = scmp.eq.s32.totalorder %s25, 3
      %p92 = por %p90, %p91
      %p93 = scmp.ne.s32.totalorder %s84, %s85
      %p94 = scmp.eq.s32.totalorder %s25, 0
      %p95 = por %p93, %p94
      %p96 = scmp.ne.s32.totalorder %s84, %s85
      %p97 = scmp.eq.s32.totalorder %s26, 3
      %p98 = por %p96, %p97
      %p100 = scmp.ne.s32.totalorder %s85, %s99
      %p101 = scmp.eq.s32.totalorder %s26, 0
      %p102 = por %p100, %p101
      %s104 = sadd.s32 %s103, 1
      %p107 = scmp.eq.s32.totalorder %s20, 3
      %p108 = scmp.ne.s32.totalorder %s103, %s105
      %p109 = scmp.eq.s32.totalorder %s20, 0
      %p110 = por %p108, %p109
      %p111 = scmp.ne.s32.totalorder %s103, %s105
      %p112 = scmp.eq.s32.totalorder %s25, 3
      %p113 = por %p111, %p112
      %p114 = scmp.ne.s32.totalorder %s105, %s106
      %p115 = scmp.eq.s32.totalorder %s25, 0
      %p116 = por %p114, %p115
      %p117 = scmp.ne.s32.totalorder %s105, %s106
      %p118 = scmp.eq.s32.totalorder %s26, 3
      %p119 = por %p117, %p118
      %p121 = scmp.ne.s32.totalorder %s106, %s120
      %p122 = scmp.eq.s32.totalorder %s26, 0
      %p123 = por %p121, %p122
      %s125 = sadd.s32 %s124, 1
      %p128 = scmp.eq.s32.totalorder %s20, 3
      %p129 = scmp.ne.s32.totalorder %s124, %s126
      %p130 = scmp.eq.s32.totalorder %s20, 0
      %p131 = por %p129, %p130
      %p132 = scmp.ne.s32.totalorder %s124, %s126
      %p133 = scmp.eq.s32.totalorder %s25, 3
      %p134 = por %p132, %p133
      %p135 = scmp.ne.s32.totalorder %s126, %s127
      %p136 = scmp.eq.s32.totalorder %s25, 0
      %p137 = por %p135, %p136
      %p138 = scmp.ne.s32.totalorder %s126, %s127
      %p139 = scmp.eq.s32.totalorder %s26, 3
      %p140 = por %p138, %p139
      %p142 = scmp.ne.s32.totalorder %s127, %s141
      %p143 = scmp.eq.s32.totalorder %s26, 0
      %p144 = por %p142, %p143
      %s146 = sadd.s32 %s145, 1
      %p149 = scmp.eq.s32.totalorder %s20, 3
      %p150 = scmp.ne.s32.totalorder %s145, %s147
      %p151 = scmp.eq.s32.totalorder %s20, 0
      %p152 = por %p150, %p151
      %p153 = scmp.ne.s32.totalorder %s145, %s147
      %p154 = scmp.eq.s32.totalorder %s25, 3
      %p155 = por %p153, %p154
      %p156 = scmp.ne.s32.totalorder %s147, %s148
      %p157 = scmp.eq.s32.totalorder %s25, 0
      %p158 = por %p156, %p157
      %p159 = scmp.ne.s32.totalorder %s147, %s148
      %p160 = scmp.eq.s32.totalorder %s26, 3
      %p161 = por %p159, %p160
      %p163 = scmp.ne.s32.totalorder %s148, %s162
      %p164 = scmp.eq.s32.totalorder %s26, 0
      %p165 = por %p163, %p164
      %s167 = sadd.s32 %s166, 1
      %p170 = scmp.eq.s32.totalorder %s20, 3
      %p171 = scmp.ne.s32.totalorder %s166, %s168
      %p172 = scmp.eq.s32.totalorder %s20, 0
      %p173 = por %p171, %p172
      %p174 = scmp.ne.s32.totalorder %s166, %s168
      %p175 = scmp.eq.s32.totalorder %s25, 3
      %p176 = por %p174, %p175
      %p177 = scmp.ne.s32.totalorder %s168, %s169
      %p178 = scmp.eq.s32.totalorder %s25, 0
      %p179 = por %p177, %p178
      %p180 = scmp.ne.s32.totalorder %s168, %s169
      %p181 = scmp.eq.s32.totalorder %s26, 3
      %p182 = por %p180, %p181
      %p184 = scmp.ne.s32.totalorder %s169, %s183
      %p185 = scmp.eq.s32.totalorder %s26, 0
      %p186 = por %p184, %p185
      %s188 = sadd.s32 %s187, 1
      %p191 = scmp.eq.s32.totalorder %s20, 3
      %p192 = scmp.ne.s32.totalorder %s187, %s189
      %p193 = scmp.eq.s32.totalorder %s20, 0
      %p194 = por %p192, %p193
      %p195 = scmp.ne.s32.totalorder %s187, %s189
      %p196 = scmp.eq.s32.totalorder %s25, 3
      %p197 = por %p195, %p196
      %p198 = scmp.ne.s32.totalorder %s189, %s190
      %p199 = scmp.eq.s32.totalorder %s25, 0
      %p200 = por %p198, %p199
      %p201 = scmp.ne.s32.totalorder %s189, %s190
      %p202 = scmp.eq.s32.totalorder %s26, 3
      %p203 = por %p201, %p202
      %p205 = scmp.ne.s32.totalorder %s190, %s204
      %p206 = scmp.eq.s32.totalorder %s26, 0
      %p207 = por %p205, %p206
      %s208 = ssub.s32 %s27, %s39
      %s209 = ssub.s32 %s28, %s35
      %s210 = sor.u32 %s208, %s209
      %p211 = scmp.eq.s32.totalorder %s210, 0
      %s213 = sadd.s32 %s212, 1
      %s214 = scalar_select %p211, %s212, %s213
      %p217 = pneg %p211
      %p218 = scmp.eq.s32.totalorder %s20, 3
      %p219 = por %p217, %p218
      %p220 = scmp.ne.s32.totalorder %s212, %s215
      %p221 = scmp.eq.s32.totalorder %s20, 0
      %p222 = por %p220, %p221
      %p223 = scmp.ne.s32.totalorder %s212, %s215
      %p224 = scmp.eq.s32.totalorder %s25, 3
      %p225 = por %p223, %p224
      %p226 = scmp.ne.s32.totalorder %s215, %s216
      %p227 = scmp.eq.s32.totalorder %s25, 0
      %p228 = por %p226, %p227
      %p229 = scmp.ne.s32.totalorder %s215, %s216
      %p230 = scmp.eq.s32.totalorder %s26, 3
      %p231 = por %p229, %p230
      %p233 = scmp.ne.s32.totalorder %s216, %s232
      %p234 = scmp.eq.s32.totalorder %s26, 0
      %p235 = por %p233, %p234
      %p236 = scmp.le.s32.totalorder 1, %s20
      %p237 = scmp.lt.s32.totalorder %s20, 5
      %p238 = pnand %p236, %p237
      %p239 = pneg %p238
      // Predicated region
      $region9: #{tpu_custom_call.1} parent=5 // pred_check
        _
      $region10: #{tpu_custom_call.1} parent=5 // pred_check_branch
        %241 = sbr.rel (%p238) target = $region12
      $region11: #{tpu_custom_call.1} parent=5 // pred_region
        %s242 = ssub.s32 %s20, 1
        // Predicated region
        $region13: #{tpu_custom_call.1} parent=11 // pred_check
          %p243 = pneg %p53
        $region14: #{tpu_custom_call.1} parent=11 // pred_check_branch
          %245 = sbr.rel (%p243) target = $region16
        $region15: #{tpu_custom_call.1} parent=11 // pred_region
          %s247 = ssub.s32 2048, 2048
          %248 = vsyncadd [#allocation6], %s247
          %s249 = sshll.u32 [#allocation5], 4
          %s250 = int_to_ptr.vmem [resolvable:$true] %s249
          %255 = dma.hbm_to_vmem [thread:$0]  %s1, 2048, %s250, [#allocation6], 128, 128, 8
        $region16: #{tpu_custom_call.1} parent=11 // pred_fallthru
          _
        // Predicated region
        $region17: #{tpu_custom_call.1} parent=11 // pred_check
          %p256 = pneg %p74
        $region18: #{tpu_custom_call.1} parent=11 // pred_check_branch
          %258 = sbr.rel (%p256) target = $region20
        $region19: #{tpu_custom_call.1} parent=11 // pred_region
          _
        $region20: #{tpu_custom_call.1} parent=11 // pred_fallthru
          _
        // Predicated region
        $region21: #{tpu_custom_call.1} parent=11 // pred_check
          %p259 = pneg %p95
        $region22: #{tpu_custom_call.1} parent=11 // pred_check_branch
          %261 = sbr.rel (%p259) target = $region24
        $region23: #{tpu_custom_call.1} parent=11 // pred_region
          _
        $region24: #{tpu_custom_call.1} parent=11 // pred_fallthru
          _
        // Predicated region
        $region25: #{tpu_custom_call.1} parent=11 // pred_check
          %p262 = pneg %p116
        $region26: #{tpu_custom_call.1} parent=11 // pred_check_branch
          %264 = sbr.rel (%p262) target = $region28
        $region27: #{tpu_custom_call.1} parent=11 // pred_region
          %s266 = ssub.s32 9216, 9216
          %267 = vsyncadd [#allocation9], %s266
          %s268 = sshll.u32 [#allocation8], 4
          %s269 = int_to_ptr.vmem [resolvable:$true] %s268
          %274 = dma.hbm_to_vmem [thread:$0]  %s4, 9216, %s269, [#allocation9], 64, 64, 4
        $region28: #{tpu_custom_call.1} parent=11 // pred_fallthru
          _
        // Predicated region
        $region29: #{tpu_custom_call.1} parent=11 // pred_check
          %p275 = pneg %p137
        $region30: #{tpu_custom_call.1} parent=11 // pred_check_branch
          %277 = sbr.rel (%p275) target = $region32
        $region31: #{tpu_custom_call.1} parent=11 // pred_region
          _
        $region32: #{tpu_custom_call.1} parent=11 // pred_fallthru
          _
        // Predicated region
        $region33: #{tpu_custom_call.1} parent=11 // pred_check
          %p278 = pneg %p158
        $region34: #{tpu_custom_call.1} parent=11 // pred_check_branch
          %280 = sbr.rel (%p278) target = $region36
        $region35: #{tpu_custom_call.1} parent=11 // pred_region
          _
        $region36: #{tpu_custom_call.1} parent=11 // pred_fallthru
          _
        // Predicated region
        $region37: #{tpu_custom_call.1} parent=11 // pred_check
          %p281 = pneg %p179
        $region38: #{tpu_custom_call.1} parent=11 // pred_check_branch
          %283 = sbr.rel (%p281) target = $region40
        $region39: #{tpu_custom_call.1} parent=11 // pred_region
          _
        $region40: #{tpu_custom_call.1} parent=11 // pred_fallthru
          _
        // Predicated region
        $region41: #{tpu_custom_call.1} parent=11 // pred_check
          %p284 = pneg %p200
        $region42: #{tpu_custom_call.1} parent=11 // pred_check_branch
          %286 = sbr.rel (%p284) target = $region44
        $region43: #{tpu_custom_call.1} parent=11 // pred_region
          _
        $region44: #{tpu_custom_call.1} parent=11 // pred_fallthru
          _
      $region12: #{tpu_custom_call.1} parent=5 // pred_fallthru
        _
      %p287 = scmp.lt.s32.totalorder %s20, 4
      // Predicated region
      $region45: #{tpu_custom_call.1} parent=5 // pred_check
        %p288 = pneg %p287
      $region46: #{tpu_custom_call.1} parent=5 // pred_check_branch
        %290 = sbr.rel (%p288) target = $region48
      $region47: #{tpu_custom_call.1} parent=5 // pred_region
        _
      $region48: #{tpu_custom_call.1} parent=5 // pred_fallthru
        _
      %p291 = scmp.le.s32.totalorder 1, %s20
      %p292 = scmp.lt.s32.totalorder %s20, 5
      %p293 = pnand %p291, %p292
      %p294 = pneg %p293
      // Predicated region
      $region49: #{tpu_custom_call.1} parent=5 // pred_check
        _
      $region50: #{tpu_custom_call.1} parent=5 // pred_check_branch
        %296 = sbr.rel (%p293) target = $region52
      $region51: #{tpu_custom_call.1} parent=5 // pred_region
        %s297 = ssub.s32 %s20, 1
        // Predicated region
        $region53: #{tpu_custom_call.1} parent=51 // pred_check
          %p298 = pneg %p53
        $region54: #{tpu_custom_call.1} parent=51 // pred_check_branch
          %300 = sbr.rel (%p298) target = $region56
        $region55: #{tpu_custom_call.1} parent=51 // pred_region
          %301 = dma.done [#allocation6], 2048
        $region56: #{tpu_custom_call.1} parent=51 // pred_fallthru
          _
        // Predicated region
        $region57: #{tpu_custom_call.1} parent=51 // pred_check
          %p302 = pneg %p116
        $region58: #{tpu_custom_call.1} parent=51 // pred_check_branch
          %304 = sbr.rel (%p302) target = $region60
        $region59: #{tpu_custom_call.1} parent=51 // pred_region
          %305 = dma.done [#allocation9], 9216
        $region60: #{tpu_custom_call.1} parent=51 // pred_fallthru
          _
        %p306 = pneg %p53
        %p307 = pneg %p50
        %p308 = pneg %p74
        %p309 = pneg %p71
        %p310 = pneg %p95
        %p311 = pneg %p92
        %p312 = pneg %p116
        %p313 = pneg %p113
        %p314 = pneg %p137
        %p315 = pneg %p134
        %p316 = pneg %p158
        %p317 = pneg %p155
        %p318 = pneg %p179
        %p319 = pneg %p176
        %p320 = pneg %p200
        %p321 = pneg %p197
        %p322 = pneg %p228
        %p323 = pneg %p225
        %s324 = sand.u32 %s215, 1
        %s325 = scalar_lea.sflag [#allocation7], %s324
        %s326 = sand.u32 %s215, 1
        %s327 = smul.addr %s326, 64
        %s328 = scalar_lea.vmem [#allocation10], %s327
        %s329 = smul.u32 8, %s30
        %s331 = smul.u32 %s30, 8
        %s332 = smul.u32 %s331, 2
        %s333 = smul.u32 %s29, 36
        %s334 = sadd.s32 %s332, %s333
        %s335 = smul.addr %s334, 64
        %s336 = scalar_lea.hbm %s0, %s335
        // Predicated region
        $region61: #{tpu_custom_call.1} parent=51 // pred_check
          _
        $region62: #{tpu_custom_call.1} parent=51 // pred_check_branch
          %338 = sbr.rel target = $region64
        $region63: #{tpu_custom_call.1} parent=51 // pred_region
          %339 = sst [smem:[#allocation13]] [#allocation12]
          %340 = sst [smem:[#allocation14]] [#allocation11]
        $region64: #{tpu_custom_call.1} parent=51 // pred_fallthru
          _
        %342 = shalt.err (0)
        %s344 = sshll.u32 [#allocation2], 4
        %s345 = int_to_ptr.vmem [resolvable:$true] %s344
        %347 = dma.hbm_to_vmem [thread:$0]  %s336, 1280, %s345, [#allocation4]
        %s348 = smul.u32 4, 10
        %s349 = smul.u32 %s348, 2
        %s350 = smul.u32 %s349, 1
        %s351 = sshll.u32 %s350, 4
        %352 = dma.done [#allocation4], %s351
        %v353 = vld [vmem:[#allocation2] sm:$0xf]
        %v354 = vld [vmem:[#allocation2 + $0x4] sm:$0xf]
        %v355 = vld [vmem:[#allocation2 + $0x8] sm:$0xf]
        %v356 = vld [vmem:[#allocation2 + $0xc] sm:$0xf]
        %v357 = vld [vmem:[#allocation2 + $0x10] sm:$0xf]
        %v358 = vld [vmem:[#allocation2 + $0x14] sm:$0xf]
        %v359 = vld [vmem:[#allocation2 + $0x18] sm:$0xf]
        %v360 = vld [vmem:[#allocation2 + $0x1c] sm:$0xf]
        %v361 = vld [vmem:[#allocation2 + $0x20] sm:$0xf]
        %v362 = vld [vmem:[#allocation2 + $0x24] sm:$0xf]
        %v363 = vld [vmem:[#allocation2 + $0x28] sm:$0xf]
        %v364 = vld [vmem:[#allocation2 + $0x2c] sm:$0xf]
        %v365 = vld [vmem:[#allocation2 + $0x30] sm:$0xf]
        %v366 = vld [vmem:[#allocation2 + $0x34] sm:$0xf]
        %v367 = vld [vmem:[#allocation2 + $0x38] sm:$0xf]
        %v368 = vld [vmem:[#allocation2 + $0x3c] sm:$0xf]
        %v369 = vld [vmem:[#allocation2 + $0x40] sm:$0xf]
        %v370 = vld [vmem:[#allocation2 + $0x44] sm:$0xf]
        %v371 = vld [vmem:[#allocation2 + $0x48] sm:$0xf]
        %v372 = vld [vmem:[#allocation2 + $0x4c] sm:$0xf]
        %v373 = vld [vmem:[#allocation5] sm:$0xff]
        %v374 = vld [vmem:[#allocation5 + $0x8] sm:$0xff]
        %v375 = vld [vmem:[#allocation5 + $0x10] sm:$0xff]
        %v376 = vld [vmem:[#allocation5 + $0x18] sm:$0xff]
        %v377 = vld [vmem:[#allocation5 + $0x20] sm:$0xff]
        %v378 = vld [vmem:[#allocation5 + $0x28] sm:$0xff]
        %v379 = vld [vmem:[#allocation5 + $0x30] sm:$0xff]
        %v380 = vld [vmem:[#allocation5 + $0x38] sm:$0xff]
        %v381 = vld [vmem:[#allocation5 + $0x40] sm:$0xff]
        %v382 = vld [vmem:[#allocation5 + $0x48] sm:$0xff]
        %v383 = vld [vmem:[#allocation5 + $0x50] sm:$0xff]
        %v384 = vld [vmem:[#allocation5 + $0x58] sm:$0xff]
        %v385 = vld [vmem:[#allocation5 + $0x60] sm:$0xff]
        %v386 = vld [vmem:[#allocation5 + $0x68] sm:$0xff]
        %v387 = vld [vmem:[#allocation5 + $0x70] sm:$0xff]
        %v388 = vld [vmem:[#allocation5 + $0x78] sm:$0xff]
        %v409 = vunpack.c.l.b16 %v353
        %v410 = vunpack.c.l.b16 %v354
        %v411 = vunpack.c.l.b16 %v355
        %v412 = vunpack.c.l.b16 %v356
        %v413 = vunpack.c.l.b16 %v357
        %v414 = vunpack.c.l.b16 %v358
        %v415 = vunpack.c.l.b16 %v359
        %v416 = vunpack.c.l.b16 %v360
        %v417 = vunpack.c.l.b16 %v361
        %v418 = vunpack.c.l.b16 %v362
        %v419 = vunpack.c.l.b16 %v363
        %v420 = vunpack.c.l.b16 %v364
        %v421 = vunpack.c.l.b16 %v365
        %v422 = vunpack.c.l.b16 %v366
        %v423 = vunpack.c.l.b16 %v367
        %v424 = vunpack.c.l.b16 %v368
        %v425 = vunpack.c.l.b16 %v369
        %v426 = vunpack.c.l.b16 %v370
        %v427 = vunpack.c.l.b16 %v371
        %v428 = vunpack.c.l.b16 %v372
        %v429 = vpack.c.b16 %v410, %v409
        %v430 = vpack.c.b16 %v412, %v411
        %v431 = vpack.c.b16 %v414, %v413
        %v432 = vpack.c.b16 %v416, %v415
        %v433 = vpack.c.b16 %v418, %v417
        %v434 = vpack.c.b16 %v420, %v419
        %v435 = vpack.c.b16 %v422, %v421
        %v436 = vpack.c.b16 %v424, %v423
        %v437 = vpack.c.b16 %v426, %v425
        %v438 = vpack.c.b16 %v428, %v427
        %v465 = vunpack.c.l.b16 %v373
        %v466 = vunpack.c.h.b16 %v373
        %v467 = vunpack.c.l.b16 %v374
        %v468 = vunpack.c.h.b16 %v374
        %v469 = vunpack.c.l.b16 %v375
        %v470 = vunpack.c.h.b16 %v375
        %v471 = vunpack.c.l.b16 %v376
        %v472 = vunpack.c.h.b16 %v376
        %v473 = vunpack.c.l.b16 %v377
        %v474 = vunpack.c.h.b16 %v377
        %v475 = vunpack.c.l.b16 %v378
        %v476 = vunpack.c.h.b16 %v378
        %v477 = vunpack.c.l.b16 %v379
        %v478 = vunpack.c.h.b16 %v379
        %v479 = vunpack.c.l.b16 %v380
        %v480 = vunpack.c.h.b16 %v380
        %v481 = vunpack.c.l.b16 %v381
        %v482 = vunpack.c.h.b16 %v381
        %v483 = vunpack.c.l.b16 %v382
        %v484 = vunpack.c.h.b16 %v382
        %v485 = vunpack.c.l.b16 %v383
        %v486 = vunpack.c.h.b16 %v383
        %v487 = vunpack.c.l.b16 %v384
        %v488 = vunpack.c.h.b16 %v384
        %v489 = vunpack.c.l.b16 %v385
        %v490 = vunpack.c.h.b16 %v385
        %v491 = vunpack.c.l.b16 %v386
        %v492 = vunpack.c.h.b16 %v386
        %v493 = vunpack.c.l.b16 %v387
        %v494 = vunpack.c.h.b16 %v387
        %v495 = vunpack.c.l.b16 %v388
        %v496 = vunpack.c.h.b16 %v388
        %v497 = vpack.c.b16 %v467, %v465
        %v498 = vpack.c.b16 %v468, %v466
        %v499 = vpack.c.b16 %v471, %v469
        %v500 = vpack.c.b16 %v472, %v470
        %v501 = vpack.c.b16 %v475, %v473
        %v502 = vpack.c.b16 %v476, %v474
        %v503 = vpack.c.b16 %v479, %v477
        %v504 = vpack.c.b16 %v480, %v478
        %v505 = vpack.c.b16 %v483, %v481
        %v506 = vpack.c.b16 %v484, %v482
        %v507 = vpack.c.b16 %v487, %v485
        %v508 = vpack.c.b16 %v488, %v486
        %v509 = vpack.c.b16 %v491, %v489
        %v510 = vpack.c.b16 %v492, %v490
        %v511 = vpack.c.b16 %v495, %v493
        %v512 = vpack.c.b16 %v496, %v494
        %529 = vmatprep.subr.bf16.mxu0 %v512
        %530 = vmatpush1.bf16.msra.mxu0 %v511
        %531 = vmatprep.subr.bf16.mxu0 %v510
        %532 = vmatpush1.bf16.msra.mxu0 %v509
        %533 = vmatprep.subr.bf16.mxu0 %v508
        %534 = vmatpush1.bf16.msra.mxu0 %v507
        %535 = vmatprep.subr.bf16.mxu0 %v506
        %536 = vmatpush1.bf16.msra.mxu0 %v505
        %537 = vmatprep.subr.bf16.mxu0 %v504
        %538 = vmatpush1.bf16.msra.mxu0 %v503
        %539 = vmatprep.subr.bf16.mxu0 %v502
        %540 = vmatpush1.bf16.msra.mxu0 %v501
        %541 = vmatprep.subr.bf16.mxu0 %v500
        %542 = vmatpush1.bf16.msra.mxu0 %v499
        %543 = vmatprep.subr.bf16.mxu0 %v498
        %544 = vmatpush1.bf16.msra.mxu0 %v497
        %545 = vmatprep.subr.bf16.mxu0 0
        %546 = vmatpush2.bf16.msra.mxu0 0
        %547 = vmatprep.subr.bf16.mxu0 0
        %548 = vmatpush2.bf16.msra.mxu0 0
        %549 = vmatprep.subr.bf16.mxu0 0
        %550 = vmatpush2.bf16.msra.mxu0 0
        %551 = vmatprep.subr.bf16.mxu0 0
        %552 = vmatpush2.bf16.msra.mxu0 0
        %553 = vmatprep.subr.bf16.mxu0 0
        %554 = vmatpush2.bf16.msra.mxu0 0
        %555 = vmatprep.subr.bf16.mxu0 0
        %556 = vmatpush2.bf16.msra.mxu0 0
        %557 = vmatprep.subr.bf16.mxu0 0
        %558 = vmatpush2.bf16.msra.mxu0 0
        %559 = vmatprep.subr.bf16.mxu0 0
        %560 = vmatpush2.bf16.msra.mxu0 0
        %561 = vmatprep.mubr.bf16.mxu0 0
        %562 = vmatmul.mubr.bf16.gmra.mxu0 %v429
        %v563 = vpop.f32.mrf.mxu0
        %v564 = vadd.f32 0.0, %v563
        %v565 = vpop.f32.mrf.mxu0
        %v566 = vpop.f32.mrf.mxu0
        %v567 = vadd.f32 0.0, %v566
        %v568 = vpop.f32.mrf.mxu0
        %569 = vmatprep.mubr.bf16.mxu0 0
        %570 = vmatmul.mubr.bf16.gmra.mxu0 %v430
        %v571 = vpop.f32.mrf.mxu0
        %v572 = vadd.f32 0.0, %v571
        %v573 = vpop.f32.mrf.mxu0
        %v574 = vadd.f32 0.0, %v573
        %v575 = vpop.f32.mrf.mxu0
        %v576 = vadd.f32 0.0, %v575
        %v577 = vpop.f32.mrf.mxu0
        %v578 = vadd.f32 0.0, %v577
        %579 = vmatprep.mubr.bf16.mxu0 0
        %580 = vmatmul.mubr.bf16.gmra.mxu0 %v431
        %v581 = vpop.f32.mrf.mxu0
        %v582 = vadd.f32 0.0, %v581
        %v583 = vpop.f32.mrf.mxu0
        %v584 = vadd.f32 0.0, %v583
        %v585 = vpop.f32.mrf.mxu0
        %v586 = vadd.f32 0.0, %v585
        %v587 = vpop.f32.mrf.mxu0
        %v588 = vadd.f32 0.0, %v587
        %589 = vmatprep.mubr.bf16.mxu0 0
        %590 = vmatmul.mubr.bf16.gmra.mxu0 %v432
        %v591 = vpop.f32.mrf.mxu0
        %v592 = vadd.f32 0.0, %v591
        %v593 = vpop.f32.mrf.mxu0
        %v594 = vadd.f32 0.0, %v593
        %v595 = vpop.f32.mrf.mxu0
        %v596 = vadd.f32 0.0, %v595
        %v597 = vpop.f32.mrf.mxu0
        %v598 = vadd.f32 0.0, %v597
        %599 = vmatprep.mubr.bf16.mxu0 0
        %600 = vmatmul.mubr.bf16.gmra.mxu0 %v433
        %v601 = vpop.f32.mrf.mxu0
        %v602 = vadd.f32 0.0, %v601
        %v603 = vpop.f32.mrf.mxu0
        %v604 = vadd.f32 0.0, %v603
        %v605 = vpop.f32.mrf.mxu0
        %v606 = vadd.f32 0.0, %v605
        %v607 = vpop.f32.mrf.mxu0
        %v608 = vadd.f32 0.0, %v607
        %609 = vmatprep.mubr.bf16.mxu0 0
        %610 = vmatmul.mubr.bf16.gmra.mxu0 %v434
        %v611 = vpop.f32.mrf.mxu0
        %v612 = vadd.f32 0.0, %v611
        %v613 = vpop.f32.mrf.mxu0
        %v614 = vadd.f32 0.0, %v613
        %v615 = vpop.f32.mrf.mxu0
        %v616 = vadd.f32 0.0, %v615
        %v617 = vpop.f32.mrf.mxu0
        %v618 = vadd.f32 0.0, %v617
        %619 = vmatprep.mubr.bf16.mxu0 0
        %620 = vmatmul.mubr.bf16.gmra.mxu0 %v435
        %v621 = vpop.f32.mrf.mxu0
        %v622 = vadd.f32 0.0, %v621
        %v623 = vpop.f32.mrf.mxu0
        %v624 = vadd.f32 0.0, %v623
        %v625 = vpop.f32.mrf.mxu0
        %v626 = vadd.f32 0.0, %v625
        %v627 = vpop.f32.mrf.mxu0
        %v628 = vadd.f32 0.0, %v627
        %629 = vmatprep.mubr.bf16.mxu0 0
        %630 = vmatmul.mubr.bf16.gmra.mxu0 %v436
        %v631 = vpop.f32.mrf.mxu0
        %v632 = vadd.f32 0.0, %v631
        %v633 = vpop.f32.mrf.mxu0
        %v634 = vadd.f32 0.0, %v633
        %v635 = vpop.f32.mrf.mxu0
        %v636 = vadd.f32 0.0, %v635
        %v637 = vpop.f32.mrf.mxu0
        %v638 = vadd.f32 0.0, %v637
        %639 = vmatprep.mubr.bf16.mxu0 0
        %640 = vmatmul.mubr.bf16.gmra.mxu0 %v437
        %v641 = vpop.f32.mrf.mxu0
        %v642 = vadd.f32 0.0, %v641
        %v643 = vpop.f32.mrf.mxu0
        %v644 = vadd.f32 0.0, %v643
        %v645 = vpop.f32.mrf.mxu0
        %v646 = vadd.f32 0.0, %v645
        %v647 = vpop.f32.mrf.mxu0
        %v648 = vadd.f32 0.0, %v647
        %649 = vmatprep.mubr.bf16.mxu0 0
        %650 = vmatmul.mubr.bf16.gmra.mxu0 %v438
        %v651 = vpop.f32.mrf.mxu0
        %v652 = vadd.f32 0.0, %v651
        %v653 = vpop.f32.mrf.mxu0
        %v654 = vpop.f32.mrf.mxu0
        %v655 = vadd.f32 0.0, %v654
        %v656 = vpop.f32.mrf.mxu0
        %657 = vdwg.mxu0
        %v658 = vld [vmem:[%s2] sm:$0x1]
        %v660 = vlaneseq
        %v661 = vshrl.u32 %v660, 7
        %v662 = vsub.s32 0, %v661
        %v663 = vrot.slane %v658, %v662
        %v665 = vmul.f32 %v564, %v663
        %v666 = vmul.f32 %v567, %v663
        %v667 = vmul.f32 %v572, %v663
        %v668 = vmul.f32 %v576, %v663
        %v669 = vmul.f32 %v582, %v663
        %v670 = vmul.f32 %v586, %v663
        %v671 = vmul.f32 %v592, %v663
        %v672 = vmul.f32 %v596, %v663
        %v673 = vmul.f32 %v602, %v663
        %v674 = vmul.f32 %v606, %v663
        %v675 = vmul.f32 %v612, %v663
        %v676 = vmul.f32 %v616, %v663
        %v677 = vmul.f32 %v622, %v663
        %v678 = vmul.f32 %v626, %v663
        %v679 = vmul.f32 %v632, %v663
        %v680 = vmul.f32 %v636, %v663
        %v681 = vmul.f32 %v642, %v663
        %v682 = vmul.f32 %v646, %v663
        %v683 = vmul.f32 %v652, %v663
        %v684 = vmul.f32 %v655, %v663
        %v685 = vld [vmem:[%s3] sm:$0x1]
        %v687 = vlaneseq
        %v688 = vshrl.u32 %v687, 7
        %v689 = vsub.s32 0, %v688
        %v690 = vrot.slane %v685, %v689
        %v692 = vadd.f32 %v665, %v690
        %v693 = vadd.f32 %v666, %v690
        %v694 = vadd.f32 %v667, %v690
        %v695 = vadd.f32 %v668, %v690
        %v696 = vadd.f32 %v669, %v690
        %v697 = vadd.f32 %v670, %v690
        %v698 = vadd.f32 %v671, %v690
        %v699 = vadd.f32 %v672, %v690
        %v700 = vadd.f32 %v673, %v690
        %v701 = vadd.f32 %v674, %v690
        %v702 = vadd.f32 %v675, %v690
        %v703 = vadd.f32 %v676, %v690
        %v704 = vadd.f32 %v677, %v690
        %v705 = vadd.f32 %v678, %v690
        %v706 = vadd.f32 %v679, %v690
        %v707 = vadd.f32 %v680, %v690
        %v708 = vadd.f32 %v681, %v690
        %v709 = vadd.f32 %v682, %v690
        %v710 = vadd.f32 %v683, %v690
        %v711 = vadd.f32 %v684, %v690
        %v712 = vmax.f32 %v692, 0.0
        %v713 = vmax.f32 %v693, 0.0
        %v714 = vmax.f32 %v694, 0.0
        %v715 = vmax.f32 %v695, 0.0
        %v716 = vmax.f32 %v696, 0.0
        %v717 = vmax.f32 %v697, 0.0
        %v718 = vmax.f32 %v698, 0.0
        %v719 = vmax.f32 %v699, 0.0
        %v720 = vmax.f32 %v700, 0.0
        %v721 = vmax.f32 %v701, 0.0
        %v722 = vmax.f32 %v702, 0.0
        %v723 = vmax.f32 %v703, 0.0
        %v724 = vmax.f32 %v704, 0.0
        %v725 = vmax.f32 %v705, 0.0
        %v726 = vmax.f32 %v706, 0.0
        %v727 = vmax.f32 %v707, 0.0
        %v728 = vmax.f32 %v708, 0.0
        %v729 = vmax.f32 %v709, 0.0
        %v730 = vmax.f32 %v710, 0.0
        %v731 = vmax.f32 %v711, 0.0
        %732 = vst [vmem:[#allocation3] sm:$0xf] 0
        %733 = vst [vmem:[#allocation3 + $0x10] sm:$0xf] 0
        %734 = vst [vmem:[#allocation3 + $0x20] sm:$0xf] 0
        %735 = vst [vmem:[#allocation3 + $0x30] sm:$0xf] 0
        %736 = vst [vmem:[#allocation3 + $0x40] sm:$0xf] 0
        %737 = vst [vmem:[#allocation3 + $0x50] sm:$0xf] 0
        %738 = vst [vmem:[#allocation3 + $0x60] sm:$0xf] 0
        %739 = vst [vmem:[#allocation3 + $0x70] sm:$0xf] 0
        %740 = vst [vmem:[#allocation3 + $0x80] sm:$0xf] 0
        %741 = vst [vmem:[#allocation3 + $0x90] sm:$0xf] 0
        %742 = vst [vmem:[#allocation3 + $0xc] sm:$0xf] 0
        %743 = vst [vmem:[#allocation3 + $0x1c] sm:$0xf] 0
        %744 = vst [vmem:[#allocation3 + $0x2c] sm:$0xf] 0
        %745 = vst [vmem:[#allocation3 + $0x3c] sm:$0xf] 0
        %746 = vst [vmem:[#allocation3 + $0x4c] sm:$0xf] 0
        %747 = vst [vmem:[#allocation3 + $0x5c] sm:$0xf] 0
        %748 = vst [vmem:[#allocation3 + $0x6c] sm:$0xf] 0
        %749 = vst [vmem:[#allocation3 + $0x7c] sm:$0xf] 0
        %750 = vst [vmem:[#allocation3 + $0x8c] sm:$0xf] 0
        %751 = vst [vmem:[#allocation3 + $0x9c] sm:$0xf] 0
        %v752 = vpack.c.bf16 %v713, %v712
        %v753 = vpack.c.bf16 %v715, %v714
        %v754 = vpack.c.bf16 %v717, %v716
        %v755 = vpack.c.bf16 %v719, %v718
        %v756 = vpack.c.bf16 %v721, %v720
        %v757 = vpack.c.bf16 %v723, %v722
        %v758 = vpack.c.bf16 %v725, %v724
        %v759 = vpack.c.bf16 %v727, %v726
        %v760 = vpack.c.bf16 %v729, %v728
        %v761 = vpack.c.bf16 %v731, %v730
        %v772 = vunpack.c.l.b16 %v752
        %v773 = vunpack.c.h.b16 %v752
        %v774 = vunpack.c.l.b16 %v753
        %v775 = vunpack.c.h.b16 %v753
        %v776 = vunpack.c.l.b16 %v754
        %v777 = vunpack.c.h.b16 %v754
        %v778 = vunpack.c.l.b16 %v755
        %v779 = vunpack.c.h.b16 %v755
        %v780 = vunpack.c.l.b16 %v756
        %v781 = vunpack.c.h.b16 %v756
        %v782 = vunpack.c.l.b16 %v757
        %v783 = vunpack.c.h.b16 %v757
        %v784 = vunpack.c.l.b16 %v758
        %v785 = vunpack.c.h.b16 %v758
        %v786 = vunpack.c.l.b16 %v759
        %v787 = vunpack.c.h.b16 %v759
        %v788 = vunpack.c.l.b16 %v760
        %v789 = vunpack.c.h.b16 %v760
        %v790 = vunpack.c.l.b16 %v761
        %v791 = vunpack.c.h.b16 %v761
        %v792 = vpack.c.b16 %v772, %v772
        %v793 = vpack.c.b16 %v773, %v773
        %v794 = vpack.c.b16 %v774, %v774
        %v795 = vpack.c.b16 %v775, %v775
        %v796 = vpack.c.b16 %v776, %v776
        %v797 = vpack.c.b16 %v777, %v777
        %v798 = vpack.c.b16 %v778, %v778
        %v799 = vpack.c.b16 %v779, %v779
        %v800 = vpack.c.b16 %v780, %v780
        %v801 = vpack.c.b16 %v781, %v781
        %v802 = vpack.c.b16 %v782, %v782
        %v803 = vpack.c.b16 %v783, %v783
        %v804 = vpack.c.b16 %v784, %v784
        %v805 = vpack.c.b16 %v785, %v785
        %v806 = vpack.c.b16 %v786, %v786
        %v807 = vpack.c.b16 %v787, %v787
        %v808 = vpack.c.b16 %v788, %v788
        %v809 = vpack.c.b16 %v789, %v789
        %v810 = vpack.c.b16 %v790, %v790
        %v811 = vpack.c.b16 %v791, %v791
        %832 = vst [vmem:[#allocation3 + $0x4] sm:$0xf] %v792
        %833 = vst [vmem:[#allocation3 + $0x8] sm:$0xf] %v793
        %834 = vst [vmem:[#allocation3 + $0x14] sm:$0xf] %v794
        %835 = vst [vmem:[#allocation3 + $0x18] sm:$0xf] %v795
        %836 = vst [vmem:[#allocation3 + $0x24] sm:$0xf] %v796
        %837 = vst [vmem:[#allocation3 + $0x28] sm:$0xf] %v797
        %838 = vst [vmem:[#allocation3 + $0x34] sm:$0xf] %v798
        %839 = vst [vmem:[#allocation3 + $0x38] sm:$0xf] %v799
        %840 = vst [vmem:[#allocation3 + $0x44] sm:$0xf] %v800
        %841 = vst [vmem:[#allocation3 + $0x48] sm:$0xf] %v801
        %842 = vst [vmem:[#allocation3 + $0x54] sm:$0xf] %v802
        %843 = vst [vmem:[#allocation3 + $0x58] sm:$0xf] %v803
        %844 = vst [vmem:[#allocation3 + $0x64] sm:$0xf] %v804
        %845 = vst [vmem:[#allocation3 + $0x68] sm:$0xf] %v805
        %846 = vst [vmem:[#allocation3 + $0x74] sm:$0xf] %v806
        %847 = vst [vmem:[#allocation3 + $0x78] sm:$0xf] %v807
        %848 = vst [vmem:[#allocation3 + $0x84] sm:$0xf] %v808
        %849 = vst [vmem:[#allocation3 + $0x88] sm:$0xf] %v809
        %850 = vst [vmem:[#allocation3 + $0x94] sm:$0xf] %v810
        %851 = vst [vmem:[#allocation3 + $0x98] sm:$0xf] %v811
        %p852 = scmp.eq.s32.totalorder %s30, 0
        // Predicated region
        $region65: #{tpu_custom_call.1} parent=51 // pred_check
          %p853 = pneg %p852
        $region66: #{tpu_custom_call.1} parent=51 // pred_check_branch
          %855 = sbr.rel (%p853) target = $region68
        $region67: #{tpu_custom_call.1} parent=51 // pred_region
          %856 = vst [vmem:[#allocation3] sm:$0xf] 0
          %857 = vst [vmem:[#allocation3 + $0x4] sm:$0xf] 0
          %858 = vst [vmem:[#allocation3 + $0x8] sm:$0xf] 0
          %859 = vst [vmem:[#allocation3 + $0xc] sm:$0xf] 0
        $region68: #{tpu_custom_call.1} parent=51 // pred_fallthru
          _
        %p860 = scmp.eq.s32.totalorder %s30, 1
        // Predicated region
        $region69: #{tpu_custom_call.1} parent=51 // pred_check
          %p861 = pneg %p860
        $region70: #{tpu_custom_call.1} parent=51 // pred_check_branch
          %863 = sbr.rel (%p861) target = $region72
        $region71: #{tpu_custom_call.1} parent=51 // pred_region
          %s864 = scalar_lea.vmem [#allocation3], 144
          %865 = vst [vmem:[%s864] sm:$0xf] 0
          %866 = vst [vmem:[%s864 + $0x4] sm:$0xf] 0
          %867 = vst [vmem:[%s864 + $0x8] sm:$0xf] 0
          %868 = vst [vmem:[%s864 + $0xc] sm:$0xf] 0
        $region72: #{tpu_custom_call.1} parent=51 // pred_fallthru
          _
        %v869 = vld [vmem:[#allocation3] sm:$0x8]
        %v870 = vld [vmem:[#allocation3 + $0x4] sm:$0xf]
        %v871 = vld [vmem:[#allocation3 + $0x8] sm:$0xf]
        %v872 = vld [vmem:[#allocation3 + $0x10] sm:$0x8]
        %v873 = vld [vmem:[#allocation3 + $0x14] sm:$0xf]
        %v874 = vld [vmem:[#allocation3 + $0x18] sm:$0xf]
        %v875 = vld [vmem:[#allocation3 + $0x20] sm:$0x8]
        %v876 = vld [vmem:[#allocation3 + $0x24] sm:$0xf]
        %v877 = vld [vmem:[#allocation3 + $0x28] sm:$0xf]
        %v878 = vld [vmem:[#allocation3 + $0x30] sm:$0x8]
        %v879 = vld [vmem:[#allocation3 + $0x34] sm:$0xf]
        %v880 = vld [vmem:[#allocation3 + $0x38] sm:$0xf]
        %v881 = vld [vmem:[#allocation3 + $0x40] sm:$0x8]
        %v882 = vld [vmem:[#allocation3 + $0x44] sm:$0xf]
        %v883 = vld [vmem:[#allocation3 + $0x48] sm:$0xf]
        %v884 = vld [vmem:[#allocation3 + $0x50] sm:$0x8]
        %v885 = vld [vmem:[#allocation3 + $0x54] sm:$0xf]
        %v886 = vld [vmem:[#allocation3 + $0x58] sm:$0xf]
        %v887 = vld [vmem:[#allocation3 + $0x60] sm:$0x8]
        %v888 = vld [vmem:[#allocation3 + $0x64] sm:$0xf]
        %v889 = vld [vmem:[#allocation3 + $0x68] sm:$0xf]
        %v890 = vld [vmem:[#allocation3 + $0x70] sm:$0x8]
        %v891 = vld [vmem:[#allocation3 + $0x74] sm:$0xf]
        %v892 = vld [vmem:[#allocation3 + $0x78] sm:$0xf]
        %v893 = vld [vmem:[#allocation8] sm:$0xf]
        %v894 = vld [vmem:[#allocation8 + $0x4] sm:$0xf]
        %v895 = vld [vmem:[#allocation8 + $0x8] sm:$0xf]
        %v896 = vld [vmem:[#allocation8 + $0xc] sm:$0xf]
        %v897 = vld [vmem:[#allocation8 + $0x10] sm:$0xf]
        %v898 = vld [vmem:[#allocation8 + $0x14] sm:$0xf]
        %v899 = vld [vmem:[#allocation8 + $0x18] sm:$0xf]
        %v900 = vld [vmem:[#allocation8 + $0x1c] sm:$0xf]
        %v901 = vld [vmem:[#allocation8 + $0x20] sm:$0xf]
        %v902 = vld [vmem:[#allocation8 + $0x24] sm:$0xf]
        %v903 = vld [vmem:[#allocation8 + $0x28] sm:$0xf]
        %v904 = vld [vmem:[#allocation8 + $0x2c] sm:$0xf]
        %v905 = vld [vmem:[#allocation8 + $0x30] sm:$0xf]
        %v906 = vld [vmem:[#allocation8 + $0x34] sm:$0xf]
        %v907 = vld [vmem:[#allocation8 + $0x38] sm:$0xf]
        %v908 = vld [vmem:[#allocation8 + $0x3c] sm:$0xf]
        %s909 = scalar_lea.vmem [#allocation8], 64
        %v910 = vld [vmem:[%s909] sm:$0xf]
        %v911 = vld [vmem:[%s909 + $0x4] sm:$0xf]
        %v912 = vld [vmem:[%s909 + $0x8] sm:$0xf]
        %v913 = vld [vmem:[%s909 + $0xc] sm:$0xf]
        %v914 = vld [vmem:[%s909 + $0x10] sm:$0xf]
        %v915 = vld [vmem:[%s909 + $0x14] sm:$0xf]
        %v916 = vld [vmem:[%s909 + $0x18] sm:$0xf]
        %v917 = vld [vmem:[%s909 + $0x1c] sm:$0xf]
        %v918 = vld [vmem:[%s909 + $0x20] sm:$0xf]
        %v919 = vld [vmem:[%s909 + $0x24] sm:$0xf]
        %v920 = vld [vmem:[%s909 + $0x28] sm:$0xf]
        %v921 = vld [vmem:[%s909 + $0x2c] sm:$0xf]
        %v922 = vld [vmem:[%s909 + $0x30] sm:$0xf]
        %v923 = vld [vmem:[%s909 + $0x34] sm:$0xf]
        %v924 = vld [vmem:[%s909 + $0x38] sm:$0xf]
        %v925 = vld [vmem:[%s909 + $0x3c] sm:$0xf]
        %v942 = vunpack.c.l.b16 %v870
        %v943 = vunpack.c.l.b16 %v871
        %v944 = vunpack.c.l.b16 %v873
        %v945 = vunpack.c.l.b16 %v874
        %v946 = vunpack.c.l.b16 %v876
        %v947 = vunpack.c.l.b16 %v877
        %v948 = vunpack.c.l.b16 %v879
        %v949 = vunpack.c.l.b16 %v880
        %v950 = vunpack.c.l.b16 %v882
        %v951 = vunpack.c.l.b16 %v883
        %v952 = vunpack.c.l.b16 %v885
        %v953 = vunpack.c.l.b16 %v886
        %v954 = vunpack.c.l.b16 %v888
        %v955 = vunpack.c.l.b16 %v889
        %v956 = vunpack.c.l.b16 %v891
        %v957 = vunpack.c.l.b16 %v892
        %v958 = vpack.c.b16 %v943, %v942
        %v959 = vpack.c.b16 %v945, %v944
        %v960 = vpack.c.b16 %v947, %v946
        %v961 = vpack.c.b16 %v949, %v948
        %v962 = vpack.c.b16 %v951, %v950
        %v963 = vpack.c.b16 %v953, %v952
        %v964 = vpack.c.b16 %v955, %v954
        %v965 = vpack.c.b16 %v957, %v956
        %v990 = vunpack.c.l.b16 %v910
        %v991 = vunpack.c.l.b16 %v911
        %v992 = vunpack.c.l.b16 %v912
        %v993 = vunpack.c.l.b16 %v913
        %v994 = vunpack.c.l.b16 %v914
        %v995 = vunpack.c.l.b16 %v915
        %v996 = vunpack.c.l.b16 %v916
        %v997 = vunpack.c.l.b16 %v917
        %v998 = vunpack.c.l.b16 %v918
        %v999 = vunpack.c.l.b16 %v919
        %v1000 = vunpack.c.l.b16 %v920
        %v1001 = vunpack.c.l.b16 %v921
        %v1002 = vunpack.c.l.b16 %v922
        %v1003 = vunpack.c.l.b16 %v923
        %v1004 = vunpack.c.l.b16 %v924
        %v1005 = vunpack.c.l.b16 %v925
        %v1006 = vpack.c.b16 %v991, %v990
        %v1007 = vpack.c.b16 %v993, %v992
        %v1008 = vpack.c.b16 %v995, %v994
        %v1009 = vpack.c.b16 %v997, %v996
        %v1010 = vpack.c.b16 %v999, %v998
        %v1011 = vpack.c.b16 %v1001, %v1000
        %v1012 = vpack.c.b16 %v1003, %v1002
        %v1013 = vpack.c.b16 %v1005, %v1004
        %1022 = vmatprep.subr.bf16.mxu0 0
        %1023 = vmatpush1.bf16.msra.mxu0 %v1013
        %1024 = vmatprep.subr.bf16.mxu0 0
        %1025 = vmatpush1.bf16.msra.mxu0 %v1012
        %1026 = vmatprep.subr.bf16.mxu0 0
        %1027 = vmatpush1.bf16.msra.mxu0 %v1011
        %1028 = vmatprep.subr.bf16.mxu0 0
        %1029 = vmatpush1.bf16.msra.mxu0 %v1010
        %1030 = vmatprep.subr.bf16.mxu0 0
        %1031 = vmatpush1.bf16.msra.mxu0 %v1009
        %1032 = vmatprep.subr.bf16.mxu0 0
        %1033 = vmatpush1.bf16.msra.mxu0 %v1008
        %1034 = vmatprep.subr.bf16.mxu0 0
        %1035 = vmatpush1.bf16.msra.mxu0 %v1007
        %1036 = vmatprep.subr.bf16.mxu0 0
        %1037 = vmatpush1.bf16.msra.mxu0 %v1006
        %1038 = vmatprep.subr.bf16.mxu0 0
        %1039 = vmatpush2.bf16.msra.mxu0 0
        %1040 = vmatprep.subr.bf16.mxu0 0
        %1041 = vmatpush2.bf16.msra.mxu0 0
        %1042 = vmatprep.subr.bf16.mxu0 0
        %1043 = vmatpush2.bf16.msra.mxu0 0
        %1044 = vmatprep.subr.bf16.mxu0 0
        %1045 = vmatpush2.bf16.msra.mxu0 0
        %1046 = vmatprep.subr.bf16.mxu0 0
        %1047 = vmatpush2.bf16.msra.mxu0 0
        %1048 = vmatprep.subr.bf16.mxu0 0
        %1049 = vmatpush2.bf16.msra.mxu0 0
        %1050 = vmatprep.subr.bf16.mxu0 0
        %1051 = vmatpush2.bf16.msra.mxu0 0
        %1052 = vmatprep.subr.bf16.mxu0 0
        %1053 = vmatpush2.bf16.msra.mxu0 0
        %1054 = vmatprep.mubr.bf16.mxu0 0
        %1055 = vmatmul.mubr.bf16.gmra.mxu0 %v958
        %v1056 = vpop.f32.mrf.mxu0
        %v1057 = vadd.f32 0.0, %v1056
        %v1058 = vpop.f32.mrf.mxu0
        %v1059 = vpop.f32.mrf.mxu0
        %v1060 = vadd.f32 0.0, %v1059
        %v1061 = vpop.f32.mrf.mxu0
        %1062 = vmatprep.mubr.bf16.mxu0 0
        %1063 = vmatmul.mubr.bf16.gmra.mxu0 %v959
        %v1064 = vpop.f32.mrf.mxu0
        %v1065 = vadd.f32 0.0, %v1064
        %v1066 = vpop.f32.mrf.mxu0
        %v1067 = vpop.f32.mrf.mxu0
        %v1068 = vadd.f32 0.0, %v1067
        %v1069 = vpop.f32.mrf.mxu0
        %1070 = vmatprep.mubr.bf16.mxu0 0
        %1071 = vmatmul.mubr.bf16.gmra.mxu0 %v960
        %v1072 = vpop.f32.mrf.mxu0
        %v1073 = vadd.f32 0.0, %v1072
        %v1074 = vpop.f32.mrf.mxu0
        %v1075 = vpop.f32.mrf.mxu0
        %v1076 = vadd.f32 0.0, %v1075
        %v1077 = vpop.f32.mrf.mxu0
        %1078 = vmatprep.mubr.bf16.mxu0 0
        %1079 = vmatmul.mubr.bf16.gmra.mxu0 %v961
        %v1080 = vpop.f32.mrf.mxu0
        %v1081 = vadd.f32 0.0, %v1080
        %v1082 = vpop.f32.mrf.mxu0
        %v1083 = vpop.f32.mrf.mxu0
        %v1084 = vadd.f32 0.0, %v1083
        %v1085 = vpop.f32.mrf.mxu0
        %1086 = vmatprep.mubr.bf16.mxu0 0
        %1087 = vmatmul.mubr.bf16.gmra.mxu0 %v962
        %v1088 = vpop.f32.mrf.mxu0
        %v1089 = vadd.f32 0.0, %v1088
        %v1090 = vpop.f32.mrf.mxu0
        %v1091 = vpop.f32.mrf.mxu0
        %v1092 = vadd.f32 0.0, %v1091
        %v1093 = vpop.f32.mrf.mxu0
        %1094 = vmatprep.mubr.bf16.mxu0 0
        %1095 = vmatmul.mubr.bf16.gmra.mxu0 %v963
        %v1096 = vpop.f32.mrf.mxu0
        %v1097 = vadd.f32 0.0, %v1096
        %v1098 = vpop.f32.mrf.mxu0
        %v1099 = vpop.f32.mrf.mxu0
        %v1100 = vadd.f32 0.0, %v1099
        %v1101 = vpop.f32.mrf.mxu0
        %1102 = vmatprep.mubr.bf16.mxu0 0
        %1103 = vmatmul.mubr.bf16.gmra.mxu0 %v964
        %v1104 = vpop.f32.mrf.mxu0
        %v1105 = vadd.f32 0.0, %v1104
        %v1106 = vpop.f32.mrf.mxu0
        %v1107 = vpop.f32.mrf.mxu0
        %v1108 = vadd.f32 0.0, %v1107
        %v1109 = vpop.f32.mrf.mxu0
        %1110 = vmatprep.mubr.bf16.mxu0 0
        %1111 = vmatmul.mubr.bf16.gmra.mxu0 %v965
        %v1112 = vpop.f32.mrf.mxu0
        %v1113 = vadd.f32 0.0, %v1112
        %v1114 = vpop.f32.mrf.mxu0
        %v1115 = vpop.f32.mrf.mxu0
        %v1116 = vadd.f32 0.0, %v1115
        %v1117 = vpop.f32.mrf.mxu0
        %1118 = vdwg.mxu0
        %vm1119 = vsmask.f32 256
        %vm1120 = vsmask.f32 4368
        %vm1121 = vmor %vm1119, %vm1120
        %v1123 = vshrl.u32 %v869, 16
        %v1125 = vrot.slane %v1123, 7
        %v1126 = vrot.slane %v1125, 4
        %v1128 = vshrl.u32 %v870, 16
        %v1130 = vrot.slane %v1128, 7
        %v1131 = vshll.u32 %v870, 16
        %v1133 = vor.u32 %v1130, %v1131
        %v1134 = vsel %vm1121, %v1126, %v1133
        %v1135 = vrot.slane %v1130, 4
        %v1137 = vshrl.u32 %v871, 16
        %v1139 = vrot.slane %v1137, 7
        %v1140 = vshll.u32 %v871, 16
        %v1142 = vor.u32 %v1139, %v1140
        %v1143 = vsel %vm1121, %v1135, %v1142
        %v1145 = vshrl.u32 %v872, 16
        %v1147 = vrot.slane %v1145, 7
        %v1148 = vrot.slane %v1147, 4
        %v1150 = vshrl.u32 %v873, 16
        %v1152 = vrot.slane %v1150, 7
        %v1153 = vshll.u32 %v873, 16
        %v1155 = vor.u32 %v1152, %v1153
        %v1156 = vsel %vm1121, %v1148, %v1155
        %v1157 = vrot.slane %v1152, 4
        %v1159 = vshrl.u32 %v874, 16
        %v1161 = vrot.slane %v1159, 7
        %v1162 = vshll.u32 %v874, 16
        %v1164 = vor.u32 %v1161, %v1162
        %v1165 = vsel %vm1121, %v1157, %v1164
        %v1167 = vshrl.u32 %v875, 16
        %v1169 = vrot.slane %v1167, 7
        %v1170 = vrot.slane %v1169, 4
        %v1172 = vshrl.u32 %v876, 16
        %v1174 = vrot.slane %v1172, 7
        %v1175 = vshll.u32 %v876, 16
        %v1177 = vor.u32 %v1174, %v1175
        %v1178 = vsel %vm1121, %v1170, %v1177
        %v1179 = vrot.slane %v1174, 4
        %v1181 = vshrl.u32 %v877, 16
        %v1183 = vrot.slane %v1181, 7
        %v1184 = vshll.u32 %v877, 16
        %v1186 = vor.u32 %v1183, %v1184
        %v1187 = vsel %vm1121, %v1179, %v1186
        %v1189 = vshrl.u32 %v878, 16
        %v1191 = vrot.slane %v1189, 7
        %v1192 = vrot.slane %v1191, 4
        %v1194 = vshrl.u32 %v879, 16
        %v1196 = vrot.slane %v1194, 7
        %v1197 = vshll.u32 %v879, 16
        %v1199 = vor.u32 %v1196, %v1197
        %v1200 = vsel %vm1121, %v1192, %v1199
        %v1201 = vrot.slane %v1196, 4
        %v1203 = vshrl.u32 %v880, 16
        %v1205 = vrot.slane %v1203, 7
        %v1206 = vshll.u32 %v880, 16
        %v1208 = vor.u32 %v1205, %v1206
        %v1209 = vsel %vm1121, %v1201, %v1208
        %v1211 = vshrl.u32 %v881, 16
        %v1213 = vrot.slane %v1211, 7
        %v1214 = vrot.slane %v1213, 4
        %v1216 = vshrl.u32 %v882, 16
        %v1218 = vrot.slane %v1216, 7
        %v1219 = vshll.u32 %v882, 16
        %v1221 = vor.u32 %v1218, %v1219
        %v1222 = vsel %vm1121, %v1214, %v1221
        %v1223 = vrot.slane %v1218, 4
        %v1225 = vshrl.u32 %v883, 16
        %v1227 = vrot.slane %v1225, 7
        %v1228 = vshll.u32 %v883, 16
        %v1230 = vor.u32 %v1227, %v1228
        %v1231 = vsel %vm1121, %v1223, %v1230
        %v1233 = vshrl.u32 %v884, 16
        %v1235 = vrot.slane %v1233, 7
        %v1236 = vrot.slane %v1235, 4
        %v1238 = vshrl.u32 %v885, 16
        %v1240 = vrot.slane %v1238, 7
        %v1241 = vshll.u32 %v885, 16
        %v1243 = vor.u32 %v1240, %v1241
        %v1244 = vsel %vm1121, %v1236, %v1243
        %v1245 = vrot.slane %v1240, 4
        %v1247 = vshrl.u32 %v886, 16
        %v1249 = vrot.slane %v1247, 7
        %v1250 = vshll.u32 %v886, 16
        %v1252 = vor.u32 %v1249, %v1250
        %v1253 = vsel %vm1121, %v1245, %v1252
        %v1255 = vshrl.u32 %v887, 16
        %v1257 = vrot.slane %v1255, 7
        %v1258 = vrot.slane %v1257, 4
        %v1260 = vshrl.u32 %v888, 16
        %v1262 = vrot.slane %v1260, 7
        %v1263 = vshll.u32 %v888, 16
        %v1265 = vor.u32 %v1262, %v1263
        %v1266 = vsel %vm1121, %v1258, %v1265
        %v1267 = vrot.slane %v1262, 4
        %v1269 = vshrl.u32 %v889, 16
        %v1271 = vrot.slane %v1269, 7
        %v1272 = vshll.u32 %v889, 16
        %v1274 = vor.u32 %v1271, %v1272
        %v1275 = vsel %vm1121, %v1267, %v1274
        %v1277 = vshrl.u32 %v890, 16
        %v1279 = vrot.slane %v1277, 7
        %v1280 = vrot.slane %v1279, 4
        %v1282 = vshrl.u32 %v891, 16
        %v1284 = vrot.slane %v1282, 7
        %v1285 = vshll.u32 %v891, 16
        %v1287 = vor.u32 %v1284, %v1285
        %v1288 = vsel %vm1121, %v1280, %v1287
        %v1289 = vrot.slane %v1284, 4
        %v1291 = vshrl.u32 %v892, 16
        %v1293 = vrot.slane %v1291, 7
        %v1294 = vshll.u32 %v892, 16
        %v1296 = vor.u32 %v1293, %v1294
        %v1297 = vsel %vm1121, %v1289, %v1296
        %v1298 = vunpack.c.l.b16 %v1134
        %v1299 = vunpack.c.l.b16 %v1143
        %v1300 = vunpack.c.l.b16 %v1156
        %v1301 = vunpack.c.l.b16 %v1165
        %v1302 = vunpack.c.l.b16 %v1178
        %v1303 = vunpack.c.l.b16 %v1187
        %v1304 = vunpack.c.l.b16 %v1200
        %v1305 = vunpack.c.l.b16 %v1209
        %v1306 = vunpack.c.l.b16 %v1222
        %v1307 = vunpack.c.l.b16 %v1231
        %v1308 = vunpack.c.l.b16 %v1244
        %v1309 = vunpack.c.l.b16 %v1253
        %v1310 = vunpack.c.l.b16 %v1266
        %v1311 = vunpack.c.l.b16 %v1275
        %v1312 = vunpack.c.l.b16 %v1288
        %v1313 = vunpack.c.l.b16 %v1297
        %v1314 = vpack.c.b16 %v1299, %v1298
        %v1315 = vpack.c.b16 %v1301, %v1300
        %v1316 = vpack.c.b16 %v1303, %v1302
        %v1317 = vpack.c.b16 %v1305, %v1304
        %v1318 = vpack.c.b16 %v1307, %v1306
        %v1319 = vpack.c.b16 %v1309, %v1308
        %v1320 = vpack.c.b16 %v1311, %v1310
        %v1321 = vpack.c.b16 %v1313, %v1312
        %v1346 = vunpack.c.l.b16 %v893
        %v1347 = vunpack.c.l.b16 %v894
        %v1348 = vunpack.c.l.b16 %v895
        %v1349 = vunpack.c.l.b16 %v896
        %v1350 = vunpack.c.l.b16 %v897
        %v1351 = vunpack.c.l.b16 %v898
        %v1352 = vunpack.c.l.b16 %v899
        %v1353 = vunpack.c.l.b16 %v900
        %v1354 = vunpack.c.l.b16 %v901
        %v1355 = vunpack.c.l.b16 %v902
        %v1356 = vunpack.c.l.b16 %v903
        %v1357 = vunpack.c.l.b16 %v904
        %v1358 = vunpack.c.l.b16 %v905
        %v1359 = vunpack.c.l.b16 %v906
        %v1360 = vunpack.c.l.b16 %v907
        %v1361 = vunpack.c.l.b16 %v908
        %v1362 = vpack.c.b16 %v1347, %v1346
        %v1363 = vpack.c.b16 %v1349, %v1348
        %v1364 = vpack.c.b16 %v1351, %v1350
        %v1365 = vpack.c.b16 %v1353, %v1352
        %v1366 = vpack.c.b16 %v1355, %v1354
        %v1367 = vpack.c.b16 %v1357, %v1356
        %v1368 = vpack.c.b16 %v1359, %v1358
        %v1369 = vpack.c.b16 %v1361, %v1360
        %1378 = vmatprep.subr.bf16.mxu0 0
        %1379 = vmatpush1.bf16.msra.mxu0 %v1369
        %1380 = vmatprep.subr.bf16.mxu0 0
        %1381 = vmatpush1.bf16.msra.mxu0 %v1368
        %1382 = vmatprep.subr.bf16.mxu0 0
        %1383 = vmatpush1.bf16.msra.mxu0 %v1367
        %1384 = vmatprep.subr.bf16.mxu0 0
        %1385 = vmatpush1.bf16.msra.mxu0 %v1366
        %1386 = vmatprep.subr.bf16.mxu0 0
        %1387 = vmatpush1.bf16.msra.mxu0 %v1365
        %1388 = vmatprep.subr.bf16.mxu0 0
        %1389 = vmatpush1.bf16.msra.mxu0 %v1364
        %1390 = vmatprep.subr.bf16.mxu0 0
        %1391 = vmatpush1.bf16.msra.mxu0 %v1363
        %1392 = vmatprep.subr.bf16.mxu0 0
        %1393 = vmatpush1.bf16.msra.mxu0 %v1362
        %1394 = vmatprep.subr.bf16.mxu0 0
        %1395 = vmatpush2.bf16.msra.mxu0 0
        %1396 = vmatprep.subr.bf16.mxu0 0
        %1397 = vmatpush2.bf16.msra.mxu0 0
        %1398 = vmatprep.subr.bf16.mxu0 0
        %1399 = vmatpush2.bf16.msra.mxu0 0
        %1400 = vmatprep.subr.bf16.mxu0 0
        %1401 = vmatpush2.bf16.msra.mxu0 0
        %1402 = vmatprep.subr.bf16.mxu0 0
        %1403 = vmatpush2.bf16.msra.mxu0 0
        %1404 = vmatprep.subr.bf16.mxu0 0
        %1405 = vmatpush2.bf16.msra.mxu0 0
        %1406 = vmatprep.subr.bf16.mxu0 0
        %1407 = vmatpush2.bf16.msra.mxu0 0
        %1408 = vmatprep.subr.bf16.mxu0 0
        %1409 = vmatpush2.bf16.msra.mxu0 0
        %1410 = vmatprep.mubr.bf16.mxu0 0
        %1411 = vmatmul.mubr.bf16.gmra.mxu0 %v1314
        %v1412 = vpop.f32.mrf.mxu0
        %v1413 = vadd.f32 %v1057, %v1412
        %v1414 = vpop.f32.mrf.mxu0
        %v1415 = vpop.f32.mrf.mxu0
        %v1416 = vadd.f32 %v1060, %v1415
        %v1417 = vpop.f32.mrf.mxu0
        %1418 = vmatprep.mubr.bf16.mxu0 0
        %1419 = vmatmul.mubr.bf16.gmra.mxu0 %v1315
        %v1420 = vpop.f32.mrf.mxu0
        %v1421 = vadd.f32 %v1065, %v1420
        %v1422 = vpop.f32.mrf.mxu0
        %v1423 = vpop.f32.mrf.mxu0
        %v1424 = vadd.f32 %v1068, %v1423
        %v1425 = vpop.f32.mrf.mxu0
        %1426 = vmatprep.mubr.bf16.mxu0 0
        %1427 = vmatmul.mubr.bf16.gmra.mxu0 %v1316
        %v1428 = vpop.f32.mrf.mxu0
        %v1429 = vadd.f32 %v1073, %v1428
        %v1430 = vpop.f32.mrf.mxu0
        %v1431 = vpop.f32.mrf.mxu0
        %v1432 = vadd.f32 %v1076, %v1431
        %v1433 = vpop.f32.mrf.mxu0
        %1434 = vmatprep.mubr.bf16.mxu0 0
        %1435 = vmatmul.mubr.bf16.gmra.mxu0 %v1317
        %v1436 = vpop.f32.mrf.mxu0
        %v1437 = vadd.f32 %v1081, %v1436
        %v1438 = vpop.f32.mrf.mxu0
        %v1439 = vpop.f32.mrf.mxu0
        %v1440 = vadd.f32 %v1084, %v1439
        %v1441 = vpop.f32.mrf.mxu0
        %1442 = vmatprep.mubr.bf16.mxu0 0
        %1443 = vmatmul.mubr.bf16.gmra.mxu0 %v1318
        %v1444 = vpop.f32.mrf.mxu0
        %v1445 = vadd.f32 %v1089, %v1444
        %v1446 = vpop.f32.mrf.mxu0
        %v1447 = vpop.f32.mrf.mxu0
        %v1448 = vadd.f32 %v1092, %v1447
        %v1449 = vpop.f32.mrf.mxu0
        %1450 = vmatprep.mubr.bf16.mxu0 0
        %1451 = vmatmul.mubr.bf16.gmra.mxu0 %v1319
        %v1452 = vpop.f32.mrf.mxu0
        %v1453 = vadd.f32 %v1097, %v1452
        %v1454 = vpop.f32.mrf.mxu0
        %v1455 = vpop.f32.mrf.mxu0
        %v1456 = vadd.f32 %v1100, %v1455
        %v1457 = vpop.f32.mrf.mxu0
        %1458 = vmatprep.mubr.bf16.mxu0 0
        %1459 = vmatmul.mubr.bf16.gmra.mxu0 %v1320
        %v1460 = vpop.f32.mrf.mxu0
        %v1461 = vadd.f32 %v1105, %v1460
        %v1462 = vpop.f32.mrf.mxu0
        %v1463 = vpop.f32.mrf.mxu0
        %v1464 = vadd.f32 %v1108, %v1463
        %v1465 = vpop.f32.mrf.mxu0
        %1466 = vmatprep.mubr.bf16.mxu0 0
        %1467 = vmatmul.mubr.bf16.gmra.mxu0 %v1321
        %v1468 = vpop.f32.mrf.mxu0
        %v1469 = vadd.f32 %v1113, %v1468
        %v1470 = vpop.f32.mrf.mxu0
        %v1471 = vpop.f32.mrf.mxu0
        %v1472 = vadd.f32 %v1116, %v1471
        %v1473 = vpop.f32.mrf.mxu0
        %1474 = vdwg.mxu0
        %v1475 = vld [vmem:[#allocation3 + $0x4] sm:$0xf]
        %v1476 = vld [vmem:[#allocation3 + $0x8] sm:$0xf]
        %v1477 = vld [vmem:[#allocation3 + $0xc] sm:$0x1]
        %v1478 = vld [vmem:[#allocation3 + $0x14] sm:$0xf]
        %v1479 = vld [vmem:[#allocation3 + $0x18] sm:$0xf]
        %v1480 = vld [vmem:[#allocation3 + $0x1c] sm:$0x1]
        %v1481 = vld [vmem:[#allocation3 + $0x24] sm:$0xf]
        %v1482 = vld [vmem:[#allocation3 + $0x28] sm:$0xf]
        %v1483 = vld [vmem:[#allocation3 + $0x2c] sm:$0x1]
        %v1484 = vld [vmem:[#allocation3 + $0x34] sm:$0xf]
        %v1485 = vld [vmem:[#allocation3 + $0x38] sm:$0xf]
        %v1486 = vld [vmem:[#allocation3 + $0x3c] sm:$0x1]
        %v1487 = vld [vmem:[#allocation3 + $0x44] sm:$0xf]
        %v1488 = vld [vmem:[#allocation3 + $0x48] sm:$0xf]
        %v1489 = vld [vmem:[#allocation3 + $0x4c] sm:$0x1]
        %v1490 = vld [vmem:[#allocation3 + $0x54] sm:$0xf]
        %v1491 = vld [vmem:[#allocation3 + $0x58] sm:$0xf]
        %v1492 = vld [vmem:[#allocation3 + $0x5c] sm:$0x1]
        %v1493 = vld [vmem:[#allocation3 + $0x64] sm:$0xf]
        %v1494 = vld [vmem:[#allocation3 + $0x68] sm:$0xf]
        %v1495 = vld [vmem:[#allocation3 + $0x6c] sm:$0x1]
        %v1496 = vld [vmem:[#allocation3 + $0x74] sm:$0xf]
        %v1497 = vld [vmem:[#allocation3 + $0x78] sm:$0xf]
        %v1498 = vld [vmem:[#allocation3 + $0x7c] sm:$0x1]
        %s1499 = scalar_lea.vmem [#allocation8], 128
        %v1500 = vld [vmem:[%s1499] sm:$0xf]
        %v1501 = vld [vmem:[%s1499 + $0x4] sm:$0xf]
        %v1502 = vld [vmem:[%s1499 + $0x8] sm:$0xf]
        %v1503 = vld [vmem:[%s1499 + $0xc] sm:$0xf]
        %v1504 = vld [vmem:[%s1499 + $0x10] sm:$0xf]
        %v1505 = vld [vmem:[%s1499 + $0x14] sm:$0xf]
        %v1506 = vld [vmem:[%s1499 + $0x18] sm:$0xf]
        %v1507 = vld [vmem:[%s1499 + $0x1c] sm:$0xf]
        %v1508 = vld [vmem:[%s1499 + $0x20] sm:$0xf]
        %v1509 = vld [vmem:[%s1499 + $0x24] sm:$0xf]
        %v1510 = vld [vmem:[%s1499 + $0x28] sm:$0xf]
        %v1511 = vld [vmem:[%s1499 + $0x2c] sm:$0xf]
        %v1512 = vld [vmem:[%s1499 + $0x30] sm:$0xf]
        %v1513 = vld [vmem:[%s1499 + $0x34] sm:$0xf]
        %v1514 = vld [vmem:[%s1499 + $0x38] sm:$0xf]
        %v1515 = vld [vmem:[%s1499 + $0x3c] sm:$0xf]
        %vm1516 = vsmask.f32 3328
        %vm1517 = vsmask.f32 7440
        %vm1518 = vmor %vm1516, %vm1517
        %v1520 = vshrl.u32 %v1475, 16
        %v1522 = vrot.slane %v1520, 4
        %v1523 = vshll.u32 %v1475, 16
        %v1525 = vrot.slane %v1523, 5
        %v1526 = vor.u32 %v1522, %v1525
        %v1527 = vrot.slane %v1526, 4
        %v1529 = vshll.u32 %v1476, 16
        %v1531 = vrot.slane %v1529, 5
        %v1532 = vsel %vm1518, %v1527, %v1531
        %v1533 = vshrl.u32 %v1476, 16
        %v1535 = vrot.slane %v1533, 4
        %v1536 = vor.u32 %v1535, %v1531
        %v1537 = vrot.slane %v1536, 4
        %v1539 = vshll.u32 %v1477, 16
        %v1541 = vrot.slane %v1539, 5
        %v1542 = vsel %vm1518, %v1537, %v1541
        %v1544 = vshrl.u32 %v1478, 16
        %v1546 = vrot.slane %v1544, 4
        %v1547 = vshll.u32 %v1478, 16
        %v1549 = vrot.slane %v1547, 5
        %v1550 = vor.u32 %v1546, %v1549
        %v1551 = vrot.slane %v1550, 4
        %v1553 = vshll.u32 %v1479, 16
        %v1555 = vrot.slane %v1553, 5
        %v1556 = vsel %vm1518, %v1551, %v1555
        %v1557 = vshrl.u32 %v1479, 16
        %v1559 = vrot.slane %v1557, 4
        %v1560 = vor.u32 %v1559, %v1555
        %v1561 = vrot.slane %v1560, 4
        %v1563 = vshll.u32 %v1480, 16
        %v1565 = vrot.slane %v1563, 5
        %v1566 = vsel %vm1518, %v1561, %v1565
        %v1568 = vshrl.u32 %v1481, 16
        %v1570 = vrot.slane %v1568, 4
        %v1571 = vshll.u32 %v1481, 16
        %v1573 = vrot.slane %v1571, 5
        %v1574 = vor.u32 %v1570, %v1573
        %v1575 = vrot.slane %v1574, 4
        %v1577 = vshll.u32 %v1482, 16
        %v1579 = vrot.slane %v1577, 5
        %v1580 = vsel %vm1518, %v1575, %v1579
        %v1581 = vshrl.u32 %v1482, 16
        %v1583 = vrot.slane %v1581, 4
        %v1584 = vor.u32 %v1583, %v1579
        %v1585 = vrot.slane %v1584, 4
        %v1587 = vshll.u32 %v1483, 16
        %v1589 = vrot.slane %v1587, 5
        %v1590 = vsel %vm1518, %v1585, %v1589
        %v1592 = vshrl.u32 %v1484, 16
        %v1594 = vrot.slane %v1592, 4
        %v1595 = vshll.u32 %v1484, 16
        %v1597 = vrot.slane %v1595, 5
        %v1598 = vor.u32 %v1594, %v1597
        %v1599 = vrot.slane %v1598, 4
        %v1601 = vshll.u32 %v1485, 16
        %v1603 = vrot.slane %v1601, 5
        %v1604 = vsel %vm1518, %v1599, %v1603
        %v1605 = vshrl.u32 %v1485, 16
        %v1607 = vrot.slane %v1605, 4
        %v1608 = vor.u32 %v1607, %v1603
        %v1609 = vrot.slane %v1608, 4
        %v1611 = vshll.u32 %v1486, 16
        %v1613 = vrot.slane %v1611, 5
        %v1614 = vsel %vm1518, %v1609, %v1613
        %v1616 = vshrl.u32 %v1487, 16
        %v1618 = vrot.slane %v1616, 4
        %v1619 = vshll.u32 %v1487, 16
        %v1621 = vrot.slane %v1619, 5
        %v1622 = vor.u32 %v1618, %v1621
        %v1623 = vrot.slane %v1622, 4
        %v1625 = vshll.u32 %v1488, 16
        %v1627 = vrot.slane %v1625, 5
        %v1628 = vsel %vm1518, %v1623, %v1627
        %v1629 = vshrl.u32 %v1488, 16
        %v1631 = vrot.slane %v1629, 4
        %v1632 = vor.u32 %v1631, %v1627
        %v1633 = vrot.slane %v1632, 4
        %v1635 = vshll.u32 %v1489, 16
        %v1637 = vrot.slane %v1635, 5
        %v1638 = vsel %vm1518, %v1633, %v1637
        %v1640 = vshrl.u32 %v1490, 16
        %v1642 = vrot.slane %v1640, 4
        %v1643 = vshll.u32 %v1490, 16
        %v1645 = vrot.slane %v1643, 5
        %v1646 = vor.u32 %v1642, %v1645
        %v1647 = vrot.slane %v1646, 4
        %v1649 = vshll.u32 %v1491, 16
        %v1651 = vrot.slane %v1649, 5
        %v1652 = vsel %vm1518, %v1647, %v1651
        %v1653 = vshrl.u32 %v1491, 16
        %v1655 = vrot.slane %v1653, 4
        %v1656 = vor.u32 %v1655, %v1651
        %v1657 = vrot.slane %v1656, 4
        %v1659 = vshll.u32 %v1492, 16
        %v1661 = vrot.slane %v1659, 5
        %v1662 = vsel %vm1518, %v1657, %v1661
        %v1664 = vshrl.u32 %v1493, 16
        %v1666 = vrot.slane %v1664, 4
        %v1667 = vshll.u32 %v1493, 16
        %v1669 = vrot.slane %v1667, 5
        %v1670 = vor.u32 %v1666, %v1669
        %v1671 = vrot.slane %v1670, 4
        %v1673 = vshll.u32 %v1494, 16
        %v1675 = vrot.slane %v1673, 5
        %v1676 = vsel %vm1518, %v1671, %v1675
        %v1677 = vshrl.u32 %v1494, 16
        %v1679 = vrot.slane %v1677, 4
        %v1680 = vor.u32 %v1679, %v1675
        %v1681 = vrot.slane %v1680, 4
        %v1683 = vshll.u32 %v1495, 16
        %v1685 = vrot.slane %v1683, 5
        %v1686 = vsel %vm1518, %v1681, %v1685
        %v1688 = vshrl.u32 %v1496, 16
        %v1690 = vrot.slane %v1688, 4
        %v1691 = vshll.u32 %v1496, 16
        %v1693 = vrot.slane %v1691, 5
        %v1694 = vor.u32 %v1690, %v1693
        %v1695 = vrot.slane %v1694, 4
        %v1697 = vshll.u32 %v1497, 16
        %v1699 = vrot.slane %v1697, 5
        %v1700 = vsel %vm1518, %v1695, %v1699
        %v1701 = vshrl.u32 %v1497, 16
        %v1703 = vrot.slane %v1701, 4
        %v1704 = vor.u32 %v1703, %v1699
        %v1705 = vrot.slane %v1704, 4
        %v1707 = vshll.u32 %v1498, 16
        %v1709 = vrot.slane %v1707, 5
        %v1710 = vsel %vm1518, %v1705, %v1709
        %v1711 = vunpack.c.l.b16 %v1532
        %v1712 = vunpack.c.l.b16 %v1542
        %v1713 = vunpack.c.l.b16 %v1556
        %v1714 = vunpack.c.l.b16 %v1566
        %v1715 = vunpack.c.l.b16 %v1580
        %v1716 = vunpack.c.l.b16 %v1590
        %v1717 = vunpack.c.l.b16 %v1604
        %v1718 = vunpack.c.l.b16 %v1614
        %v1719 = vunpack.c.l.b16 %v1628
        %v1720 = vunpack.c.l.b16 %v1638
        %v1721 = vunpack.c.l.b16 %v1652
        %v1722 = vunpack.c.l.b16 %v1662
        %v1723 = vunpack.c.l.b16 %v1676
        %v1724 = vunpack.c.l.b16 %v1686
        %v1725 = vunpack.c.l.b16 %v1700
        %v1726 = vunpack.c.l.b16 %v1710
        %v1727 = vpack.c.b16 %v1712, %v1711
        %v1728 = vpack.c.b16 %v1714, %v1713
        %v1729 = vpack.c.b16 %v1716, %v1715
        %v1730 = vpack.c.b16 %v1718, %v1717
        %v1731 = vpack.c.b16 %v1720, %v1719
        %v1732 = vpack.c.b16 %v1722, %v1721
        %v1733 = vpack.c.b16 %v1724, %v1723
        %v1734 = vpack.c.b16 %v1726, %v1725
        %v1759 = vunpack.c.l.b16 %v1500
        %v1760 = vunpack.c.l.b16 %v1501
        %v1761 = vunpack.c.l.b16 %v1502
        %v1762 = vunpack.c.l.b16 %v1503
        %v1763 = vunpack.c.l.b16 %v1504
        %v1764 = vunpack.c.l.b16 %v1505
        %v1765 = vunpack.c.l.b16 %v1506
        %v1766 = vunpack.c.l.b16 %v1507
        %v1767 = vunpack.c.l.b16 %v1508
        %v1768 = vunpack.c.l.b16 %v1509
        %v1769 = vunpack.c.l.b16 %v1510
        %v1770 = vunpack.c.l.b16 %v1511
        %v1771 = vunpack.c.l.b16 %v1512
        %v1772 = vunpack.c.l.b16 %v1513
        %v1773 = vunpack.c.l.b16 %v1514
        %v1774 = vunpack.c.l.b16 %v1515
        %v1775 = vpack.c.b16 %v1760, %v1759
        %v1776 = vpack.c.b16 %v1762, %v1761
        %v1777 = vpack.c.b16 %v1764, %v1763
        %v1778 = vpack.c.b16 %v1766, %v1765
        %v1779 = vpack.c.b16 %v1768, %v1767
        %v1780 = vpack.c.b16 %v1770, %v1769
        %v1781 = vpack.c.b16 %v1772, %v1771
        %v1782 = vpack.c.b16 %v1774, %v1773
        %1791 = vmatprep.subr.bf16.mxu0 0
        %1792 = vmatpush1.bf16.msra.mxu0 %v1782
        %1793 = vmatprep.subr.bf16.mxu0 0
        %1794 = vmatpush1.bf16.msra.mxu0 %v1781
        %1795 = vmatprep.subr.bf16.mxu0 0
        %1796 = vmatpush1.bf16.msra.mxu0 %v1780
        %1797 = vmatprep.subr.bf16.mxu0 0
        %1798 = vmatpush1.bf16.msra.mxu0 %v1779
        %1799 = vmatprep.subr.bf16.mxu0 0
        %1800 = vmatpush1.bf16.msra.mxu0 %v1778
        %1801 = vmatprep.subr.bf16.mxu0 0
        %1802 = vmatpush1.bf16.msra.mxu0 %v1777
        %1803 = vmatprep.subr.bf16.mxu0 0
        %1804 = vmatpush1.bf16.msra.mxu0 %v1776
        %1805 = vmatprep.subr.bf16.mxu0 0
        %1806 = vmatpush1.bf16.msra.mxu0 %v1775
        %1807 = vmatprep.subr.bf16.mxu0 0
        %1808 = vmatpush2.bf16.msra.mxu0 0
        %1809 = vmatprep.subr.bf16.mxu0 0
        %1810 = vmatpush2.bf16.msra.mxu0 0
        %1811 = vmatprep.subr.bf16.mxu0 0
        %1812 = vmatpush2.bf16.msra.mxu0 0
        %1813 = vmatprep.subr.bf16.mxu0 0
        %1814 = vmatpush2.bf16.msra.mxu0 0
        %1815 = vmatprep.subr.bf16.mxu0 0
        %1816 = vmatpush2.bf16.msra.mxu0 0
        %1817 = vmatprep.subr.bf16.mxu0 0
        %1818 = vmatpush2.bf16.msra.mxu0 0
        %1819 = vmatprep.subr.bf16.mxu0 0
        %1820 = vmatpush2.bf16.msra.mxu0 0
        %1821 = vmatprep.subr.bf16.mxu0 0
        %1822 = vmatpush2.bf16.msra.mxu0 0
        %1823 = vmatprep.mubr.bf16.mxu0 0
        %1824 = vmatmul.mubr.bf16.gmra.mxu0 %v1727
        %v1825 = vpop.f32.mrf.mxu0
        %v1826 = vadd.f32 0.0, %v1825
        %v1827 = vpop.f32.mrf.mxu0
        %v1828 = vpop.f32.mrf.mxu0
        %v1829 = vadd.f32 0.0, %v1828
        %v1830 = vpop.f32.mrf.mxu0
        %1831 = vmatprep.mubr.bf16.mxu0 0
        %1832 = vmatmul.mubr.bf16.gmra.mxu0 %v1728
        %v1833 = vpop.f32.mrf.mxu0
        %v1834 = vadd.f32 0.0, %v1833
        %v1835 = vpop.f32.mrf.mxu0
        %v1836 = vpop.f32.mrf.mxu0
        %v1837 = vadd.f32 0.0, %v1836
        %v1838 = vpop.f32.mrf.mxu0
        %1839 = vmatprep.mubr.bf16.mxu0 0
        %1840 = vmatmul.mubr.bf16.gmra.mxu0 %v1729
        %v1841 = vpop.f32.mrf.mxu0
        %v1842 = vadd.f32 0.0, %v1841
        %v1843 = vpop.f32.mrf.mxu0
        %v1844 = vpop.f32.mrf.mxu0
        %v1845 = vadd.f32 0.0, %v1844
        %v1846 = vpop.f32.mrf.mxu0
        %1847 = vmatprep.mubr.bf16.mxu0 0
        %1848 = vmatmul.mubr.bf16.gmra.mxu0 %v1730
        %v1849 = vpop.f32.mrf.mxu0
        %v1850 = vadd.f32 0.0, %v1849
        %v1851 = vpop.f32.mrf.mxu0
        %v1852 = vpop.f32.mrf.mxu0
        %v1853 = vadd.f32 0.0, %v1852
        %v1854 = vpop.f32.mrf.mxu0
        %1855 = vmatprep.mubr.bf16.mxu0 0
        %1856 = vmatmul.mubr.bf16.gmra.mxu0 %v1731
        %v1857 = vpop.f32.mrf.mxu0
        %v1858 = vadd.f32 0.0, %v1857
        %v1859 = vpop.f32.mrf.mxu0
        %v1860 = vpop.f32.mrf.mxu0
        %v1861 = vadd.f32 0.0, %v1860
        %v1862 = vpop.f32.mrf.mxu0
        %1863 = vmatprep.mubr.bf16.mxu0 0
        %1864 = vmatmul.mubr.bf16.gmra.mxu0 %v1732
        %v1865 = vpop.f32.mrf.mxu0
        %v1866 = vadd.f32 0.0, %v1865
        %v1867 = vpop.f32.mrf.mxu0
        %v1868 = vpop.f32.mrf.mxu0
        %v1869 = vadd.f32 0.0, %v1868
        %v1870 = vpop.f32.mrf.mxu0
        %1871 = vmatprep.mubr.bf16.mxu0 0
        %1872 = vmatmul.mubr.bf16.gmra.mxu0 %v1733
        %v1873 = vpop.f32.mrf.mxu0
        %v1874 = vadd.f32 0.0, %v1873
        %v1875 = vpop.f32.mrf.mxu0
        %v1876 = vpop.f32.mrf.mxu0
        %v1877 = vadd.f32 0.0, %v1876
        %v1878 = vpop.f32.mrf.mxu0
        %1879 = vmatprep.mubr.bf16.mxu0 0
        %1880 = vmatmul.mubr.bf16.gmra.mxu0 %v1734
        %v1881 = vpop.f32.mrf.mxu0
        %v1882 = vadd.f32 0.0, %v1881
        %v1883 = vpop.f32.mrf.mxu0
        %v1884 = vpop.f32.mrf.mxu0
        %v1885 = vadd.f32 0.0, %v1884
        %v1886 = vpop.f32.mrf.mxu0
        %1887 = vdwg.mxu0
        %v1888 = vadd.f32 %v1413, %v1826
        %v1889 = vadd.f32 %v1416, %v1829
        %v1890 = vadd.f32 %v1421, %v1834
        %v1891 = vadd.f32 %v1424, %v1837
        %v1892 = vadd.f32 %v1429, %v1842
        %v1893 = vadd.f32 %v1432, %v1845
        %v1894 = vadd.f32 %v1437, %v1850
        %v1895 = vadd.f32 %v1440, %v1853
        %v1896 = vadd.f32 %v1445, %v1858
        %v1897 = vadd.f32 %v1448, %v1861
        %v1898 = vadd.f32 %v1453, %v1866
        %v1899 = vadd.f32 %v1456, %v1869
        %v1900 = vadd.f32 %v1461, %v1874
        %v1901 = vadd.f32 %v1464, %v1877
        %v1902 = vadd.f32 %v1469, %v1882
        %v1903 = vadd.f32 %v1472, %v1885
        %s1904 = scalar_lea.vmem [#allocation3], 16
        %v1905 = vld [vmem:[%s1904] sm:$0x8]
        %v1906 = vld [vmem:[%s1904 + $0x4] sm:$0xf]
        %v1907 = vld [vmem:[%s1904 + $0x8] sm:$0xf]
        %v1908 = vld [vmem:[%s1904 + $0x10] sm:$0x8]
        %v1909 = vld [vmem:[%s1904 + $0x14] sm:$0xf]
        %v1910 = vld [vmem:[%s1904 + $0x18] sm:$0xf]
        %v1911 = vld [vmem:[%s1904 + $0x20] sm:$0x8]
        %v1912 = vld [vmem:[%s1904 + $0x24] sm:$0xf]
        %v1913 = vld [vmem:[%s1904 + $0x28] sm:$0xf]
        %v1914 = vld [vmem:[%s1904 + $0x30] sm:$0x8]
        %v1915 = vld [vmem:[%s1904 + $0x34] sm:$0xf]
        %v1916 = vld [vmem:[%s1904 + $0x38] sm:$0xf]
        %v1917 = vld [vmem:[%s1904 + $0x40] sm:$0x8]
        %v1918 = vld [vmem:[%s1904 + $0x44] sm:$0xf]
        %v1919 = vld [vmem:[%s1904 + $0x48] sm:$0xf]
        %v1920 = vld [vmem:[%s1904 + $0x50] sm:$0x8]
        %v1921 = vld [vmem:[%s1904 + $0x54] sm:$0xf]
        %v1922 = vld [vmem:[%s1904 + $0x58] sm:$0xf]
        %v1923 = vld [vmem:[%s1904 + $0x60] sm:$0x8]
        %v1924 = vld [vmem:[%s1904 + $0x64] sm:$0xf]
        %v1925 = vld [vmem:[%s1904 + $0x68] sm:$0xf]
        %v1926 = vld [vmem:[%s1904 + $0x70] sm:$0x8]
        %v1927 = vld [vmem:[%s1904 + $0x74] sm:$0xf]
        %v1928 = vld [vmem:[%s1904 + $0x78] sm:$0xf]
        %s1929 = scalar_lea.vmem [#allocation8], 192
        %v1930 = vld [vmem:[%s1929] sm:$0xf]
        %v1931 = vld [vmem:[%s1929 + $0x4] sm:$0xf]
        %v1932 = vld [vmem:[%s1929 + $0x8] sm:$0xf]
        %v1933 = vld [vmem:[%s1929 + $0xc] sm:$0xf]
        %v1934 = vld [vmem:[%s1929 + $0x10] sm:$0xf]
        %v1935 = vld [vmem:[%s1929 + $0x14] sm:$0xf]
        %v1936 = vld [vmem:[%s1929 + $0x18] sm:$0xf]
        %v1937 = vld [vmem:[%s1929 + $0x1c] sm:$0xf]
        %v1938 = vld [vmem:[%s1929 + $0x20] sm:$0xf]
        %v1939 = vld [vmem:[%s1929 + $0x24] sm:$0xf]
        %v1940 = vld [vmem:[%s1929 + $0x28] sm:$0xf]
        %v1941 = vld [vmem:[%s1929 + $0x2c] sm:$0xf]
        %v1942 = vld [vmem:[%s1929 + $0x30] sm:$0xf]
        %v1943 = vld [vmem:[%s1929 + $0x34] sm:$0xf]
        %v1944 = vld [vmem:[%s1929 + $0x38] sm:$0xf]
        %v1945 = vld [vmem:[%s1929 + $0x3c] sm:$0xf]
        %v1947 = vshrl.u32 %v1905, 16
        %v1949 = vrot.slane %v1947, 7
        %v1950 = vrot.slane %v1949, 4
        %v1952 = vshrl.u32 %v1906, 16
        %v1954 = vrot.slane %v1952, 7
        %v1955 = vshll.u32 %v1906, 16
        %v1957 = vor.u32 %v1954, %v1955
        %v1958 = vsel %vm1121, %v1950, %v1957
        %v1959 = vrot.slane %v1954, 4
        %v1961 = vshrl.u32 %v1907, 16
        %v1963 = vrot.slane %v1961, 7
        %v1964 = vshll.u32 %v1907, 16
        %v1966 = vor.u32 %v1963, %v1964
        %v1967 = vsel %vm1121, %v1959, %v1966
        %v1969 = vshrl.u32 %v1908, 16
        %v1971 = vrot.slane %v1969, 7
        %v1972 = vrot.slane %v1971, 4
        %v1974 = vshrl.u32 %v1909, 16
        %v1976 = vrot.slane %v1974, 7
        %v1977 = vshll.u32 %v1909, 16
        %v1979 = vor.u32 %v1976, %v1977
        %v1980 = vsel %vm1121, %v1972, %v1979
        %v1981 = vrot.slane %v1976, 4
        %v1983 = vshrl.u32 %v1910, 16
        %v1985 = vrot.slane %v1983, 7
        %v1986 = vshll.u32 %v1910, 16
        %v1988 = vor.u32 %v1985, %v1986
        %v1989 = vsel %vm1121, %v1981, %v1988
        %v1991 = vshrl.u32 %v1911, 16
        %v1993 = vrot.slane %v1991, 7
        %v1994 = vrot.slane %v1993, 4
        %v1996 = vshrl.u32 %v1912, 16
        %v1998 = vrot.slane %v1996, 7
        %v1999 = vshll.u32 %v1912, 16
        %v2001 = vor.u32 %v1998, %v1999
        %v2002 = vsel %vm1121, %v1994, %v2001
        %v2003 = vrot.slane %v1998, 4
        %v2005 = vshrl.u32 %v1913, 16
        %v2007 = vrot.slane %v2005, 7
        %v2008 = vshll.u32 %v1913, 16
        %v2010 = vor.u32 %v2007, %v2008
        %v2011 = vsel %vm1121, %v2003, %v2010
        %v2013 = vshrl.u32 %v1914, 16
        %v2015 = vrot.slane %v2013, 7
        %v2016 = vrot.slane %v2015, 4
        %v2018 = vshrl.u32 %v1915, 16
        %v2020 = vrot.slane %v2018, 7
        %v2021 = vshll.u32 %v1915, 16
        %v2023 = vor.u32 %v2020, %v2021
        %v2024 = vsel %vm1121, %v2016, %v2023
        %v2025 = vrot.slane %v2020, 4
        %v2027 = vshrl.u32 %v1916, 16
        %v2029 = vrot.slane %v2027, 7
        %v2030 = vshll.u32 %v1916, 16
        %v2032 = vor.u32 %v2029, %v2030
        %v2033 = vsel %vm1121, %v2025, %v2032
        %v2035 = vshrl.u32 %v1917, 16
        %v2037 = vrot.slane %v2035, 7
        %v2038 = vrot.slane %v2037, 4
        %v2040 = vshrl.u32 %v1918, 16
        %v2042 = vrot.slane %v2040, 7
        %v2043 = vshll.u32 %v1918, 16
        %v2045 = vor.u32 %v2042, %v2043
        %v2046 = vsel %vm1121, %v2038, %v2045
        %v2047 = vrot.slane %v2042, 4
        %v2049 = vshrl.u32 %v1919, 16
        %v2051 = vrot.slane %v2049, 7
        %v2052 = vshll.u32 %v1919, 16
        %v2054 = vor.u32 %v2051, %v2052
        %v2055 = vsel %vm1121, %v2047, %v2054
        %v2057 = vshrl.u32 %v1920, 16
        %v2059 = vrot.slane %v2057, 7
        %v2060 = vrot.slane %v2059, 4
        %v2062 = vshrl.u32 %v1921, 16
        %v2064 = vrot.slane %v2062, 7
        %v2065 = vshll.u32 %v1921, 16
        %v2067 = vor.u32 %v2064, %v2065
        %v2068 = vsel %vm1121, %v2060, %v2067
        %v2069 = vrot.slane %v2064, 4
        %v2071 = vshrl.u32 %v1922, 16
        %v2073 = vrot.slane %v2071, 7
        %v2074 = vshll.u32 %v1922, 16
        %v2076 = vor.u32 %v2073, %v2074
        %v2077 = vsel %vm1121, %v2069, %v2076
        %v2079 = vshrl.u32 %v1923, 16
        %v2081 = vrot.slane %v2079, 7
        %v2082 = vrot.slane %v2081, 4
        %v2084 = vshrl.u32 %v1924, 16
        %v2086 = vrot.slane %v2084, 7
        %v2087 = vshll.u32 %v1924, 16
        %v2089 = vor.u32 %v2086, %v2087
        %v2090 = vsel %vm1121, %v2082, %v2089
        %v2091 = vrot.slane %v2086, 4
        %v2093 = vshrl.u32 %v1925, 16
        %v2095 = vrot.slane %v2093, 7
        %v2096 = vshll.u32 %v1925, 16
        %v2098 = vor.u32 %v2095, %v2096
        %v2099 = vsel %vm1121, %v2091, %v2098
        %v2101 = vshrl.u32 %v1926, 16
        %v2103 = vrot.slane %v2101, 7
        %v2104 = vrot.slane %v2103, 4
        %v2106 = vshrl.u32 %v1927, 16
        %v2108 = vrot.slane %v2106, 7
        %v2109 = vshll.u32 %v1927, 16
        %v2111 = vor.u32 %v2108, %v2109
        %v2112 = vsel %vm1121, %v2104, %v2111
        %v2113 = vrot.slane %v2108, 4
        %v2115 = vshrl.u32 %v1928, 16
        %v2117 = vrot.slane %v2115, 7
        %v2118 = vshll.u32 %v1928, 16
        %v2120 = vor.u32 %v2117, %v2118
        %v2121 = vsel %vm1121, %v2113, %v2120
        %v2122 = vunpack.c.l.b16 %v1958
        %v2123 = vunpack.c.l.b16 %v1967
        %v2124 = vunpack.c.l.b16 %v1980
        %v2125 = vunpack.c.l.b16 %v1989
        %v2126 = vunpack.c.l.b16 %v2002
        %v2127 = vunpack.c.l.b16 %v2011
        %v2128 = vunpack.c.l.b16 %v2024
        %v2129 = vunpack.c.l.b16 %v2033
        %v2130 = vunpack.c.l.b16 %v2046
        %v2131 = vunpack.c.l.b16 %v2055
        %v2132 = vunpack.c.l.b16 %v2068
        %v2133 = vunpack.c.l.b16 %v2077
        %v2134 = vunpack.c.l.b16 %v2090
        %v2135 = vunpack.c.l.b16 %v2099
        %v2136 = vunpack.c.l.b16 %v2112
        %v2137 = vunpack.c.l.b16 %v2121
        %v2138 = vpack.c.b16 %v2123, %v2122
        %v2139 = vpack.c.b16 %v2125, %v2124
        %v2140 = vpack.c.b16 %v2127, %v2126
        %v2141 = vpack.c.b16 %v2129, %v2128
        %v2142 = vpack.c.b16 %v2131, %v2130
        %v2143 = vpack.c.b16 %v2133, %v2132
        %v2144 = vpack.c.b16 %v2135, %v2134
        %v2145 = vpack.c.b16 %v2137, %v2136
        %v2170 = vunpack.c.l.b16 %v1930
        %v2171 = vunpack.c.l.b16 %v1931
        %v2172 = vunpack.c.l.b16 %v1932
        %v2173 = vunpack.c.l.b16 %v1933
        %v2174 = vunpack.c.l.b16 %v1934
        %v2175 = vunpack.c.l.b16 %v1935
        %v2176 = vunpack.c.l.b16 %v1936
        %v2177 = vunpack.c.l.b16 %v1937
        %v2178 = vunpack.c.l.b16 %v1938
        %v2179 = vunpack.c.l.b16 %v1939
        %v2180 = vunpack.c.l.b16 %v1940
        %v2181 = vunpack.c.l.b16 %v1941
        %v2182 = vunpack.c.l.b16 %v1942
        %v2183 = vunpack.c.l.b16 %v1943
        %v2184 = vunpack.c.l.b16 %v1944
        %v2185 = vunpack.c.l.b16 %v1945
        %v2186 = vpack.c.b16 %v2171, %v2170
        %v2187 = vpack.c.b16 %v2173, %v2172
        %v2188 = vpack.c.b16 %v2175, %v2174
        %v2189 = vpack.c.b16 %v2177, %v2176
        %v2190 = vpack.c.b16 %v2179, %v2178
        %v2191 = vpack.c.b16 %v2181, %v2180
        %v2192 = vpack.c.b16 %v2183, %v2182
        %v2193 = vpack.c.b16 %v2185, %v2184
        %2202 = vmatprep.subr.bf16.mxu0 0
        %2203 = vmatpush1.bf16.msra.mxu0 %v2193
        %2204 = vmatprep.subr.bf16.mxu0 0
        %2205 = vmatpush1.bf16.msra.mxu0 %v2192
        %2206 = vmatprep.subr.bf16.mxu0 0
        %2207 = vmatpush1.bf16.msra.mxu0 %v2191
        %2208 = vmatprep.subr.bf16.mxu0 0
        %2209 = vmatpush1.bf16.msra.mxu0 %v2190
        %2210 = vmatprep.subr.bf16.mxu0 0
        %2211 = vmatpush1.bf16.msra.mxu0 %v2189
        %2212 = vmatprep.subr.bf16.mxu0 0
        %2213 = vmatpush1.bf16.msra.mxu0 %v2188
        %2214 = vmatprep.subr.bf16.mxu0 0
        %2215 = vmatpush1.bf16.msra.mxu0 %v2187
        %2216 = vmatprep.subr.bf16.mxu0 0
        %2217 = vmatpush1.bf16.msra.mxu0 %v2186
        %2218 = vmatprep.subr.bf16.mxu0 0
        %2219 = vmatpush2.bf16.msra.mxu0 0
        %2220 = vmatprep.subr.bf16.mxu0 0
        %2221 = vmatpush2.bf16.msra.mxu0 0
        %2222 = vmatprep.subr.bf16.mxu0 0
        %2223 = vmatpush2.bf16.msra.mxu0 0
        %2224 = vmatprep.subr.bf16.mxu0 0
        %2225 = vmatpush2.bf16.msra.mxu0 0
        %2226 = vmatprep.subr.bf16.mxu0 0
        %2227 = vmatpush2.bf16.msra.mxu0 0
        %2228 = vmatprep.subr.bf16.mxu0 0
        %2229 = vmatpush2.bf16.msra.mxu0 0
        %2230 = vmatprep.subr.bf16.mxu0 0
        %2231 = vmatpush2.bf16.msra.mxu0 0
        %2232 = vmatprep.subr.bf16.mxu0 0
        %2233 = vmatpush2.bf16.msra.mxu0 0
        %2234 = vmatprep.mubr.bf16.mxu0 0
        %2235 = vmatmul.mubr.bf16.gmra.mxu0 %v2138
        %v2236 = vpop.f32.mrf.mxu0
        %v2237 = vadd.f32 0.0, %v2236
        %v2238 = vpop.f32.mrf.mxu0
        %v2239 = vpop.f32.mrf.mxu0
        %v2240 = vadd.f32 0.0, %v2239
        %v2241 = vpop.f32.mrf.mxu0
        %2242 = vmatprep.mubr.bf16.mxu0 0
        %2243 = vmatmul.mubr.bf16.gmra.mxu0 %v2139
        %v2244 = vpop.f32.mrf.mxu0
        %v2245 = vadd.f32 0.0, %v2244
        %v2246 = vpop.f32.mrf.mxu0
        %v2247 = vpop.f32.mrf.mxu0
        %v2248 = vadd.f32 0.0, %v2247
        %v2249 = vpop.f32.mrf.mxu0
        %2250 = vmatprep.mubr.bf16.mxu0 0
        %2251 = vmatmul.mubr.bf16.gmra.mxu0 %v2140
        %v2252 = vpop.f32.mrf.mxu0
        %v2253 = vadd.f32 0.0, %v2252
        %v2254 = vpop.f32.mrf.mxu0
        %v2255 = vpop.f32.mrf.mxu0
        %v2256 = vadd.f32 0.0, %v2255
        %v2257 = vpop.f32.mrf.mxu0
        %2258 = vmatprep.mubr.bf16.mxu0 0
        %2259 = vmatmul.mubr.bf16.gmra.mxu0 %v2141
        %v2260 = vpop.f32.mrf.mxu0
        %v2261 = vadd.f32 0.0, %v2260
        %v2262 = vpop.f32.mrf.mxu0
        %v2263 = vpop.f32.mrf.mxu0
        %v2264 = vadd.f32 0.0, %v2263
        %v2265 = vpop.f32.mrf.mxu0
        %2266 = vmatprep.mubr.bf16.mxu0 0
        %2267 = vmatmul.mubr.bf16.gmra.mxu0 %v2142
        %v2268 = vpop.f32.mrf.mxu0
        %v2269 = vadd.f32 0.0, %v2268
        %v2270 = vpop.f32.mrf.mxu0
        %v2271 = vpop.f32.mrf.mxu0
        %v2272 = vadd.f32 0.0, %v2271
        %v2273 = vpop.f32.mrf.mxu0
        %2274 = vmatprep.mubr.bf16.mxu0 0
        %2275 = vmatmul.mubr.bf16.gmra.mxu0 %v2143
        %v2276 = vpop.f32.mrf.mxu0
        %v2277 = vadd.f32 0.0, %v2276
        %v2278 = vpop.f32.mrf.mxu0
        %v2279 = vpop.f32.mrf.mxu0
        %v2280 = vadd.f32 0.0, %v2279
        %v2281 = vpop.f32.mrf.mxu0
        %2282 = vmatprep.mubr.bf16.mxu0 0
        %2283 = vmatmul.mubr.bf16.gmra.mxu0 %v2144
        %v2284 = vpop.f32.mrf.mxu0
        %v2285 = vadd.f32 0.0, %v2284
        %v2286 = vpop.f32.mrf.mxu0
        %v2287 = vpop.f32.mrf.mxu0
        %v2288 = vadd.f32 0.0, %v2287
        %v2289 = vpop.f32.mrf.mxu0
        %2290 = vmatprep.mubr.bf16.mxu0 0
        %2291 = vmatmul.mubr.bf16.gmra.mxu0 %v2145
        %v2292 = vpop.f32.mrf.mxu0
        %v2293 = vadd.f32 0.0, %v2292
        %v2294 = vpop.f32.mrf.mxu0
        %v2295 = vpop.f32.mrf.mxu0
        %v2296 = vadd.f32 0.0, %v2295
        %v2297 = vpop.f32.mrf.mxu0
        %2298 = vdwg.mxu0
        %v2299 = vadd.f32 %v1888, %v2237
        %v2300 = vadd.f32 %v1889, %v2240
        %v2301 = vadd.f32 %v1890, %v2245
        %v2302 = vadd.f32 %v1891, %v2248
        %v2303 = vadd.f32 %v1892, %v2253
        %v2304 = vadd.f32 %v1893, %v2256
        %v2305 = vadd.f32 %v1894, %v2261
        %v2306 = vadd.f32 %v1895, %v2264
        %v2307 = vadd.f32 %v1896, %v2269
        %v2308 = vadd.f32 %v1897, %v2272
        %v2309 = vadd.f32 %v1898, %v2277
        %v2310 = vadd.f32 %v1899, %v2280
        %v2311 = vadd.f32 %v1900, %v2285
        %v2312 = vadd.f32 %v1901, %v2288
        %v2313 = vadd.f32 %v1902, %v2293
        %v2314 = vadd.f32 %v1903, %v2296
        %s2315 = scalar_lea.vmem [#allocation8], 256
        %v2316 = vld [vmem:[%s2315] sm:$0xf]
        %v2317 = vld [vmem:[%s2315 + $0x4] sm:$0xf]
        %v2318 = vld [vmem:[%s2315 + $0x8] sm:$0xf]
        %v2319 = vld [vmem:[%s2315 + $0xc] sm:$0xf]
        %v2320 = vld [vmem:[%s2315 + $0x10] sm:$0xf]
        %v2321 = vld [vmem:[%s2315 + $0x14] sm:$0xf]
        %v2322 = vld [vmem:[%s2315 + $0x18] sm:$0xf]
        %v2323 = vld [vmem:[%s2315 + $0x1c] sm:$0xf]
        %v2324 = vld [vmem:[%s2315 + $0x20] sm:$0xf]
        %v2325 = vld [vmem:[%s2315 + $0x24] sm:$0xf]
        %v2326 = vld [vmem:[%s2315 + $0x28] sm:$0xf]
        %v2327 = vld [vmem:[%s2315 + $0x2c] sm:$0xf]
        %v2328 = vld [vmem:[%s2315 + $0x30] sm:$0xf]
        %v2329 = vld [vmem:[%s2315 + $0x34] sm:$0xf]
        %v2330 = vld [vmem:[%s2315 + $0x38] sm:$0xf]
        %v2331 = vld [vmem:[%s2315 + $0x3c] sm:$0xf]
        %v2348 = vunpack.c.l.b16 %v1906
        %v2349 = vunpack.c.l.b16 %v1907
        %v2350 = vunpack.c.l.b16 %v1909
        %v2351 = vunpack.c.l.b16 %v1910
        %v2352 = vunpack.c.l.b16 %v1912
        %v2353 = vunpack.c.l.b16 %v1913
        %v2354 = vunpack.c.l.b16 %v1915
        %v2355 = vunpack.c.l.b16 %v1916
        %v2356 = vunpack.c.l.b16 %v1918
        %v2357 = vunpack.c.l.b16 %v1919
        %v2358 = vunpack.c.l.b16 %v1921
        %v2359 = vunpack.c.l.b16 %v1922
        %v2360 = vunpack.c.l.b16 %v1924
        %v2361 = vunpack.c.l.b16 %v1925
        %v2362 = vunpack.c.l.b16 %v1927
        %v2363 = vunpack.c.l.b16 %v1928
        %v2364 = vpack.c.b16 %v2349, %v2348
        %v2365 = vpack.c.b16 %v2351, %v2350
        %v2366 = vpack.c.b16 %v2353, %v2352
        %v2367 = vpack.c.b16 %v2355, %v2354
        %v2368 = vpack.c.b16 %v2357, %v2356
        %v2369 = vpack.c.b16 %v2359, %v2358
        %v2370 = vpack.c.b16 %v2361, %v2360
        %v2371 = vpack.c.b16 %v2363, %v2362
        %v2396 = vunpack.c.l.b16 %v2316
        %v2397 = vunpack.c.l.b16 %v2317
        %v2398 = vunpack.c.l.b16 %v2318
        %v2399 = vunpack.c.l.b16 %v2319
        %v2400 = vunpack.c.l.b16 %v2320
        %v2401 = vunpack.c.l.b16 %v2321
        %v2402 = vunpack.c.l.b16 %v2322
        %v2403 = vunpack.c.l.b16 %v2323
        %v2404 = vunpack.c.l.b16 %v2324
        %v2405 = vunpack.c.l.b16 %v2325
        %v2406 = vunpack.c.l.b16 %v2326
        %v2407 = vunpack.c.l.b16 %v2327
        %v2408 = vunpack.c.l.b16 %v2328
        %v2409 = vunpack.c.l.b16 %v2329
        %v2410 = vunpack.c.l.b16 %v2330
        %v2411 = vunpack.c.l.b16 %v2331
        %v2412 = vpack.c.b16 %v2397, %v2396
        %v2413 = vpack.c.b16 %v2399, %v2398
        %v2414 = vpack.c.b16 %v2401, %v2400
        %v2415 = vpack.c.b16 %v2403, %v2402
        %v2416 = vpack.c.b16 %v2405, %v2404
        %v2417 = vpack.c.b16 %v2407, %v2406
        %v2418 = vpack.c.b16 %v2409, %v2408
        %v2419 = vpack.c.b16 %v2411, %v2410
        %2428 = vmatprep.subr.bf16.mxu0 0
        %2429 = vmatpush1.bf16.msra.mxu0 %v2419
        %2430 = vmatprep.subr.bf16.mxu0 0
        %2431 = vmatpush1.bf16.msra.mxu0 %v2418
        %2432 = vmatprep.subr.bf16.mxu0 0
        %2433 = vmatpush1.bf16.msra.mxu0 %v2417
        %2434 = vmatprep.subr.bf16.mxu0 0
        %2435 = vmatpush1.bf16.msra.mxu0 %v2416
        %2436 = vmatprep.subr.bf16.mxu0 0
        %2437 = vmatpush1.bf16.msra.mxu0 %v2415
        %2438 = vmatprep.subr.bf16.mxu0 0
        %2439 = vmatpush1.bf16.msra.mxu0 %v2414
        %2440 = vmatprep.subr.bf16.mxu0 0
        %2441 = vmatpush1.bf16.msra.mxu0 %v2413
        %2442 = vmatprep.subr.bf16.mxu0 0
        %2443 = vmatpush1.bf16.msra.mxu0 %v2412
        %2444 = vmatprep.subr.bf16.mxu0 0
        %2445 = vmatpush2.bf16.msra.mxu0 0
        %2446 = vmatprep.subr.bf16.mxu0 0
        %2447 = vmatpush2.bf16.msra.mxu0 0
        %2448 = vmatprep.subr.bf16.mxu0 0
        %2449 = vmatpush2.bf16.msra.mxu0 0
        %2450 = vmatprep.subr.bf16.mxu0 0
        %2451 = vmatpush2.bf16.msra.mxu0 0
        %2452 = vmatprep.subr.bf16.mxu0 0
        %2453 = vmatpush2.bf16.msra.mxu0 0
        %2454 = vmatprep.subr.bf16.mxu0 0
        %2455 = vmatpush2.bf16.msra.mxu0 0
        %2456 = vmatprep.subr.bf16.mxu0 0
        %2457 = vmatpush2.bf16.msra.mxu0 0
        %2458 = vmatprep.subr.bf16.mxu0 0
        %2459 = vmatpush2.bf16.msra.mxu0 0
        %2460 = vmatprep.mubr.bf16.mxu0 0
        %2461 = vmatmul.mubr.bf16.gmra.mxu0 %v2364
        %v2462 = vpop.f32.mrf.mxu0
        %v2463 = vadd.f32 0.0, %v2462
        %v2464 = vpop.f32.mrf.mxu0
        %v2465 = vpop.f32.mrf.mxu0
        %v2466 = vadd.f32 0.0, %v2465
        %v2467 = vpop.f32.mrf.mxu0
        %2468 = vmatprep.mubr.bf16.mxu0 0
        %2469 = vmatmul.mubr.bf16.gmra.mxu0 %v2365
        %v2470 = vpop.f32.mrf.mxu0
        %v2471 = vadd.f32 0.0, %v2470
        %v2472 = vpop.f32.mrf.mxu0
        %v2473 = vpop.f32.mrf.mxu0
        %v2474 = vadd.f32 0.0, %v2473
        %v2475 = vpop.f32.mrf.mxu0
        %2476 = vmatprep.mubr.bf16.mxu0 0
        %2477 = vmatmul.mubr.bf16.gmra.mxu0 %v2366
        %v2478 = vpop.f32.mrf.mxu0
        %v2479 = vadd.f32 0.0, %v2478
        %v2480 = vpop.f32.mrf.mxu0
        %v2481 = vpop.f32.mrf.mxu0
        %v2482 = vadd.f32 0.0, %v2481
        %v2483 = vpop.f32.mrf.mxu0
        %2484 = vmatprep.mubr.bf16.mxu0 0
        %2485 = vmatmul.mubr.bf16.gmra.mxu0 %v2367
        %v2486 = vpop.f32.mrf.mxu0
        %v2487 = vadd.f32 0.0, %v2486
        %v2488 = vpop.f32.mrf.mxu0
        %v2489 = vpop.f32.mrf.mxu0
        %v2490 = vadd.f32 0.0, %v2489
        %v2491 = vpop.f32.mrf.mxu0
        %2492 = vmatprep.mubr.bf16.mxu0 0
        %2493 = vmatmul.mubr.bf16.gmra.mxu0 %v2368
        %v2494 = vpop.f32.mrf.mxu0
        %v2495 = vadd.f32 0.0, %v2494
        %v2496 = vpop.f32.mrf.mxu0
        %v2497 = vpop.f32.mrf.mxu0
        %v2498 = vadd.f32 0.0, %v2497
        %v2499 = vpop.f32.mrf.mxu0
        %2500 = vmatprep.mubr.bf16.mxu0 0
        %2501 = vmatmul.mubr.bf16.gmra.mxu0 %v2369
        %v2502 = vpop.f32.mrf.mxu0
        %v2503 = vadd.f32 0.0, %v2502
        %v2504 = vpop.f32.mrf.mxu0
        %v2505 = vpop.f32.mrf.mxu0
        %v2506 = vadd.f32 0.0, %v2505
        %v2507 = vpop.f32.mrf.mxu0
        %2508 = vmatprep.mubr.bf16.mxu0 0
        %2509 = vmatmul.mubr.bf16.gmra.mxu0 %v2370
        %v2510 = vpop.f32.mrf.mxu0
        %v2511 = vadd.f32 0.0, %v2510
        %v2512 = vpop.f32.mrf.mxu0
        %v2513 = vpop.f32.mrf.mxu0
        %v2514 = vadd.f32 0.0, %v2513
        %v2515 = vpop.f32.mrf.mxu0
        %2516 = vmatprep.mubr.bf16.mxu0 0
        %2517 = vmatmul.mubr.bf16.gmra.mxu0 %v2371
        %v2518 = vpop.f32.mrf.mxu0
        %v2519 = vadd.f32 0.0, %v2518
        %v2520 = vpop.f32.mrf.mxu0
        %v2521 = vpop.f32.mrf.mxu0
        %v2522 = vadd.f32 0.0, %v2521
        %v2523 = vpop.f32.mrf.mxu0
        %2524 = vdwg.mxu0
        %v2525 = vadd.f32 %v2299, %v2463
        %v2526 = vadd.f32 %v2300, %v2466
        %v2527 = vadd.f32 %v2301, %v2471
        %v2528 = vadd.f32 %v2302, %v2474
        %v2529 = vadd.f32 %v2303, %v2479
        %v2530 = vadd.f32 %v2304, %v2482
        %v2531 = vadd.f32 %v2305, %v2487
        %v2532 = vadd.f32 %v2306, %v2490
        %v2533 = vadd.f32 %v2307, %v2495
        %v2534 = vadd.f32 %v2308, %v2498
        %v2535 = vadd.f32 %v2309, %v2503
        %v2536 = vadd.f32 %v2310, %v2506
        %v2537 = vadd.f32 %v2311, %v2511
        %v2538 = vadd.f32 %v2312, %v2514
        %v2539 = vadd.f32 %v2313, %v2519
        %v2540 = vadd.f32 %v2314, %v2522
        %v2541 = vld [vmem:[%s1904 + $0x4] sm:$0xf]
        %v2542 = vld [vmem:[%s1904 + $0x8] sm:$0xf]
        %v2543 = vld [vmem:[%s1904 + $0xc] sm:$0x1]
        %v2544 = vld [vmem:[%s1904 + $0x14] sm:$0xf]
        %v2545 = vld [vmem:[%s1904 + $0x18] sm:$0xf]
        %v2546 = vld [vmem:[%s1904 + $0x1c] sm:$0x1]
        %v2547 = vld [vmem:[%s1904 + $0x24] sm:$0xf]
        %v2548 = vld [vmem:[%s1904 + $0x28] sm:$0xf]
        %v2549 = vld [vmem:[%s1904 + $0x2c] sm:$0x1]
        %v2550 = vld [vmem:[%s1904 + $0x34] sm:$0xf]
        %v2551 = vld [vmem:[%s1904 + $0x38] sm:$0xf]
        %v2552 = vld [vmem:[%s1904 + $0x3c] sm:$0x1]
        %v2553 = vld [vmem:[%s1904 + $0x44] sm:$0xf]
        %v2554 = vld [vmem:[%s1904 + $0x48] sm:$0xf]
        %v2555 = vld [vmem:[%s1904 + $0x4c] sm:$0x1]
        %v2556 = vld [vmem:[%s1904 + $0x54] sm:$0xf]
        %v2557 = vld [vmem:[%s1904 + $0x58] sm:$0xf]
        %v2558 = vld [vmem:[%s1904 + $0x5c] sm:$0x1]
        %v2559 = vld [vmem:[%s1904 + $0x64] sm:$0xf]
        %v2560 = vld [vmem:[%s1904 + $0x68] sm:$0xf]
        %v2561 = vld [vmem:[%s1904 + $0x6c] sm:$0x1]
        %v2562 = vld [vmem:[%s1904 + $0x74] sm:$0xf]
        %v2563 = vld [vmem:[%s1904 + $0x78] sm:$0xf]
        %v2564 = vld [vmem:[%s1904 + $0x7c] sm:$0x1]
        %s2565 = scalar_lea.vmem [#allocation8], 320
        %v2566 = vld [vmem:[%s2565] sm:$0xf]
        %v2567 = vld [vmem:[%s2565 + $0x4] sm:$0xf]
        %v2568 = vld [vmem:[%s2565 + $0x8] sm:$0xf]
        %v2569 = vld [vmem:[%s2565 + $0xc] sm:$0xf]
        %v2570 = vld [vmem:[%s2565 + $0x10] sm:$0xf]
        %v2571 = vld [vmem:[%s2565 + $0x14] sm:$0xf]
        %v2572 = vld [vmem:[%s2565 + $0x18] sm:$0xf]
        %v2573 = vld [vmem:[%s2565 + $0x1c] sm:$0xf]
        %v2574 = vld [vmem:[%s2565 + $0x20] sm:$0xf]
        %v2575 = vld [vmem:[%s2565 + $0x24] sm:$0xf]
        %v2576 = vld [vmem:[%s2565 + $0x28] sm:$0xf]
        %v2577 = vld [vmem:[%s2565 + $0x2c] sm:$0xf]
        %v2578 = vld [vmem:[%s2565 + $0x30] sm:$0xf]
        %v2579 = vld [vmem:[%s2565 + $0x34] sm:$0xf]
        %v2580 = vld [vmem:[%s2565 + $0x38] sm:$0xf]
        %v2581 = vld [vmem:[%s2565 + $0x3c] sm:$0xf]
        %v2583 = vshrl.u32 %v2541, 16
        %v2585 = vrot.slane %v2583, 4
        %v2586 = vshll.u32 %v2541, 16
        %v2588 = vrot.slane %v2586, 5
        %v2589 = vor.u32 %v2585, %v2588
        %v2590 = vrot.slane %v2589, 4
        %v2592 = vshll.u32 %v2542, 16
        %v2594 = vrot.slane %v2592, 5
        %v2595 = vsel %vm1518, %v2590, %v2594
        %v2596 = vshrl.u32 %v2542, 16
        %v2598 = vrot.slane %v2596, 4
        %v2599 = vor.u32 %v2598, %v2594
        %v2600 = vrot.slane %v2599, 4
        %v2602 = vshll.u32 %v2543, 16
        %v2604 = vrot.slane %v2602, 5
        %v2605 = vsel %vm1518, %v2600, %v2604
        %v2607 = vshrl.u32 %v2544, 16
        %v2609 = vrot.slane %v2607, 4
        %v2610 = vshll.u32 %v2544, 16
        %v2612 = vrot.slane %v2610, 5
        %v2613 = vor.u32 %v2609, %v2612
        %v2614 = vrot.slane %v2613, 4
        %v2616 = vshll.u32 %v2545, 16
        %v2618 = vrot.slane %v2616, 5
        %v2619 = vsel %vm1518, %v2614, %v2618
        %v2620 = vshrl.u32 %v2545, 16
        %v2622 = vrot.slane %v2620, 4
        %v2623 = vor.u32 %v2622, %v2618
        %v2624 = vrot.slane %v2623, 4
        %v2626 = vshll.u32 %v2546, 16
        %v2628 = vrot.slane %v2626, 5
        %v2629 = vsel %vm1518, %v2624, %v2628
        %v2631 = vshrl.u32 %v2547, 16
        %v2633 = vrot.slane %v2631, 4
        %v2634 = vshll.u32 %v2547, 16
        %v2636 = vrot.slane %v2634, 5
        %v2637 = vor.u32 %v2633, %v2636
        %v2638 = vrot.slane %v2637, 4
        %v2640 = vshll.u32 %v2548, 16
        %v2642 = vrot.slane %v2640, 5
        %v2643 = vsel %vm1518, %v2638, %v2642
        %v2644 = vshrl.u32 %v2548, 16
        %v2646 = vrot.slane %v2644, 4
        %v2647 = vor.u32 %v2646, %v2642
        %v2648 = vrot.slane %v2647, 4
        %v2650 = vshll.u32 %v2549, 16
        %v2652 = vrot.slane %v2650, 5
        %v2653 = vsel %vm1518, %v2648, %v2652
        %v2655 = vshrl.u32 %v2550, 16
        %v2657 = vrot.slane %v2655, 4
        %v2658 = vshll.u32 %v2550, 16
        %v2660 = vrot.slane %v2658, 5
        %v2661 = vor.u32 %v2657, %v2660
        %v2662 = vrot.slane %v2661, 4
        %v2664 = vshll.u32 %v2551, 16
        %v2666 = vrot.slane %v2664, 5
        %v2667 = vsel %vm1518, %v2662, %v2666
        %v2668 = vshrl.u32 %v2551, 16
        %v2670 = vrot.slane %v2668, 4
        %v2671 = vor.u32 %v2670, %v2666
        %v2672 = vrot.slane %v2671, 4
        %v2674 = vshll.u32 %v2552, 16
        %v2676 = vrot.slane %v2674, 5
        %v2677 = vsel %vm1518, %v2672, %v2676
        %v2679 = vshrl.u32 %v2553, 16
        %v2681 = vrot.slane %v2679, 4
        %v2682 = vshll.u32 %v2553, 16
        %v2684 = vrot.slane %v2682, 5
        %v2685 = vor.u32 %v2681, %v2684
        %v2686 = vrot.slane %v2685, 4
        %v2688 = vshll.u32 %v2554, 16
        %v2690 = vrot.slane %v2688, 5
        %v2691 = vsel %vm1518, %v2686, %v2690
        %v2692 = vshrl.u32 %v2554, 16
        %v2694 = vrot.slane %v2692, 4
        %v2695 = vor.u32 %v2694, %v2690
        %v2696 = vrot.slane %v2695, 4
        %v2698 = vshll.u32 %v2555, 16
        %v2700 = vrot.slane %v2698, 5
        %v2701 = vsel %vm1518, %v2696, %v2700
        %v2703 = vshrl.u32 %v2556, 16
        %v2705 = vrot.slane %v2703, 4
        %v2706 = vshll.u32 %v2556, 16
        %v2708 = vrot.slane %v2706, 5
        %v2709 = vor.u32 %v2705, %v2708
        %v2710 = vrot.slane %v2709, 4
        %v2712 = vshll.u32 %v2557, 16
        %v2714 = vrot.slane %v2712, 5
        %v2715 = vsel %vm1518, %v2710, %v2714
        %v2716 = vshrl.u32 %v2557, 16
        %v2718 = vrot.slane %v2716, 4
        %v2719 = vor.u32 %v2718, %v2714
        %v2720 = vrot.slane %v2719, 4
        %v2722 = vshll.u32 %v2558, 16
        %v2724 = vrot.slane %v2722, 5
        %v2725 = vsel %vm1518, %v2720, %v2724
        %v2727 = vshrl.u32 %v2559, 16
        %v2729 = vrot.slane %v2727, 4
        %v2730 = vshll.u32 %v2559, 16
        %v2732 = vrot.slane %v2730, 5
        %v2733 = vor.u32 %v2729, %v2732
        %v2734 = vrot.slane %v2733, 4
        %v2736 = vshll.u32 %v2560, 16
        %v2738 = vrot.slane %v2736, 5
        %v2739 = vsel %vm1518, %v2734, %v2738
        %v2740 = vshrl.u32 %v2560, 16
        %v2742 = vrot.slane %v2740, 4
        %v2743 = vor.u32 %v2742, %v2738
        %v2744 = vrot.slane %v2743, 4
        %v2746 = vshll.u32 %v2561, 16
        %v2748 = vrot.slane %v2746, 5
        %v2749 = vsel %vm1518, %v2744, %v2748
        %v2751 = vshrl.u32 %v2562, 16
        %v2753 = vrot.slane %v2751, 4
        %v2754 = vshll.u32 %v2562, 16
        %v2756 = vrot.slane %v2754, 5
        %v2757 = vor.u32 %v2753, %v2756
        %v2758 = vrot.slane %v2757, 4
        %v2760 = vshll.u32 %v2563, 16
        %v2762 = vrot.slane %v2760, 5
        %v2763 = vsel %vm1518, %v2758, %v2762
        %v2764 = vshrl.u32 %v2563, 16
        %v2766 = vrot.slane %v2764, 4
        %v2767 = vor.u32 %v2766, %v2762
        %v2768 = vrot.slane %v2767, 4
        %v2770 = vshll.u32 %v2564, 16
        %v2772 = vrot.slane %v2770, 5
        %v2773 = vsel %vm1518, %v2768, %v2772
        %v2774 = vunpack.c.l.b16 %v2595
        %v2775 = vunpack.c.l.b16 %v2605
        %v2776 = vunpack.c.l.b16 %v2619
        %v2777 = vunpack.c.l.b16 %v2629
        %v2778 = vunpack.c.l.b16 %v2643
        %v2779 = vunpack.c.l.b16 %v2653
        %v2780 = vunpack.c.l.b16 %v2667
        %v2781 = vunpack.c.l.b16 %v2677
        %v2782 = vunpack.c.l.b16 %v2691
        %v2783 = vunpack.c.l.b16 %v2701
        %v2784 = vunpack.c.l.b16 %v2715
        %v2785 = vunpack.c.l.b16 %v2725
        %v2786 = vunpack.c.l.b16 %v2739
        %v2787 = vunpack.c.l.b16 %v2749
        %v2788 = vunpack.c.l.b16 %v2763
        %v2789 = vunpack.c.l.b16 %v2773
        %v2790 = vpack.c.b16 %v2775, %v2774
        %v2791 = vpack.c.b16 %v2777, %v2776
        %v2792 = vpack.c.b16 %v2779, %v2778
        %v2793 = vpack.c.b16 %v2781, %v2780
        %v2794 = vpack.c.b16 %v2783, %v2782
        %v2795 = vpack.c.b16 %v2785, %v2784
        %v2796 = vpack.c.b16 %v2787, %v2786
        %v2797 = vpack.c.b16 %v2789, %v2788
        %v2822 = vunpack.c.l.b16 %v2566
        %v2823 = vunpack.c.l.b16 %v2567
        %v2824 = vunpack.c.l.b16 %v2568
        %v2825 = vunpack.c.l.b16 %v2569
        %v2826 = vunpack.c.l.b16 %v2570
        %v2827 = vunpack.c.l.b16 %v2571
        %v2828 = vunpack.c.l.b16 %v2572
        %v2829 = vunpack.c.l.b16 %v2573
        %v2830 = vunpack.c.l.b16 %v2574
        %v2831 = vunpack.c.l.b16 %v2575
        %v2832 = vunpack.c.l.b16 %v2576
        %v2833 = vunpack.c.l.b16 %v2577
        %v2834 = vunpack.c.l.b16 %v2578
        %v2835 = vunpack.c.l.b16 %v2579
        %v2836 = vunpack.c.l.b16 %v2580
        %v2837 = vunpack.c.l.b16 %v2581
        %v2838 = vpack.c.b16 %v2823, %v2822
        %v2839 = vpack.c.b16 %v2825, %v2824
        %v2840 = vpack.c.b16 %v2827, %v2826
        %v2841 = vpack.c.b16 %v2829, %v2828
        %v2842 = vpack.c.b16 %v2831, %v2830
        %v2843 = vpack.c.b16 %v2833, %v2832
        %v2844 = vpack.c.b16 %v2835, %v2834
        %v2845 = vpack.c.b16 %v2837, %v2836
        %2854 = vmatprep.subr.bf16.mxu0 0
        %2855 = vmatpush1.bf16.msra.mxu0 %v2845
        %2856 = vmatprep.subr.bf16.mxu0 0
        %2857 = vmatpush1.bf16.msra.mxu0 %v2844
        %2858 = vmatprep.subr.bf16.mxu0 0
        %2859 = vmatpush1.bf16.msra.mxu0 %v2843
        %2860 = vmatprep.subr.bf16.mxu0 0
        %2861 = vmatpush1.bf16.msra.mxu0 %v2842
        %2862 = vmatprep.subr.bf16.mxu0 0
        %2863 = vmatpush1.bf16.msra.mxu0 %v2841
        %2864 = vmatprep.subr.bf16.mxu0 0
        %2865 = vmatpush1.bf16.msra.mxu0 %v2840
        %2866 = vmatprep.subr.bf16.mxu0 0
        %2867 = vmatpush1.bf16.msra.mxu0 %v2839
        %2868 = vmatprep.subr.bf16.mxu0 0
        %2869 = vmatpush1.bf16.msra.mxu0 %v2838
        %2870 = vmatprep.subr.bf16.mxu0 0
        %2871 = vmatpush2.bf16.msra.mxu0 0
        %2872 = vmatprep.subr.bf16.mxu0 0
        %2873 = vmatpush2.bf16.msra.mxu0 0
        %2874 = vmatprep.subr.bf16.mxu0 0
        %2875 = vmatpush2.bf16.msra.mxu0 0
        %2876 = vmatprep.subr.bf16.mxu0 0
        %2877 = vmatpush2.bf16.msra.mxu0 0
        %2878 = vmatprep.subr.bf16.mxu0 0
        %2879 = vmatpush2.bf16.msra.mxu0 0
        %2880 = vmatprep.subr.bf16.mxu0 0
        %2881 = vmatpush2.bf16.msra.mxu0 0
        %2882 = vmatprep.subr.bf16.mxu0 0
        %2883 = vmatpush2.bf16.msra.mxu0 0
        %2884 = vmatprep.subr.bf16.mxu0 0
        %2885 = vmatpush2.bf16.msra.mxu0 0
        %2886 = vmatprep.mubr.bf16.mxu0 0
        %2887 = vmatmul.mubr.bf16.gmra.mxu0 %v2790
        %v2888 = vpop.f32.mrf.mxu0
        %v2889 = vadd.f32 0.0, %v2888
        %v2890 = vpop.f32.mrf.mxu0
        %v2891 = vpop.f32.mrf.mxu0
        %v2892 = vadd.f32 0.0, %v2891
        %v2893 = vpop.f32.mrf.mxu0
        %2894 = vmatprep.mubr.bf16.mxu0 0
        %2895 = vmatmul.mubr.bf16.gmra.mxu0 %v2791
        %v2896 = vpop.f32.mrf.mxu0
        %v2897 = vadd.f32 0.0, %v2896
        %v2898 = vpop.f32.mrf.mxu0
        %v2899 = vpop.f32.mrf.mxu0
        %v2900 = vadd.f32 0.0, %v2899
        %v2901 = vpop.f32.mrf.mxu0
        %2902 = vmatprep.mubr.bf16.mxu0 0
        %2903 = vmatmul.mubr.bf16.gmra.mxu0 %v2792
        %v2904 = vpop.f32.mrf.mxu0
        %v2905 = vadd.f32 0.0, %v2904
        %v2906 = vpop.f32.mrf.mxu0
        %v2907 = vpop.f32.mrf.mxu0
        %v2908 = vadd.f32 0.0, %v2907
        %v2909 = vpop.f32.mrf.mxu0
        %2910 = vmatprep.mubr.bf16.mxu0 0
        %2911 = vmatmul.mubr.bf16.gmra.mxu0 %v2793
        %v2912 = vpop.f32.mrf.mxu0
        %v2913 = vadd.f32 0.0, %v2912
        %v2914 = vpop.f32.mrf.mxu0
        %v2915 = vpop.f32.mrf.mxu0
        %v2916 = vadd.f32 0.0, %v2915
        %v2917 = vpop.f32.mrf.mxu0
        %2918 = vmatprep.mubr.bf16.mxu0 0
        %2919 = vmatmul.mubr.bf16.gmra.mxu0 %v2794
        %v2920 = vpop.f32.mrf.mxu0
        %v2921 = vadd.f32 0.0, %v2920
        %v2922 = vpop.f32.mrf.mxu0
        %v2923 = vpop.f32.mrf.mxu0
        %v2924 = vadd.f32 0.0, %v2923
        %v2925 = vpop.f32.mrf.mxu0
        %2926 = vmatprep.mubr.bf16.mxu0 0
        %2927 = vmatmul.mubr.bf16.gmra.mxu0 %v2795
        %v2928 = vpop.f32.mrf.mxu0
        %v2929 = vadd.f32 0.0, %v2928
        %v2930 = vpop.f32.mrf.mxu0
        %v2931 = vpop.f32.mrf.mxu0
        %v2932 = vadd.f32 0.0, %v2931
        %v2933 = vpop.f32.mrf.mxu0
        %2934 = vmatprep.mubr.bf16.mxu0 0
        %2935 = vmatmul.mubr.bf16.gmra.mxu0 %v2796
        %v2936 = vpop.f32.mrf.mxu0
        %v2937 = vadd.f32 0.0, %v2936
        %v2938 = vpop.f32.mrf.mxu0
        %v2939 = vpop.f32.mrf.mxu0
        %v2940 = vadd.f32 0.0, %v2939
        %v2941 = vpop.f32.mrf.mxu0
        %2942 = vmatprep.mubr.bf16.mxu0 0
        %2943 = vmatmul.mubr.bf16.gmra.mxu0 %v2797
        %v2944 = vpop.f32.mrf.mxu0
        %v2945 = vadd.f32 0.0, %v2944
        %v2946 = vpop.f32.mrf.mxu0
        %v2947 = vpop.f32.mrf.mxu0
        %v2948 = vadd.f32 0.0, %v2947
        %v2949 = vpop.f32.mrf.mxu0
        %2950 = vdwg.mxu0
        %v2951 = vadd.f32 %v2525, %v2889
        %v2952 = vadd.f32 %v2526, %v2892
        %v2953 = vadd.f32 %v2527, %v2897
        %v2954 = vadd.f32 %v2528, %v2900
        %v2955 = vadd.f32 %v2529, %v2905
        %v2956 = vadd.f32 %v2530, %v2908
        %v2957 = vadd.f32 %v2531, %v2913
        %v2958 = vadd.f32 %v2532, %v2916
        %v2959 = vadd.f32 %v2533, %v2921
        %v2960 = vadd.f32 %v2534, %v2924
        %v2961 = vadd.f32 %v2535, %v2929
        %v2962 = vadd.f32 %v2536, %v2932
        %v2963 = vadd.f32 %v2537, %v2937
        %v2964 = vadd.f32 %v2538, %v2940
        %v2965 = vadd.f32 %v2539, %v2945
        %v2966 = vadd.f32 %v2540, %v2948
        %s2967 = scalar_lea.vmem [#allocation3], 32
        %v2968 = vld [vmem:[%s2967] sm:$0x8]
        %v2969 = vld [vmem:[%s2967 + $0x4] sm:$0xf]
        %v2970 = vld [vmem:[%s2967 + $0x8] sm:$0xf]
        %v2971 = vld [vmem:[%s2967 + $0x10] sm:$0x8]
        %v2972 = vld [vmem:[%s2967 + $0x14] sm:$0xf]
        %v2973 = vld [vmem:[%s2967 + $0x18] sm:$0xf]
        %v2974 = vld [vmem:[%s2967 + $0x20] sm:$0x8]
        %v2975 = vld [vmem:[%s2967 + $0x24] sm:$0xf]
        %v2976 = vld [vmem:[%s2967 + $0x28] sm:$0xf]
        %v2977 = vld [vmem:[%s2967 + $0x30] sm:$0x8]
        %v2978 = vld [vmem:[%s2967 + $0x34] sm:$0xf]
        %v2979 = vld [vmem:[%s2967 + $0x38] sm:$0xf]
        %v2980 = vld [vmem:[%s2967 + $0x40] sm:$0x8]
        %v2981 = vld [vmem:[%s2967 + $0x44] sm:$0xf]
        %v2982 = vld [vmem:[%s2967 + $0x48] sm:$0xf]
        %v2983 = vld [vmem:[%s2967 + $0x50] sm:$0x8]
        %v2984 = vld [vmem:[%s2967 + $0x54] sm:$0xf]
        %v2985 = vld [vmem:[%s2967 + $0x58] sm:$0xf]
        %v2986 = vld [vmem:[%s2967 + $0x60] sm:$0x8]
        %v2987 = vld [vmem:[%s2967 + $0x64] sm:$0xf]
        %v2988 = vld [vmem:[%s2967 + $0x68] sm:$0xf]
        %v2989 = vld [vmem:[%s2967 + $0x70] sm:$0x8]
        %v2990 = vld [vmem:[%s2967 + $0x74] sm:$0xf]
        %v2991 = vld [vmem:[%s2967 + $0x78] sm:$0xf]
        %s2992 = scalar_lea.vmem [#allocation8], 384
        %v2993 = vld [vmem:[%s2992] sm:$0xf]
        %v2994 = vld [vmem:[%s2992 + $0x4] sm:$0xf]
        %v2995 = vld [vmem:[%s2992 + $0x8] sm:$0xf]
        %v2996 = vld [vmem:[%s2992 + $0xc] sm:$0xf]
        %v2997 = vld [vmem:[%s2992 + $0x10] sm:$0xf]
        %v2998 = vld [vmem:[%s2992 + $0x14] sm:$0xf]
        %v2999 = vld [vmem:[%s2992 + $0x18] sm:$0xf]
        %v3000 = vld [vmem:[%s2992 + $0x1c] sm:$0xf]
        %v3001 = vld [vmem:[%s2992 + $0x20] sm:$0xf]
        %v3002 = vld [vmem:[%s2992 + $0x24] sm:$0xf]
        %v3003 = vld [vmem:[%s2992 + $0x28] sm:$0xf]
        %v3004 = vld [vmem:[%s2992 + $0x2c] sm:$0xf]
        %v3005 = vld [vmem:[%s2992 + $0x30] sm:$0xf]
        %v3006 = vld [vmem:[%s2992 + $0x34] sm:$0xf]
        %v3007 = vld [vmem:[%s2992 + $0x38] sm:$0xf]
        %v3008 = vld [vmem:[%s2992 + $0x3c] sm:$0xf]
        %v3010 = vshrl.u32 %v2968, 16
        %v3012 = vrot.slane %v3010, 7
        %v3013 = vrot.slane %v3012, 4
        %v3015 = vshrl.u32 %v2969, 16
        %v3017 = vrot.slane %v3015, 7
        %v3018 = vshll.u32 %v2969, 16
        %v3020 = vor.u32 %v3017, %v3018
        %v3021 = vsel %vm1121, %v3013, %v3020
        %v3022 = vrot.slane %v3017, 4
        %v3024 = vshrl.u32 %v2970, 16
        %v3026 = vrot.slane %v3024, 7
        %v3027 = vshll.u32 %v2970, 16
        %v3029 = vor.u32 %v3026, %v3027
        %v3030 = vsel %vm1121, %v3022, %v3029
        %v3032 = vshrl.u32 %v2971, 16
        %v3034 = vrot.slane %v3032, 7
        %v3035 = vrot.slane %v3034, 4
        %v3037 = vshrl.u32 %v2972, 16
        %v3039 = vrot.slane %v3037, 7
        %v3040 = vshll.u32 %v2972, 16
        %v3042 = vor.u32 %v3039, %v3040
        %v3043 = vsel %vm1121, %v3035, %v3042
        %v3044 = vrot.slane %v3039, 4
        %v3046 = vshrl.u32 %v2973, 16
        %v3048 = vrot.slane %v3046, 7
        %v3049 = vshll.u32 %v2973, 16
        %v3051 = vor.u32 %v3048, %v3049
        %v3052 = vsel %vm1121, %v3044, %v3051
        %v3054 = vshrl.u32 %v2974, 16
        %v3056 = vrot.slane %v3054, 7
        %v3057 = vrot.slane %v3056, 4
        %v3059 = vshrl.u32 %v2975, 16
        %v3061 = vrot.slane %v3059, 7
        %v3062 = vshll.u32 %v2975, 16
        %v3064 = vor.u32 %v3061, %v3062
        %v3065 = vsel %vm1121, %v3057, %v3064
        %v3066 = vrot.slane %v3061, 4
        %v3068 = vshrl.u32 %v2976, 16
        %v3070 = vrot.slane %v3068, 7
        %v3071 = vshll.u32 %v2976, 16
        %v3073 = vor.u32 %v3070, %v3071
        %v3074 = vsel %vm1121, %v3066, %v3073
        %v3076 = vshrl.u32 %v2977, 16
        %v3078 = vrot.slane %v3076, 7
        %v3079 = vrot.slane %v3078, 4
        %v3081 = vshrl.u32 %v2978, 16
        %v3083 = vrot.slane %v3081, 7
        %v3084 = vshll.u32 %v2978, 16
        %v3086 = vor.u32 %v3083, %v3084
        %v3087 = vsel %vm1121, %v3079, %v3086
        %v3088 = vrot.slane %v3083, 4
        %v3090 = vshrl.u32 %v2979, 16
        %v3092 = vrot.slane %v3090, 7
        %v3093 = vshll.u32 %v2979, 16
        %v3095 = vor.u32 %v3092, %v3093
        %v3096 = vsel %vm1121, %v3088, %v3095
        %v3098 = vshrl.u32 %v2980, 16
        %v3100 = vrot.slane %v3098, 7
        %v3101 = vrot.slane %v3100, 4
        %v3103 = vshrl.u32 %v2981, 16
        %v3105 = vrot.slane %v3103, 7
        %v3106 = vshll.u32 %v2981, 16
        %v3108 = vor.u32 %v3105, %v3106
        %v3109 = vsel %vm1121, %v3101, %v3108
        %v3110 = vrot.slane %v3105, 4
        %v3112 = vshrl.u32 %v2982, 16
        %v3114 = vrot.slane %v3112, 7
        %v3115 = vshll.u32 %v2982, 16
        %v3117 = vor.u32 %v3114, %v3115
        %v3118 = vsel %vm1121, %v3110, %v3117
        %v3120 = vshrl.u32 %v2983, 16
        %v3122 = vrot.slane %v3120, 7
        %v3123 = vrot.slane %v3122, 4
        %v3125 = vshrl.u32 %v2984, 16
        %v3127 = vrot.slane %v3125, 7
        %v3128 = vshll.u32 %v2984, 16
        %v3130 = vor.u32 %v3127, %v3128
        %v3131 = vsel %vm1121, %v3123, %v3130
        %v3132 = vrot.slane %v3127, 4
        %v3134 = vshrl.u32 %v2985, 16
        %v3136 = vrot.slane %v3134, 7
        %v3137 = vshll.u32 %v2985, 16
        %v3139 = vor.u32 %v3136, %v3137
        %v3140 = vsel %vm1121, %v3132, %v3139
        %v3142 = vshrl.u32 %v2986, 16
        %v3144 = vrot.slane %v3142, 7
        %v3145 = vrot.slane %v3144, 4
        %v3147 = vshrl.u32 %v2987, 16
        %v3149 = vrot.slane %v3147, 7
        %v3150 = vshll.u32 %v2987, 16
        %v3152 = vor.u32 %v3149, %v3150
        %v3153 = vsel %vm1121, %v3145, %v3152
        %v3154 = vrot.slane %v3149, 4
        %v3156 = vshrl.u32 %v2988, 16
        %v3158 = vrot.slane %v3156, 7
        %v3159 = vshll.u32 %v2988, 16
        %v3161 = vor.u32 %v3158, %v3159
        %v3162 = vsel %vm1121, %v3154, %v3161
        %v3164 = vshrl.u32 %v2989, 16
        %v3166 = vrot.slane %v3164, 7
        %v3167 = vrot.slane %v3166, 4
        %v3169 = vshrl.u32 %v2990, 16
        %v3171 = vrot.slane %v3169, 7
        %v3172 = vshll.u32 %v2990, 16
        %v3174 = vor.u32 %v3171, %v3172
        %v3175 = vsel %vm1121, %v3167, %v3174
        %v3176 = vrot.slane %v3171, 4
        %v3178 = vshrl.u32 %v2991, 16
        %v3180 = vrot.slane %v3178, 7
        %v3181 = vshll.u32 %v2991, 16
        %v3183 = vor.u32 %v3180, %v3181
        %v3184 = vsel %vm1121, %v3176, %v3183
        %v3185 = vunpack.c.l.b16 %v3021
        %v3186 = vunpack.c.l.b16 %v3030
        %v3187 = vunpack.c.l.b16 %v3043
        %v3188 = vunpack.c.l.b16 %v3052
        %v3189 = vunpack.c.l.b16 %v3065
        %v3190 = vunpack.c.l.b16 %v3074
        %v3191 = vunpack.c.l.b16 %v3087
        %v3192 = vunpack.c.l.b16 %v3096
        %v3193 = vunpack.c.l.b16 %v3109
        %v3194 = vunpack.c.l.b16 %v3118
        %v3195 = vunpack.c.l.b16 %v3131
        %v3196 = vunpack.c.l.b16 %v3140
        %v3197 = vunpack.c.l.b16 %v3153
        %v3198 = vunpack.c.l.b16 %v3162
        %v3199 = vunpack.c.l.b16 %v3175
        %v3200 = vunpack.c.l.b16 %v3184
        %v3201 = vpack.c.b16 %v3186, %v3185
        %v3202 = vpack.c.b16 %v3188, %v3187
        %v3203 = vpack.c.b16 %v3190, %v3189
        %v3204 = vpack.c.b16 %v3192, %v3191
        %v3205 = vpack.c.b16 %v3194, %v3193
        %v3206 = vpack.c.b16 %v3196, %v3195
        %v3207 = vpack.c.b16 %v3198, %v3197
        %v3208 = vpack.c.b16 %v3200, %v3199
        %v3233 = vunpack.c.l.b16 %v2993
        %v3234 = vunpack.c.l.b16 %v2994
        %v3235 = vunpack.c.l.b16 %v2995
        %v3236 = vunpack.c.l.b16 %v2996
        %v3237 = vunpack.c.l.b16 %v2997
        %v3238 = vunpack.c.l.b16 %v2998
        %v3239 = vunpack.c.l.b16 %v2999
        %v3240 = vunpack.c.l.b16 %v3000
        %v3241 = vunpack.c.l.b16 %v3001
        %v3242 = vunpack.c.l.b16 %v3002
        %v3243 = vunpack.c.l.b16 %v3003
        %v3244 = vunpack.c.l.b16 %v3004
        %v3245 = vunpack.c.l.b16 %v3005
        %v3246 = vunpack.c.l.b16 %v3006
        %v3247 = vunpack.c.l.b16 %v3007
        %v3248 = vunpack.c.l.b16 %v3008
        %v3249 = vpack.c.b16 %v3234, %v3233
        %v3250 = vpack.c.b16 %v3236, %v3235
        %v3251 = vpack.c.b16 %v3238, %v3237
        %v3252 = vpack.c.b16 %v3240, %v3239
        %v3253 = vpack.c.b16 %v3242, %v3241
        %v3254 = vpack.c.b16 %v3244, %v3243
        %v3255 = vpack.c.b16 %v3246, %v3245
        %v3256 = vpack.c.b16 %v3248, %v3247
        %3265 = vmatprep.subr.bf16.mxu0 0
        %3266 = vmatpush1.bf16.msra.mxu0 %v3256
        %3267 = vmatprep.subr.bf16.mxu0 0
        %3268 = vmatpush1.bf16.msra.mxu0 %v3255
        %3269 = vmatprep.subr.bf16.mxu0 0
        %3270 = vmatpush1.bf16.msra.mxu0 %v3254
        %3271 = vmatprep.subr.bf16.mxu0 0
        %3272 = vmatpush1.bf16.msra.mxu0 %v3253
        %3273 = vmatprep.subr.bf16.mxu0 0
        %3274 = vmatpush1.bf16.msra.mxu0 %v3252
        %3275 = vmatprep.subr.bf16.mxu0 0
        %3276 = vmatpush1.bf16.msra.mxu0 %v3251
        %3277 = vmatprep.subr.bf16.mxu0 0
        %3278 = vmatpush1.bf16.msra.mxu0 %v3250
        %3279 = vmatprep.subr.bf16.mxu0 0
        %3280 = vmatpush1.bf16.msra.mxu0 %v3249
        %3281 = vmatprep.subr.bf16.mxu0 0
        %3282 = vmatpush2.bf16.msra.mxu0 0
        %3283 = vmatprep.subr.bf16.mxu0 0
        %3284 = vmatpush2.bf16.msra.mxu0 0
        %3285 = vmatprep.subr.bf16.mxu0 0
        %3286 = vmatpush2.bf16.msra.mxu0 0
        %3287 = vmatprep.subr.bf16.mxu0 0
        %3288 = vmatpush2.bf16.msra.mxu0 0
        %3289 = vmatprep.subr.bf16.mxu0 0
        %3290 = vmatpush2.bf16.msra.mxu0 0
        %3291 = vmatprep.subr.bf16.mxu0 0
        %3292 = vmatpush2.bf16.msra.mxu0 0
        %3293 = vmatprep.subr.bf16.mxu0 0
        %3294 = vmatpush2.bf16.msra.mxu0 0
        %3295 = vmatprep.subr.bf16.mxu0 0
        %3296 = vmatpush2.bf16.msra.mxu0 0
        %3297 = vmatprep.mubr.bf16.mxu0 0
        %3298 = vmatmul.mubr.bf16.gmra.mxu0 %v3201
        %v3299 = vpop.f32.mrf.mxu0
        %v3300 = vadd.f32 0.0, %v3299
        %v3301 = vpop.f32.mrf.mxu0
        %v3302 = vpop.f32.mrf.mxu0
        %v3303 = vadd.f32 0.0, %v3302
        %v3304 = vpop.f32.mrf.mxu0
        %3305 = vmatprep.mubr.bf16.mxu0 0
        %3306 = vmatmul.mubr.bf16.gmra.mxu0 %v3202
        %v3307 = vpop.f32.mrf.mxu0
        %v3308 = vadd.f32 0.0, %v3307
        %v3309 = vpop.f32.mrf.mxu0
        %v3310 = vpop.f32.mrf.mxu0
        %v3311 = vadd.f32 0.0, %v3310
        %v3312 = vpop.f32.mrf.mxu0
        %3313 = vmatprep.mubr.bf16.mxu0 0
        %3314 = vmatmul.mubr.bf16.gmra.mxu0 %v3203
        %v3315 = vpop.f32.mrf.mxu0
        %v3316 = vadd.f32 0.0, %v3315
        %v3317 = vpop.f32.mrf.mxu0
        %v3318 = vpop.f32.mrf.mxu0
        %v3319 = vadd.f32 0.0, %v3318
        %v3320 = vpop.f32.mrf.mxu0
        %3321 = vmatprep.mubr.bf16.mxu0 0
        %3322 = vmatmul.mubr.bf16.gmra.mxu0 %v3204
        %v3323 = vpop.f32.mrf.mxu0
        %v3324 = vadd.f32 0.0, %v3323
        %v3325 = vpop.f32.mrf.mxu0
        %v3326 = vpop.f32.mrf.mxu0
        %v3327 = vadd.f32 0.0, %v3326
        %v3328 = vpop.f32.mrf.mxu0
        %3329 = vmatprep.mubr.bf16.mxu0 0
        %3330 = vmatmul.mubr.bf16.gmra.mxu0 %v3205
        %v3331 = vpop.f32.mrf.mxu0
        %v3332 = vadd.f32 0.0, %v3331
        %v3333 = vpop.f32.mrf.mxu0
        %v3334 = vpop.f32.mrf.mxu0
        %v3335 = vadd.f32 0.0, %v3334
        %v3336 = vpop.f32.mrf.mxu0
        %3337 = vmatprep.mubr.bf16.mxu0 0
        %3338 = vmatmul.mubr.bf16.gmra.mxu0 %v3206
        %v3339 = vpop.f32.mrf.mxu0
        %v3340 = vadd.f32 0.0, %v3339
        %v3341 = vpop.f32.mrf.mxu0
        %v3342 = vpop.f32.mrf.mxu0
        %v3343 = vadd.f32 0.0, %v3342
        %v3344 = vpop.f32.mrf.mxu0
        %3345 = vmatprep.mubr.bf16.mxu0 0
        %3346 = vmatmul.mubr.bf16.gmra.mxu0 %v3207
        %v3347 = vpop.f32.mrf.mxu0
        %v3348 = vadd.f32 0.0, %v3347
        %v3349 = vpop.f32.mrf.mxu0
        %v3350 = vpop.f32.mrf.mxu0
        %v3351 = vadd.f32 0.0, %v3350
        %v3352 = vpop.f32.mrf.mxu0
        %3353 = vmatprep.mubr.bf16.mxu0 0
        %3354 = vmatmul.mubr.bf16.gmra.mxu0 %v3208
        %v3355 = vpop.f32.mrf.mxu0
        %v3356 = vadd.f32 0.0, %v3355
        %v3357 = vpop.f32.mrf.mxu0
        %v3358 = vpop.f32.mrf.mxu0
        %v3359 = vadd.f32 0.0, %v3358
        %v3360 = vpop.f32.mrf.mxu0
        %3361 = vdwg.mxu0
        %v3362 = vadd.f32 %v2951, %v3300
        %v3363 = vadd.f32 %v2952, %v3303
        %v3364 = vadd.f32 %v2953, %v3308
        %v3365 = vadd.f32 %v2954, %v3311
        %v3366 = vadd.f32 %v2955, %v3316
        %v3367 = vadd.f32 %v2956, %v3319
        %v3368 = vadd.f32 %v2957, %v3324
        %v3369 = vadd.f32 %v2958, %v3327
        %v3370 = vadd.f32 %v2959, %v3332
        %v3371 = vadd.f32 %v2960, %v3335
        %v3372 = vadd.f32 %v2961, %v3340
        %v3373 = vadd.f32 %v2962, %v3343
        %v3374 = vadd.f32 %v2963, %v3348
        %v3375 = vadd.f32 %v2964, %v3351
        %v3376 = vadd.f32 %v2965, %v3356
        %v3377 = vadd.f32 %v2966, %v3359
        %s3378 = scalar_lea.vmem [#allocation8], 448
        %v3379 = vld [vmem:[%s3378] sm:$0xf]
        %v3380 = vld [vmem:[%s3378 + $0x4] sm:$0xf]
        %v3381 = vld [vmem:[%s3378 + $0x8] sm:$0xf]
        %v3382 = vld [vmem:[%s3378 + $0xc] sm:$0xf]
        %v3383 = vld [vmem:[%s3378 + $0x10] sm:$0xf]
        %v3384 = vld [vmem:[%s3378 + $0x14] sm:$0xf]
        %v3385 = vld [vmem:[%s3378 + $0x18] sm:$0xf]
        %v3386 = vld [vmem:[%s3378 + $0x1c] sm:$0xf]
        %v3387 = vld [vmem:[%s3378 + $0x20] sm:$0xf]
        %v3388 = vld [vmem:[%s3378 + $0x24] sm:$0xf]
        %v3389 = vld [vmem:[%s3378 + $0x28] sm:$0xf]
        %v3390 = vld [vmem:[%s3378 + $0x2c] sm:$0xf]
        %v3391 = vld [vmem:[%s3378 + $0x30] sm:$0xf]
        %v3392 = vld [vmem:[%s3378 + $0x34] sm:$0xf]
        %v3393 = vld [vmem:[%s3378 + $0x38] sm:$0xf]
        %v3394 = vld [vmem:[%s3378 + $0x3c] sm:$0xf]
        %v3411 = vunpack.c.l.b16 %v2969
        %v3412 = vunpack.c.l.b16 %v2970
        %v3413 = vunpack.c.l.b16 %v2972
        %v3414 = vunpack.c.l.b16 %v2973
        %v3415 = vunpack.c.l.b16 %v2975
        %v3416 = vunpack.c.l.b16 %v2976
        %v3417 = vunpack.c.l.b16 %v2978
        %v3418 = vunpack.c.l.b16 %v2979
        %v3419 = vunpack.c.l.b16 %v2981
        %v3420 = vunpack.c.l.b16 %v2982
        %v3421 = vunpack.c.l.b16 %v2984
        %v3422 = vunpack.c.l.b16 %v2985
        %v3423 = vunpack.c.l.b16 %v2987
        %v3424 = vunpack.c.l.b16 %v2988
        %v3425 = vunpack.c.l.b16 %v2990
        %v3426 = vunpack.c.l.b16 %v2991
        %v3427 = vpack.c.b16 %v3412, %v3411
        %v3428 = vpack.c.b16 %v3414, %v3413
        %v3429 = vpack.c.b16 %v3416, %v3415
        %v3430 = vpack.c.b16 %v3418, %v3417
        %v3431 = vpack.c.b16 %v3420, %v3419
        %v3432 = vpack.c.b16 %v3422, %v3421
        %v3433 = vpack.c.b16 %v3424, %v3423
        %v3434 = vpack.c.b16 %v3426, %v3425
        %v3459 = vunpack.c.l.b16 %v3379
        %v3460 = vunpack.c.l.b16 %v3380
        %v3461 = vunpack.c.l.b16 %v3381
        %v3462 = vunpack.c.l.b16 %v3382
        %v3463 = vunpack.c.l.b16 %v3383
        %v3464 = vunpack.c.l.b16 %v3384
        %v3465 = vunpack.c.l.b16 %v3385
        %v3466 = vunpack.c.l.b16 %v3386
        %v3467 = vunpack.c.l.b16 %v3387
        %v3468 = vunpack.c.l.b16 %v3388
        %v3469 = vunpack.c.l.b16 %v3389
        %v3470 = vunpack.c.l.b16 %v3390
        %v3471 = vunpack.c.l.b16 %v3391
        %v3472 = vunpack.c.l.b16 %v3392
        %v3473 = vunpack.c.l.b16 %v3393
        %v3474 = vunpack.c.l.b16 %v3394
        %v3475 = vpack.c.b16 %v3460, %v3459
        %v3476 = vpack.c.b16 %v3462, %v3461
        %v3477 = vpack.c.b16 %v3464, %v3463
        %v3478 = vpack.c.b16 %v3466, %v3465
        %v3479 = vpack.c.b16 %v3468, %v3467
        %v3480 = vpack.c.b16 %v3470, %v3469
        %v3481 = vpack.c.b16 %v3472, %v3471
        %v3482 = vpack.c.b16 %v3474, %v3473
        %3491 = vmatprep.subr.bf16.mxu0 0
        %3492 = vmatpush1.bf16.msra.mxu0 %v3482
        %3493 = vmatprep.subr.bf16.mxu0 0
        %3494 = vmatpush1.bf16.msra.mxu0 %v3481
        %3495 = vmatprep.subr.bf16.mxu0 0
        %3496 = vmatpush1.bf16.msra.mxu0 %v3480
        %3497 = vmatprep.subr.bf16.mxu0 0
        %3498 = vmatpush1.bf16.msra.mxu0 %v3479
        %3499 = vmatprep.subr.bf16.mxu0 0
        %3500 = vmatpush1.bf16.msra.mxu0 %v3478
        %3501 = vmatprep.subr.bf16.mxu0 0
        %3502 = vmatpush1.bf16.msra.mxu0 %v3477
        %3503 = vmatprep.subr.bf16.mxu0 0
        %3504 = vmatpush1.bf16.msra.mxu0 %v3476
        %3505 = vmatprep.subr.bf16.mxu0 0
        %3506 = vmatpush1.bf16.msra.mxu0 %v3475
        %3507 = vmatprep.subr.bf16.mxu0 0
        %3508 = vmatpush2.bf16.msra.mxu0 0
        %3509 = vmatprep.subr.bf16.mxu0 0
        %3510 = vmatpush2.bf16.msra.mxu0 0
        %3511 = vmatprep.subr.bf16.mxu0 0
        %3512 = vmatpush2.bf16.msra.mxu0 0
        %3513 = vmatprep.subr.bf16.mxu0 0
        %3514 = vmatpush2.bf16.msra.mxu0 0
        %3515 = vmatprep.subr.bf16.mxu0 0
        %3516 = vmatpush2.bf16.msra.mxu0 0
        %3517 = vmatprep.subr.bf16.mxu0 0
        %3518 = vmatpush2.bf16.msra.mxu0 0
        %3519 = vmatprep.subr.bf16.mxu0 0
        %3520 = vmatpush2.bf16.msra.mxu0 0
        %3521 = vmatprep.subr.bf16.mxu0 0
        %3522 = vmatpush2.bf16.msra.mxu0 0
        %3523 = vmatprep.mubr.bf16.mxu0 0
        %3524 = vmatmul.mubr.bf16.gmra.mxu0 %v3427
        %v3525 = vpop.f32.mrf.mxu0
        %v3526 = vadd.f32 0.0, %v3525
        %v3527 = vpop.f32.mrf.mxu0
        %v3528 = vpop.f32.mrf.mxu0
        %v3529 = vadd.f32 0.0, %v3528
        %v3530 = vpop.f32.mrf.mxu0
        %3531 = vmatprep.mubr.bf16.mxu0 0
        %3532 = vmatmul.mubr.bf16.gmra.mxu0 %v3428
        %v3533 = vpop.f32.mrf.mxu0
        %v3534 = vadd.f32 0.0, %v3533
        %v3535 = vpop.f32.mrf.mxu0
        %v3536 = vpop.f32.mrf.mxu0
        %v3537 = vadd.f32 0.0, %v3536
        %v3538 = vpop.f32.mrf.mxu0
        %3539 = vmatprep.mubr.bf16.mxu0 0
        %3540 = vmatmul.mubr.bf16.gmra.mxu0 %v3429
        %v3541 = vpop.f32.mrf.mxu0
        %v3542 = vadd.f32 0.0, %v3541
        %v3543 = vpop.f32.mrf.mxu0
        %v3544 = vpop.f32.mrf.mxu0
        %v3545 = vadd.f32 0.0, %v3544
        %v3546 = vpop.f32.mrf.mxu0
        %3547 = vmatprep.mubr.bf16.mxu0 0
        %3548 = vmatmul.mubr.bf16.gmra.mxu0 %v3430
        %v3549 = vpop.f32.mrf.mxu0
        %v3550 = vadd.f32 0.0, %v3549
        %v3551 = vpop.f32.mrf.mxu0
        %v3552 = vpop.f32.mrf.mxu0
        %v3553 = vadd.f32 0.0, %v3552
        %v3554 = vpop.f32.mrf.mxu0
        %3555 = vmatprep.mubr.bf16.mxu0 0
        %3556 = vmatmul.mubr.bf16.gmra.mxu0 %v3431
        %v3557 = vpop.f32.mrf.mxu0
        %v3558 = vadd.f32 0.0, %v3557
        %v3559 = vpop.f32.mrf.mxu0
        %v3560 = vpop.f32.mrf.mxu0
        %v3561 = vadd.f32 0.0, %v3560
        %v3562 = vpop.f32.mrf.mxu0
        %3563 = vmatprep.mubr.bf16.mxu0 0
        %3564 = vmatmul.mubr.bf16.gmra.mxu0 %v3432
        %v3565 = vpop.f32.mrf.mxu0
        %v3566 = vadd.f32 0.0, %v3565
        %v3567 = vpop.f32.mrf.mxu0
        %v3568 = vpop.f32.mrf.mxu0
        %v3569 = vadd.f32 0.0, %v3568
        %v3570 = vpop.f32.mrf.mxu0
        %3571 = vmatprep.mubr.bf16.mxu0 0
        %3572 = vmatmul.mubr.bf16.gmra.mxu0 %v3433
        %v3573 = vpop.f32.mrf.mxu0
        %v3574 = vadd.f32 0.0, %v3573
        %v3575 = vpop.f32.mrf.mxu0
        %v3576 = vpop.f32.mrf.mxu0
        %v3577 = vadd.f32 0.0, %v3576
        %v3578 = vpop.f32.mrf.mxu0
        %3579 = vmatprep.mubr.bf16.mxu0 0
        %3580 = vmatmul.mubr.bf16.gmra.mxu0 %v3434
        %v3581 = vpop.f32.mrf.mxu0
        %v3582 = vadd.f32 0.0, %v3581
        %v3583 = vpop.f32.mrf.mxu0
        %v3584 = vpop.f32.mrf.mxu0
        %v3585 = vadd.f32 0.0, %v3584
        %v3586 = vpop.f32.mrf.mxu0
        %3587 = vdwg.mxu0
        %v3588 = vadd.f32 %v3362, %v3526
        %v3589 = vadd.f32 %v3363, %v3529
        %v3590 = vadd.f32 %v3364, %v3534
        %v3591 = vadd.f32 %v3365, %v3537
        %v3592 = vadd.f32 %v3366, %v3542
        %v3593 = vadd.f32 %v3367, %v3545
        %v3594 = vadd.f32 %v3368, %v3550
        %v3595 = vadd.f32 %v3369, %v3553
        %v3596 = vadd.f32 %v3370, %v3558
        %v3597 = vadd.f32 %v3371, %v3561
        %v3598 = vadd.f32 %v3372, %v3566
        %v3599 = vadd.f32 %v3373, %v3569
        %v3600 = vadd.f32 %v3374, %v3574
        %v3601 = vadd.f32 %v3375, %v3577
        %v3602 = vadd.f32 %v3376, %v3582
        %v3603 = vadd.f32 %v3377, %v3585
        %v3604 = vld [vmem:[%s2967 + $0x4] sm:$0xf]
        %v3605 = vld [vmem:[%s2967 + $0x8] sm:$0xf]
        %v3606 = vld [vmem:[%s2967 + $0xc] sm:$0x1]
        %v3607 = vld [vmem:[%s2967 + $0x14] sm:$0xf]
        %v3608 = vld [vmem:[%s2967 + $0x18] sm:$0xf]
        %v3609 = vld [vmem:[%s2967 + $0x1c] sm:$0x1]
        %v3610 = vld [vmem:[%s2967 + $0x24] sm:$0xf]
        %v3611 = vld [vmem:[%s2967 + $0x28] sm:$0xf]
        %v3612 = vld [vmem:[%s2967 + $0x2c] sm:$0x1]
        %v3613 = vld [vmem:[%s2967 + $0x34] sm:$0xf]
        %v3614 = vld [vmem:[%s2967 + $0x38] sm:$0xf]
        %v3615 = vld [vmem:[%s2967 + $0x3c] sm:$0x1]
        %v3616 = vld [vmem:[%s2967 + $0x44] sm:$0xf]
        %v3617 = vld [vmem:[%s2967 + $0x48] sm:$0xf]
        %v3618 = vld [vmem:[%s2967 + $0x4c] sm:$0x1]
        %v3619 = vld [vmem:[%s2967 + $0x54] sm:$0xf]
        %v3620 = vld [vmem:[%s2967 + $0x58] sm:$0xf]
        %v3621 = vld [vmem:[%s2967 + $0x5c] sm:$0x1]
        %v3622 = vld [vmem:[%s2967 + $0x64] sm:$0xf]
        %v3623 = vld [vmem:[%s2967 + $0x68] sm:$0xf]
        %v3624 = vld [vmem:[%s2967 + $0x6c] sm:$0x1]
        %v3625 = vld [vmem:[%s2967 + $0x74] sm:$0xf]
        %v3626 = vld [vmem:[%s2967 + $0x78] sm:$0xf]
        %v3627 = vld [vmem:[%s2967 + $0x7c] sm:$0x1]
        %s3628 = scalar_lea.vmem [#allocation8], 512
        %v3629 = vld [vmem:[%s3628] sm:$0xf]
        %v3630 = vld [vmem:[%s3628 + $0x4] sm:$0xf]
        %v3631 = vld [vmem:[%s3628 + $0x8] sm:$0xf]
        %v3632 = vld [vmem:[%s3628 + $0xc] sm:$0xf]
        %v3633 = vld [vmem:[%s3628 + $0x10] sm:$0xf]
        %v3634 = vld [vmem:[%s3628 + $0x14] sm:$0xf]
        %v3635 = vld [vmem:[%s3628 + $0x18] sm:$0xf]
        %v3636 = vld [vmem:[%s3628 + $0x1c] sm:$0xf]
        %v3637 = vld [vmem:[%s3628 + $0x20] sm:$0xf]
        %v3638 = vld [vmem:[%s3628 + $0x24] sm:$0xf]
        %v3639 = vld [vmem:[%s3628 + $0x28] sm:$0xf]
        %v3640 = vld [vmem:[%s3628 + $0x2c] sm:$0xf]
        %v3641 = vld [vmem:[%s3628 + $0x30] sm:$0xf]
        %v3642 = vld [vmem:[%s3628 + $0x34] sm:$0xf]
        %v3643 = vld [vmem:[%s3628 + $0x38] sm:$0xf]
        %v3644 = vld [vmem:[%s3628 + $0x3c] sm:$0xf]
        %v3646 = vshrl.u32 %v3604, 16
        %v3648 = vrot.slane %v3646, 4
        %v3649 = vshll.u32 %v3604, 16
        %v3651 = vrot.slane %v3649, 5
        %v3652 = vor.u32 %v3648, %v3651
        %v3653 = vrot.slane %v3652, 4
        %v3655 = vshll.u32 %v3605, 16
        %v3657 = vrot.slane %v3655, 5
        %v3658 = vsel %vm1518, %v3653, %v3657
        %v3659 = vshrl.u32 %v3605, 16
        %v3661 = vrot.slane %v3659, 4
        %v3662 = vor.u32 %v3661, %v3657
        %v3663 = vrot.slane %v3662, 4
        %v3665 = vshll.u32 %v3606, 16
        %v3667 = vrot.slane %v3665, 5
        %v3668 = vsel %vm1518, %v3663, %v3667
        %v3670 = vshrl.u32 %v3607, 16
        %v3672 = vrot.slane %v3670, 4
        %v3673 = vshll.u32 %v3607, 16
        %v3675 = vrot.slane %v3673, 5
        %v3676 = vor.u32 %v3672, %v3675
        %v3677 = vrot.slane %v3676, 4
        %v3679 = vshll.u32 %v3608, 16
        %v3681 = vrot.slane %v3679, 5
        %v3682 = vsel %vm1518, %v3677, %v3681
        %v3683 = vshrl.u32 %v3608, 16
        %v3685 = vrot.slane %v3683, 4
        %v3686 = vor.u32 %v3685, %v3681
        %v3687 = vrot.slane %v3686, 4
        %v3689 = vshll.u32 %v3609, 16
        %v3691 = vrot.slane %v3689, 5
        %v3692 = vsel %vm1518, %v3687, %v3691
        %v3694 = vshrl.u32 %v3610, 16
        %v3696 = vrot.slane %v3694, 4
        %v3697 = vshll.u32 %v3610, 16
        %v3699 = vrot.slane %v3697, 5
        %v3700 = vor.u32 %v3696, %v3699
        %v3701 = vrot.slane %v3700, 4
        %v3703 = vshll.u32 %v3611, 16
        %v3705 = vrot.slane %v3703, 5
        %v3706 = vsel %vm1518, %v3701, %v3705
        %v3707 = vshrl.u32 %v3611, 16
        %v3709 = vrot.slane %v3707, 4
        %v3710 = vor.u32 %v3709, %v3705
        %v3711 = vrot.slane %v3710, 4
        %v3713 = vshll.u32 %v3612, 16
        %v3715 = vrot.slane %v3713, 5
        %v3716 = vsel %vm1518, %v3711, %v3715
        %v3718 = vshrl.u32 %v3613, 16
        %v3720 = vrot.slane %v3718, 4
        %v3721 = vshll.u32 %v3613, 16
        %v3723 = vrot.slane %v3721, 5
        %v3724 = vor.u32 %v3720, %v3723
        %v3725 = vrot.slane %v3724, 4
        %v3727 = vshll.u32 %v3614, 16
        %v3729 = vrot.slane %v3727, 5
        %v3730 = vsel %vm1518, %v3725, %v3729
        %v3731 = vshrl.u32 %v3614, 16
        %v3733 = vrot.slane %v3731, 4
        %v3734 = vor.u32 %v3733, %v3729
        %v3735 = vrot.slane %v3734, 4
        %v3737 = vshll.u32 %v3615, 16
        %v3739 = vrot.slane %v3737, 5
        %v3740 = vsel %vm1518, %v3735, %v3739
        %v3742 = vshrl.u32 %v3616, 16
        %v3744 = vrot.slane %v3742, 4
        %v3745 = vshll.u32 %v3616, 16
        %v3747 = vrot.slane %v3745, 5
        %v3748 = vor.u32 %v3744, %v3747
        %v3749 = vrot.slane %v3748, 4
        %v3751 = vshll.u32 %v3617, 16
        %v3753 = vrot.slane %v3751, 5
        %v3754 = vsel %vm1518, %v3749, %v3753
        %v3755 = vshrl.u32 %v3617, 16
        %v3757 = vrot.slane %v3755, 4
        %v3758 = vor.u32 %v3757, %v3753
        %v3759 = vrot.slane %v3758, 4
        %v3761 = vshll.u32 %v3618, 16
        %v3763 = vrot.slane %v3761, 5
        %v3764 = vsel %vm1518, %v3759, %v3763
        %v3766 = vshrl.u32 %v3619, 16
        %v3768 = vrot.slane %v3766, 4
        %v3769 = vshll.u32 %v3619, 16
        %v3771 = vrot.slane %v3769, 5
        %v3772 = vor.u32 %v3768, %v3771
        %v3773 = vrot.slane %v3772, 4
        %v3775 = vshll.u32 %v3620, 16
        %v3777 = vrot.slane %v3775, 5
        %v3778 = vsel %vm1518, %v3773, %v3777
        %v3779 = vshrl.u32 %v3620, 16
        %v3781 = vrot.slane %v3779, 4
        %v3782 = vor.u32 %v3781, %v3777
        %v3783 = vrot.slane %v3782, 4
        %v3785 = vshll.u32 %v3621, 16
        %v3787 = vrot.slane %v3785, 5
        %v3788 = vsel %vm1518, %v3783, %v3787
        %v3790 = vshrl.u32 %v3622, 16
        %v3792 = vrot.slane %v3790, 4
        %v3793 = vshll.u32 %v3622, 16
        %v3795 = vrot.slane %v3793, 5
        %v3796 = vor.u32 %v3792, %v3795
        %v3797 = vrot.slane %v3796, 4
        %v3799 = vshll.u32 %v3623, 16
        %v3801 = vrot.slane %v3799, 5
        %v3802 = vsel %vm1518, %v3797, %v3801
        %v3803 = vshrl.u32 %v3623, 16
        %v3805 = vrot.slane %v3803, 4
        %v3806 = vor.u32 %v3805, %v3801
        %v3807 = vrot.slane %v3806, 4
        %v3809 = vshll.u32 %v3624, 16
        %v3811 = vrot.slane %v3809, 5
        %v3812 = vsel %vm1518, %v3807, %v3811
        %v3814 = vshrl.u32 %v3625, 16
        %v3816 = vrot.slane %v3814, 4
        %v3817 = vshll.u32 %v3625, 16
        %v3819 = vrot.slane %v3817, 5
        %v3820 = vor.u32 %v3816, %v3819
        %v3821 = vrot.slane %v3820, 4
        %v3823 = vshll.u32 %v3626, 16
        %v3825 = vrot.slane %v3823, 5
        %v3826 = vsel %vm1518, %v3821, %v3825
        %v3827 = vshrl.u32 %v3626, 16
        %v3829 = vrot.slane %v3827, 4
        %v3830 = vor.u32 %v3829, %v3825
        %v3831 = vrot.slane %v3830, 4
        %v3833 = vshll.u32 %v3627, 16
        %v3835 = vrot.slane %v3833, 5
        %v3836 = vsel %vm1518, %v3831, %v3835
        %v3837 = vunpack.c.l.b16 %v3658
        %v3838 = vunpack.c.l.b16 %v3668
        %v3839 = vunpack.c.l.b16 %v3682
        %v3840 = vunpack.c.l.b16 %v3692
        %v3841 = vunpack.c.l.b16 %v3706
        %v3842 = vunpack.c.l.b16 %v3716
        %v3843 = vunpack.c.l.b16 %v3730
        %v3844 = vunpack.c.l.b16 %v3740
        %v3845 = vunpack.c.l.b16 %v3754
        %v3846 = vunpack.c.l.b16 %v3764
        %v3847 = vunpack.c.l.b16 %v3778
        %v3848 = vunpack.c.l.b16 %v3788
        %v3849 = vunpack.c.l.b16 %v3802
        %v3850 = vunpack.c.l.b16 %v3812
        %v3851 = vunpack.c.l.b16 %v3826
        %v3852 = vunpack.c.l.b16 %v3836
        %v3853 = vpack.c.b16 %v3838, %v3837
        %v3854 = vpack.c.b16 %v3840, %v3839
        %v3855 = vpack.c.b16 %v3842, %v3841
        %v3856 = vpack.c.b16 %v3844, %v3843
        %v3857 = vpack.c.b16 %v3846, %v3845
        %v3858 = vpack.c.b16 %v3848, %v3847
        %v3859 = vpack.c.b16 %v3850, %v3849
        %v3860 = vpack.c.b16 %v3852, %v3851
        %v3885 = vunpack.c.l.b16 %v3629
        %v3886 = vunpack.c.l.b16 %v3630
        %v3887 = vunpack.c.l.b16 %v3631
        %v3888 = vunpack.c.l.b16 %v3632
        %v3889 = vunpack.c.l.b16 %v3633
        %v3890 = vunpack.c.l.b16 %v3634
        %v3891 = vunpack.c.l.b16 %v3635
        %v3892 = vunpack.c.l.b16 %v3636
        %v3893 = vunpack.c.l.b16 %v3637
        %v3894 = vunpack.c.l.b16 %v3638
        %v3895 = vunpack.c.l.b16 %v3639
        %v3896 = vunpack.c.l.b16 %v3640
        %v3897 = vunpack.c.l.b16 %v3641
        %v3898 = vunpack.c.l.b16 %v3642
        %v3899 = vunpack.c.l.b16 %v3643
        %v3900 = vunpack.c.l.b16 %v3644
        %v3901 = vpack.c.b16 %v3886, %v3885
        %v3902 = vpack.c.b16 %v3888, %v3887
        %v3903 = vpack.c.b16 %v3890, %v3889
        %v3904 = vpack.c.b16 %v3892, %v3891
        %v3905 = vpack.c.b16 %v3894, %v3893
        %v3906 = vpack.c.b16 %v3896, %v3895
        %v3907 = vpack.c.b16 %v3898, %v3897
        %v3908 = vpack.c.b16 %v3900, %v3899
        %3917 = vmatprep.subr.bf16.mxu0 0
        %3918 = vmatpush1.bf16.msra.mxu0 %v3908
        %3919 = vmatprep.subr.bf16.mxu0 0
        %3920 = vmatpush1.bf16.msra.mxu0 %v3907
        %3921 = vmatprep.subr.bf16.mxu0 0
        %3922 = vmatpush1.bf16.msra.mxu0 %v3906
        %3923 = vmatprep.subr.bf16.mxu0 0
        %3924 = vmatpush1.bf16.msra.mxu0 %v3905
        %3925 = vmatprep.subr.bf16.mxu0 0
        %3926 = vmatpush1.bf16.msra.mxu0 %v3904
        %3927 = vmatprep.subr.bf16.mxu0 0
        %3928 = vmatpush1.bf16.msra.mxu0 %v3903
        %3929 = vmatprep.subr.bf16.mxu0 0
        %3930 = vmatpush1.bf16.msra.mxu0 %v3902
        %3931 = vmatprep.subr.bf16.mxu0 0
        %3932 = vmatpush1.bf16.msra.mxu0 %v3901
        %3933 = vmatprep.subr.bf16.mxu0 0
        %3934 = vmatpush2.bf16.msra.mxu0 0
        %3935 = vmatprep.subr.bf16.mxu0 0
        %3936 = vmatpush2.bf16.msra.mxu0 0
        %3937 = vmatprep.subr.bf16.mxu0 0
        %3938 = vmatpush2.bf16.msra.mxu0 0
        %3939 = vmatprep.subr.bf16.mxu0 0
        %3940 = vmatpush2.bf16.msra.mxu0 0
        %3941 = vmatprep.subr.bf16.mxu0 0
        %3942 = vmatpush2.bf16.msra.mxu0 0
        %3943 = vmatprep.subr.bf16.mxu0 0
        %3944 = vmatpush2.bf16.msra.mxu0 0
        %3945 = vmatprep.subr.bf16.mxu0 0
        %3946 = vmatpush2.bf16.msra.mxu0 0
        %3947 = vmatprep.subr.bf16.mxu0 0
        %3948 = vmatpush2.bf16.msra.mxu0 0
        %3949 = vmatprep.mubr.bf16.mxu0 0
        %3950 = vmatmul.mubr.bf16.gmra.mxu0 %v3853
        %v3951 = vpop.f32.mrf.mxu0
        %v3952 = vadd.f32 0.0, %v3951
        %v3953 = vpop.f32.mrf.mxu0
        %v3954 = vpop.f32.mrf.mxu0
        %v3955 = vadd.f32 0.0, %v3954
        %v3956 = vpop.f32.mrf.mxu0
        %3957 = vmatprep.mubr.bf16.mxu0 0
        %3958 = vmatmul.mubr.bf16.gmra.mxu0 %v3854
        %v3959 = vpop.f32.mrf.mxu0
        %v3960 = vadd.f32 0.0, %v3959
        %v3961 = vpop.f32.mrf.mxu0
        %v3962 = vpop.f32.mrf.mxu0
        %v3963 = vadd.f32 0.0, %v3962
        %v3964 = vpop.f32.mrf.mxu0
        %3965 = vmatprep.mubr.bf16.mxu0 0
        %3966 = vmatmul.mubr.bf16.gmra.mxu0 %v3855
        %v3967 = vpop.f32.mrf.mxu0
        %v3968 = vadd.f32 0.0, %v3967
        %v3969 = vpop.f32.mrf.mxu0
        %v3970 = vpop.f32.mrf.mxu0
        %v3971 = vadd.f32 0.0, %v3970
        %v3972 = vpop.f32.mrf.mxu0
        %3973 = vmatprep.mubr.bf16.mxu0 0
        %3974 = vmatmul.mubr.bf16.gmra.mxu0 %v3856
        %v3975 = vpop.f32.mrf.mxu0
        %v3976 = vadd.f32 0.0, %v3975
        %v3977 = vpop.f32.mrf.mxu0
        %v3978 = vpop.f32.mrf.mxu0
        %v3979 = vadd.f32 0.0, %v3978
        %v3980 = vpop.f32.mrf.mxu0
        %3981 = vmatprep.mubr.bf16.mxu0 0
        %3982 = vmatmul.mubr.bf16.gmra.mxu0 %v3857
        %v3983 = vpop.f32.mrf.mxu0
        %v3984 = vadd.f32 0.0, %v3983
        %v3985 = vpop.f32.mrf.mxu0
        %v3986 = vpop.f32.mrf.mxu0
        %v3987 = vadd.f32 0.0, %v3986
        %v3988 = vpop.f32.mrf.mxu0
        %3989 = vmatprep.mubr.bf16.mxu0 0
        %3990 = vmatmul.mubr.bf16.gmra.mxu0 %v3858
        %v3991 = vpop.f32.mrf.mxu0
        %v3992 = vadd.f32 0.0, %v3991
        %v3993 = vpop.f32.mrf.mxu0
        %v3994 = vpop.f32.mrf.mxu0
        %v3995 = vadd.f32 0.0, %v3994
        %v3996 = vpop.f32.mrf.mxu0
        %3997 = vmatprep.mubr.bf16.mxu0 0
        %3998 = vmatmul.mubr.bf16.gmra.mxu0 %v3859
        %v3999 = vpop.f32.mrf.mxu0
        %v4000 = vadd.f32 0.0, %v3999
        %v4001 = vpop.f32.mrf.mxu0
        %v4002 = vpop.f32.mrf.mxu0
        %v4003 = vadd.f32 0.0, %v4002
        %v4004 = vpop.f32.mrf.mxu0
        %4005 = vmatprep.mubr.bf16.mxu0 0
        %4006 = vmatmul.mubr.bf16.gmra.mxu0 %v3860
        %v4007 = vpop.f32.mrf.mxu0
        %v4008 = vadd.f32 0.0, %v4007
        %v4009 = vpop.f32.mrf.mxu0
        %v4010 = vpop.f32.mrf.mxu0
        %v4011 = vadd.f32 0.0, %v4010
        %v4012 = vpop.f32.mrf.mxu0
        %4013 = vdwg.mxu0
        %v4014 = vadd.f32 %v3588, %v3952
        %v4015 = vadd.f32 %v3589, %v3955
        %v4016 = vadd.f32 %v3590, %v3960
        %v4017 = vadd.f32 %v3591, %v3963
        %v4018 = vadd.f32 %v3592, %v3968
        %v4019 = vadd.f32 %v3593, %v3971
        %v4020 = vadd.f32 %v3594, %v3976
        %v4021 = vadd.f32 %v3595, %v3979
        %v4022 = vadd.f32 %v3596, %v3984
        %v4023 = vadd.f32 %v3597, %v3987
        %v4024 = vadd.f32 %v3598, %v3992
        %v4025 = vadd.f32 %v3599, %v3995
        %v4026 = vadd.f32 %v3600, %v4000
        %v4027 = vadd.f32 %v3601, %v4003
        %v4028 = vadd.f32 %v3602, %v4008
        %v4029 = vadd.f32 %v3603, %v4011
        %v4030 = vld [vmem:[%s5] sm:$0x1]
        %v4032 = vlaneseq
        %v4033 = vshrl.u32 %v4032, 7
        %v4034 = vsub.s32 0, %v4033
        %v4035 = vrot.slane %v4030, %v4034
        %v4037 = vmul.f32 %v4014, %v4035
        %v4038 = vmul.f32 %v4015, %v4035
        %v4039 = vmul.f32 %v4016, %v4035
        %v4040 = vmul.f32 %v4017, %v4035
        %v4041 = vmul.f32 %v4018, %v4035
        %v4042 = vmul.f32 %v4019, %v4035
        %v4043 = vmul.f32 %v4020, %v4035
        %v4044 = vmul.f32 %v4021, %v4035
        %v4045 = vmul.f32 %v4022, %v4035
        %v4046 = vmul.f32 %v4023, %v4035
        %v4047 = vmul.f32 %v4024, %v4035
        %v4048 = vmul.f32 %v4025, %v4035
        %v4049 = vmul.f32 %v4026, %v4035
        %v4050 = vmul.f32 %v4027, %v4035
        %v4051 = vmul.f32 %v4028, %v4035
        %v4052 = vmul.f32 %v4029, %v4035
        %v4053 = vld [vmem:[%s6] sm:$0x1]
        %v4055 = vlaneseq
        %v4056 = vshrl.u32 %v4055, 7
        %v4057 = vsub.s32 0, %v4056
        %v4058 = vrot.slane %v4053, %v4057
        %v4060 = vadd.f32 %v4037, %v4058
        %v4061 = vadd.f32 %v4038, %v4058
        %v4062 = vadd.f32 %v4039, %v4058
        %v4063 = vadd.f32 %v4040, %v4058
        %v4064 = vadd.f32 %v4041, %v4058
        %v4065 = vadd.f32 %v4042, %v4058
        %v4066 = vadd.f32 %v4043, %v4058
        %v4067 = vadd.f32 %v4044, %v4058
        %v4068 = vadd.f32 %v4045, %v4058
        %v4069 = vadd.f32 %v4046, %v4058
        %v4070 = vadd.f32 %v4047, %v4058
        %v4071 = vadd.f32 %v4048, %v4058
        %v4072 = vadd.f32 %v4049, %v4058
        %v4073 = vadd.f32 %v4050, %v4058
        %v4074 = vadd.f32 %v4051, %v4058
        %v4075 = vadd.f32 %v4052, %v4058
        %v4076 = vmax.f32 %v4060, 0.0
        %v4077 = vmax.f32 %v4061, 0.0
        %v4078 = vmax.f32 %v4062, 0.0
        %v4079 = vmax.f32 %v4063, 0.0
        %v4080 = vmax.f32 %v4064, 0.0
        %v4081 = vmax.f32 %v4065, 0.0
        %v4082 = vmax.f32 %v4066, 0.0
        %v4083 = vmax.f32 %v4067, 0.0
        %v4084 = vmax.f32 %v4068, 0.0
        %v4085 = vmax.f32 %v4069, 0.0
        %v4086 = vmax.f32 %v4070, 0.0
        %v4087 = vmax.f32 %v4071, 0.0
        %v4088 = vmax.f32 %v4072, 0.0
        %v4089 = vmax.f32 %v4073, 0.0
        %v4090 = vmax.f32 %v4074, 0.0
        %v4091 = vmax.f32 %v4075, 0.0
        %v4092 = vld [vmem:[%s7] sm:$0x1]
        %v4094 = vlaneseq
        %v4095 = vshrl.u32 %v4094, 7
        %v4096 = vsub.s32 0, %v4095
        %v4097 = vrot.slane %v4092, %v4096
        %v4099 = vmul.f32 %v574, %v4097
        %v4100 = vmul.f32 %v578, %v4097
        %v4101 = vmul.f32 %v584, %v4097
        %v4102 = vmul.f32 %v588, %v4097
        %v4103 = vmul.f32 %v594, %v4097
        %v4104 = vmul.f32 %v598, %v4097
        %v4105 = vmul.f32 %v604, %v4097
        %v4106 = vmul.f32 %v608, %v4097
        %v4107 = vmul.f32 %v614, %v4097
        %v4108 = vmul.f32 %v618, %v4097
        %v4109 = vmul.f32 %v624, %v4097
        %v4110 = vmul.f32 %v628, %v4097
        %v4111 = vmul.f32 %v634, %v4097
        %v4112 = vmul.f32 %v638, %v4097
        %v4113 = vmul.f32 %v644, %v4097
        %v4114 = vmul.f32 %v648, %v4097
        %v4115 = vld [vmem:[%s8] sm:$0x1]
        %v4117 = vlaneseq
        %v4118 = vshrl.u32 %v4117, 7
        %v4119 = vsub.s32 0, %v4118
        %v4120 = vrot.slane %v4115, %v4119
        %v4122 = vadd.f32 %v4099, %v4120
        %v4123 = vadd.f32 %v4100, %v4120
        %v4124 = vadd.f32 %v4101, %v4120
        %v4125 = vadd.f32 %v4102, %v4120
        %v4126 = vadd.f32 %v4103, %v4120
        %v4127 = vadd.f32 %v4104, %v4120
        %v4128 = vadd.f32 %v4105, %v4120
        %v4129 = vadd.f32 %v4106, %v4120
        %v4130 = vadd.f32 %v4107, %v4120
        %v4131 = vadd.f32 %v4108, %v4120
        %v4132 = vadd.f32 %v4109, %v4120
        %v4133 = vadd.f32 %v4110, %v4120
        %v4134 = vadd.f32 %v4111, %v4120
        %v4135 = vadd.f32 %v4112, %v4120
        %v4136 = vadd.f32 %v4113, %v4120
        %v4137 = vadd.f32 %v4114, %v4120
        %v4138 = vadd.f32 %v4076, %v4122
        %v4139 = vadd.f32 %v4077, %v4123
        %v4140 = vadd.f32 %v4078, %v4124
        %v4141 = vadd.f32 %v4079, %v4125
        %v4142 = vadd.f32 %v4080, %v4126
        %v4143 = vadd.f32 %v4081, %v4127
        %v4144 = vadd.f32 %v4082, %v4128
        %v4145 = vadd.f32 %v4083, %v4129
        %v4146 = vadd.f32 %v4084, %v4130
        %v4147 = vadd.f32 %v4085, %v4131
        %v4148 = vadd.f32 %v4086, %v4132
        %v4149 = vadd.f32 %v4087, %v4133
        %v4150 = vadd.f32 %v4088, %v4134
        %v4151 = vadd.f32 %v4089, %v4135
        %v4152 = vadd.f32 %v4090, %v4136
        %v4153 = vadd.f32 %v4091, %v4137
        %v4154 = vpack.c.bf16 %v4139, %v4138
        %v4155 = vpack.c.bf16 %v4141, %v4140
        %v4156 = vpack.c.bf16 %v4143, %v4142
        %v4157 = vpack.c.bf16 %v4145, %v4144
        %v4158 = vpack.c.bf16 %v4147, %v4146
        %v4159 = vpack.c.bf16 %v4149, %v4148
        %v4160 = vpack.c.bf16 %v4151, %v4150
        %v4161 = vpack.c.bf16 %v4153, %v4152
        %v4170 = vunpack.c.l.b16 %v4154
        %v4171 = vunpack.c.h.b16 %v4154
        %v4172 = vunpack.c.l.b16 %v4155
        %v4173 = vunpack.c.h.b16 %v4155
        %v4174 = vunpack.c.l.b16 %v4156
        %v4175 = vunpack.c.h.b16 %v4156
        %v4176 = vunpack.c.l.b16 %v4157
        %v4177 = vunpack.c.h.b16 %v4157
        %v4178 = vunpack.c.l.b16 %v4158
        %v4179 = vunpack.c.h.b16 %v4158
        %v4180 = vunpack.c.l.b16 %v4159
        %v4181 = vunpack.c.h.b16 %v4159
        %v4182 = vunpack.c.l.b16 %v4160
        %v4183 = vunpack.c.h.b16 %v4160
        %v4184 = vunpack.c.l.b16 %v4161
        %v4185 = vunpack.c.h.b16 %v4161
        %v4186 = vpack.c.b16 %v4170, %v4170
        %v4187 = vpack.c.b16 %v4171, %v4171
        %v4188 = vpack.c.b16 %v4172, %v4172
        %v4189 = vpack.c.b16 %v4173, %v4173
        %v4190 = vpack.c.b16 %v4174, %v4174
        %v4191 = vpack.c.b16 %v4175, %v4175
        %v4192 = vpack.c.b16 %v4176, %v4176
        %v4193 = vpack.c.b16 %v4177, %v4177
        %v4194 = vpack.c.b16 %v4178, %v4178
        %v4195 = vpack.c.b16 %v4179, %v4179
        %v4196 = vpack.c.b16 %v4180, %v4180
        %v4197 = vpack.c.b16 %v4181, %v4181
        %v4198 = vpack.c.b16 %v4182, %v4182
        %v4199 = vpack.c.b16 %v4183, %v4183
        %v4200 = vpack.c.b16 %v4184, %v4184
        %v4201 = vpack.c.b16 %v4185, %v4185
        %4218 = vst [vmem:[%s328] sm:$0xf] %v4186
        %4219 = vst [vmem:[%s328 + $0x4] sm:$0xf] %v4187
        %4220 = vst [vmem:[%s328 + $0x8] sm:$0xf] %v4188
        %4221 = vst [vmem:[%s328 + $0xc] sm:$0xf] %v4189
        %4222 = vst [vmem:[%s328 + $0x10] sm:$0xf] %v4190
        %4223 = vst [vmem:[%s328 + $0x14] sm:$0xf] %v4191
        %4224 = vst [vmem:[%s328 + $0x18] sm:$0xf] %v4192
        %4225 = vst [vmem:[%s328 + $0x1c] sm:$0xf] %v4193
        %4226 = vst [vmem:[%s328 + $0x20] sm:$0xf] %v4194
        %4227 = vst [vmem:[%s328 + $0x24] sm:$0xf] %v4195
        %4228 = vst [vmem:[%s328 + $0x28] sm:$0xf] %v4196
        %4229 = vst [vmem:[%s328 + $0x2c] sm:$0xf] %v4197
        %4230 = vst [vmem:[%s328 + $0x30] sm:$0xf] %v4198
        %4231 = vst [vmem:[%s328 + $0x34] sm:$0xf] %v4199
        %4232 = vst [vmem:[%s328 + $0x38] sm:$0xf] %v4200
        %4233 = vst [vmem:[%s328 + $0x3c] sm:$0xf] %v4201
        %s4234 = sand.u32 %s215, 1
        %s4235 = scalar_lea.sflag [#allocation7], %s4234
        %s4236 = sand.u32 %s215, 1
        %s4237 = smul.addr %s4236, 64
        %s4238 = scalar_lea.vmem [#allocation10], %s4237
        // Predicated region
        $region73: #{tpu_custom_call.1} parent=51 // pred_check
          %p4239 = pneg %p225
        $region74: #{tpu_custom_call.1} parent=51 // pred_check_branch
          %4241 = sbr.rel (%p4239) target = $region76
        $region75: #{tpu_custom_call.1} parent=51 // pred_region
          %s4242 = smul.u32 8, %s30
          %s4244 = ssub.s32 1024, 1024
          %4245 = vsyncadd %s4235, %s4244
          %s4246 = smul.addr %s4242, 2
          %s4247 = smul.addr %s29, 32
          %s4248 = sadd.s32 %s4246, %s4247
          %s4249 = smul.addr %s4248, 64
          %s4250 = scalar_lea.hbm %s9, %s4249
          %s4251 = sshll.u32 %s4238, 4
          %s4252 = int_to_ptr.vmem [resolvable:$true] %s4251
          %4257 = dma.vmem_to_hbm [thread:$0]  %s4252, 1024, %s4250, %s4235, 64, 64, 4
        $region76: #{tpu_custom_call.1} parent=51 // pred_fallthru
          _
      $region52: #{tpu_custom_call.1} parent=5 // pred_fallthru
        _
      %p4258 = scmp.le.s32.totalorder 2, %s20
      // Predicated region
      $region77: #{tpu_custom_call.1} parent=5 // pred_check
        %p4259 = pneg %p4258
      $region78: #{tpu_custom_call.1} parent=5 // pred_check_branch
        %4261 = sbr.rel (%p4259) target = $region80
      $region79: #{tpu_custom_call.1} parent=5 // pred_region
        %s4262 = ssub.s32 %s20, 2
        // Predicated region
        $region81: #{tpu_custom_call.1} parent=79 // pred_check
          %p4263 = pneg %p231
        $region82: #{tpu_custom_call.1} parent=79 // pred_check_branch
          %4265 = sbr.rel (%p4263) target = $region84
        $region83: #{tpu_custom_call.1} parent=79 // pred_region
          %s4266 = sand.u32 %s216, 1
          %s4267 = scalar_lea.sflag [#allocation7], %s4266
          %s4268 = sand.u32 %s216, 1
          %s4269 = smul.addr %s4268, 64
          %s4270 = scalar_lea.vmem [#allocation10], %s4269
          %4271 = dma.done %s4267, 1024
        $region84: #{tpu_custom_call.1} parent=79 // pred_fallthru
          _
      $region80: #{tpu_custom_call.1} parent=5 // pred_fallthru
        _
    $region6: #{tpu_custom_call.1} parent=1 // loop_footer
      %s24 = sadd.s32 1, %s20
    $region7: #{tpu_custom_call.1} parent=1 // loop_footer_branch
      %19 = sbr.rel target = $region3
    $region8: #{tpu_custom_call.1} parent=1 // loop_exit
      _
    %4272 = vsyncpa [#allocation6], 1
    %s4273 = scalar_lea.sflag [#allocation6], 1
    %4274 = vsyncpa %s4273, 1
    %4275 = vsyncpa [#allocation9], 1
    %4276 = vsyncpa [#allocation7], 1
    %s4277 = scalar_lea.sflag [#allocation7], 1
    %4278 = vsyncpa %s4277, 1
  %4279 = vsyncmov [#allocation4]
  %s4280 = vpop.sfrf %4279
  %p4281 = scmp.eq.s32.totalorder %s4280, 0
  %p4282 = pneg %p4281
  %4284 = shalt.err (%p4282)

</llo_original>
